<compile_context>
chip_gen: v6e
topology: v6e:2x2x1
jax: 0.10.0
libtpu: 0.0.40
codegen_flags: <defaults>
</compile_context>

<pallas_src>
import math

import numpy as np
import jax
import jax.numpy as jnp
from jax.experimental import pallas as pl
from jax.experimental.pallas import tpu as pltpu


def _make_backbone_template():
    """Idealized N, CA, C, CB template — matches the PyTorch buffer exactly."""
    bl = {'N-CA': 1.458, 'CA-C': 1.523, 'CA-CB': 1.521}
    t = np.zeros((4, 3), dtype=np.float32)
    t[0] = [0.0, 0.0, 0.0]
    t[1] = [bl['N-CA'], 0.0, 0.0]
    ca_c = math.radians(110.0)
    t[2] = [t[1, 0] - bl['CA-C'] * math.cos(ca_c),
            bl['CA-C'] * math.sin(ca_c),
            0.0]
    cb = math.radians(109.5)
    t[3] = [t[1, 0] - bl['CA-CB'] * math.cos(cb),
            t[1, 1] - bl['CA-CB'] * math.sin(cb) * math.cos(math.pi / 3),
            bl['CA-CB'] * math.sin(cb) * math.sin(math.pi / 3)]
    return t


def _choose_tiling(n, max_tile=1024):
    """tile_n: multiple of 8, as large as reasonable (>=512 rows ~ HBM roofline).
    Keep >=2 grid steps when possible so ("parallel",) can shard across v7x's
    two TensorCores; on v5e/v6e the extra step costs ~0.35us, negligible."""
    n8 = ((n + 7) // 8) * 8
    tile = min(max_tile, n8)
    if n8 > 8 and (n8 + tile - 1) // tile < 2:
        tile = max(8, ((n8 // 2 + 7) // 8) * 8)
    n_pad = ((n8 + tile - 1) // tile) * tile
    return tile, n_pad


def _det3(m):
    """Closed-form batched 3x3 determinant (cheaper than LU-based linalg.det)."""
    return (m[..., 0, 0] * (m[..., 1, 1] * m[..., 2, 2] - m[..., 1, 2] * m[..., 2, 1])
            - m[..., 0, 1] * (m[..., 1, 0] * m[..., 2, 2] - m[..., 1, 2] * m[..., 2, 0])
            + m[..., 0, 2] * (m[..., 1, 0] * m[..., 2, 1] - m[..., 1, 1] * m[..., 2, 0]))


# ---- kernel 1: [H_flat | atom mean] via one baked-constant matmul + zero-mask ----
def _prep_kernel(pos_ref, km_ref, hm_ref, nz_ref):
    pos = pos_ref[...]                                         # (T, 12)
    # hm[:, 0:9]  = flattened H = P^T Qc   (col = c*3 + d)
    # hm[:, 9:12] = per-residue atom mean
    hm_ref[...] = jnp.dot(pos, km_ref[...],
                          preferred_element_type=jnp.float32)
    # 1.0 iff the residue has any nonzero coordinate (reference semantics).
    nz_ref[...] = jnp.max((pos != 0.0).astype(jnp.float32), axis=1, keepdims=True)


# ---- kernel 2: projected = template @ R^T + t as one baked-constant matmul ----
def _project_kernel(rt_ref, pc_ref, out_ref):
    out_ref[...] = jnp.dot(rt_ref[...], pc_ref[...],
                           preferred_element_type=jnp.float32)  # one full-block store


def residue_projection(positions, aa_types=None, max_tile=1024):
    """Pallas implementation of ResidueProjection.forward (aa_types unused,
    exactly as in the reference module)."""
    positions = jnp.asarray(positions, jnp.float32)
    B, Rres, A, C = positions.shape
    assert A == 4 and C == 3, "expects (B, R, 4, 3) positions"

    tmpl_np = _make_backbone_template()
    q_mean_np = tmpl_np.mean(axis=0)
    qc_np = tmpl_np - q_mean_np                 # centered template (column-sums ~0)

    # Baked constant for kernel 1:  [H_flat | pmean] = pos(T,12) @ KM(12,12)
    km_np = np.zeros((12, 12), np.float32)
    for a in range(4):
        for c in range(3):
            row = a * 3 + c
            for d in range(3):
                km_np[row, c * 3 + d] = qc_np[a, d]
            km_np[row, 9 + c] = 0.25
    # Baked constant for kernel 2:  proj = [R_flat | t](T,12) @ PC(12,12)
    pc_np = np.zeros((12, 12), np.float32)
    for a in range(4):
        for c in range(3):
            col = a * 3 + c
            for d in range(3):
                pc_np[c * 3 + d, col] = tmpl_np[a, d]
            pc_np[9 + c, col] = 1.0
    km_const = jnp.asarray(km_np)
    pc_const = jnp.asarray(pc_np)
    q_mean = jnp.asarray(q_mean_np)

    N = B * Rres
    tile_n, n_pad = _choose_tiling(N, max_tile)
    grid = (n_pad // tile_n,)

    pos_flat = positions.reshape(N, A * C)
    if n_pad != N:
        pos_flat = jnp.pad(pos_flat, ((0, n_pad - N), (0, 0)))

    row_spec = pl.BlockSpec((tile_n, 12), lambda i: (i, 0))
    nz_spec = pl.BlockSpec((tile_n, 1), lambda i: (i, 0))
    const_spec = pl.BlockSpec((12, 12), lambda i: (0, 0))
    cparams = pltpu.CompilerParams(dimension_semantics=("parallel",))

    hm, nzmask = pl.pallas_call(
        _prep_kernel,
        grid=grid,
        in_specs=[row_spec, const_spec],
        out_specs=[row_spec, nz_spec],
        out_shape=[jax.ShapeDtypeStruct((n_pad, 12), jnp.float32),
                   jax.ShapeDtypeStruct((n_pad, 1), jnp.float32)],
        compiler_params=cparams,
    )(pos_flat, km_const)

    # ---- Kabsch rotation via SVD (glue, plain JAX, unpadded rows only) ----
    # TODO(synk): the batched 3x3 SVD has no Pallas equivalent; it runs in plain
    # JAX here.  (The reference's Vh-as-V convention also rules out swapping in
    # a closed-form quaternion Kabsch without changing its semantics.)
    hm_n = hm[:N]
    H = hm_n[:, :9].reshape(N, 3, 3)
    pm = hm_n[:, 9:12]
    U, _, Vh = jnp.linalg.svd(H)
    det = _det3(Vh) * _det3(U)                          # = det(Vh @ U^T)
    corr = jnp.stack([jnp.ones_like(det), jnp.ones_like(det), det], axis=-1)
    # R = Vh @ diag(1,1,det) @ U^T   (reference's torch.linalg.svd convention)
    Rm = jnp.einsum('nij,nkj->nik', Vh * corr[:, None, :], U, precision='highest')
    tvec = q_mean[None, :] - jnp.einsum('nij,nj->ni', Rm, pm, precision='highest')
    rt = jnp.concatenate([Rm.reshape(N, 9), tvec], axis=-1)      # (N, 12)
    # All-zero residues pass through as exactly zero: zero their [R|t] rows so
    # kernel 2's matmul reproduces that without re-reading `positions`.
    rt = jnp.where(nzmask[:N] > 0.0, rt, 0.0)
    if n_pad != N:
        rt = jnp.pad(rt, ((0, n_pad - N), (0, 0)))

    out_flat = pl.pallas_call(
        _project_kernel,
        grid=grid,
        in_specs=[row_spec, const_spec],
        out_specs=row_spec,
        out_shape=jax.ShapeDtypeStruct((n_pad, 12), jnp.float32),
        compiler_params=cparams,
    )(rt, pc_const)

    return out_flat[:N].reshape(B, Rres, A, C)


def residue_projection_ref(positions):
    """Pure-JAX reference mirroring the PyTorch forward (vectorized)."""
    positions = jnp.asarray(positions, jnp.float32)
    tmpl = jnp.asarray(_make_backbone_template())
    B, Rres, A, C = positions.shape
    pf = positions.reshape(-1, A, C)
    q_mean = tmpl.mean(axis=0)
    Qc = tmpl - q_mean
    p_mean = pf.mean(axis=1)
    Pc = pf - p_mean[:, None, :]
    H = jnp.einsum('nac,ad->ncd', Pc, Qc, precision='highest')
    U, _, Vh = jnp.linalg.svd(H)
    det = jnp.linalg.det(jnp.einsum('nij,nkj->nik', Vh, U, precision='highest'))
    ones = jnp.ones_like(det)
    corr = jax.vmap(jnp.diag)(jnp.stack([ones, ones, det], axis=-1))
    Rm = jnp.einsum('nij,njk,nlk->nil', Vh, corr, U, precision='highest')
    t = q_mean[None, :] - jnp.einsum('nij,nj->ni', Rm, p_mean, precision='highest')
    proj = jnp.einsum('ad,ncd->nac', tmpl, Rm, precision='highest') + t[:, None, :]
    keep = jnp.any(pf != 0, axis=(1, 2))[:, None, None]
    out = jnp.where(keep, proj, pf)
    return out.reshape(B, Rres, A, C)


if __name__ == "__main__":
    key = jax.random.PRNGKey(0)
    k1, k2 = jax.random.split(key)
    B, Rres = 2, 8
    positions = jax.random.normal(k1, (B, Rres, 4, 3), dtype=jnp.float32) * 2.0
    # zero out one residue to exercise the all-zero passthrough branch
    positions = positions.at[1, 3].set(0.0)
    aa_types = jax.random.randint(k2, (B, Rres), 0, 20)

    fwd = jax.jit(residue_projection)
    out = jax.block_until_ready(fwd(positions, aa_types))

    ref = residue_projection_ref(positions)
    assert out.shape == positions.shape
    assert bool(jnp.all(jnp.isfinite(out)))
    assert bool(jnp.all(out[1, 3] == 0.0))           # passthrough residue stays zero
    assert bool(jnp.allclose(out, ref, atol=2e-3, rtol=2e-3))

    print("KERNEL_OK")
</pallas_src>

<mosaic_0001>
module attributes {stable_mosaic.version = 11 : i64} {
  func.func @_prep_kernel(%arg0: i32, %arg1: memref<8x12xf32, #tpu.memory_space<vmem>>, %arg2: memref<12x12xf32, #tpu.memory_space<vmem>>, %arg3: memref<8x12xf32, #tpu.memory_space<vmem>>, %arg4: memref<8x1xf32, #tpu.memory_space<vmem>>) attributes {dimension_semantics = [#tpu.dimension_semantics<parallel>], iteration_bounds = array<i64: 2>, scalar_prefetch = 0 : i64, scratch_operands = 0 : i64, tpu.core_type = #tpu.core_type<tc>, window_params = [{transform_indices = @transform_0, window_bounds = array<i64: 8, 12>}, {pipeline_mode = #tpu.pipeline_mode<synchronous>, transform_indices = @transform_1, window_bounds = array<i64: 12, 12>}, {transform_indices = @transform_2, window_bounds = array<i64: 8, 12>}, {transform_indices = @transform_3, window_bounds = array<i64: 8, 1>}]} {
    %c0 = arith.constant 0 : index
    %c0_0 = arith.constant 0 : index
    %0 = vector.load %arg1[%c0, %c0_0] : memref<8x12xf32, #tpu.memory_space<vmem>>, vector<8x12xf32>
    %c0_1 = arith.constant 0 : index
    %c0_2 = arith.constant 0 : index
    %1 = vector.load %arg2[%c0_1, %c0_2] : memref<12x12xf32, #tpu.memory_space<vmem>>, vector<12x12xf32>
    %cst = arith.constant dense<0.000000e+00> : vector<8x12xf32>
    %2 = tpu.matmul %0, %1, %cst {dimension_numbers = #tpu.dot_dimension_numbers<[1], [0], [0], [1], [0, 0, 1, 1], [], []>} : vector<8x12xf32>, vector<12x12xf32>, vector<8x12xf32> -> vector<8x12xf32>
    %c0_3 = arith.constant 0 : index
    %c0_4 = arith.constant 0 : index
    %3 = vector.load %arg3[%c0_3, %c0_4] : memref<8x12xf32, #tpu.memory_space<vmem>>, vector<8x12xf32>
    tpu.vector_store %arg3[%c0_3, %c0_4], %2 {strides = array<i32>} : memref<8x12xf32, #tpu.memory_space<vmem>>, vector<8x12xf32>,
    %cst_5 = arith.constant 0.000000e+00 : f32
    %4 = vector.broadcast %cst_5 : f32 to vector<8x12xf32>
    %5 = arith.cmpf one, %0, %4 : vector<8x12xf32>
    %6 = arith.extui %5 : vector<8x12xi1> to vector<8x12xi32>
    %7 = arith.sitofp %6 : vector<8x12xi32> to vector<8x12xf32>
    %cst_6 = arith.constant dense<0xFF800000> : vector<8xf32>
    %8 = vector.multi_reduction <maximumf>, %7, %cst_6 [1] : vector<8x12xf32> to vector<8xf32>
    %9 = vector.shape_cast %8 : vector<8xf32> to vector<8x1xf32>
    %c0_7 = arith.constant 0 : index
    %c0_8 = arith.constant 0 : index
    %10 = vector.load %arg4[%c0_7, %c0_8] : memref<8x1xf32, #tpu.memory_space<vmem>>, vector<8x1xf32>
    tpu.vector_store %arg4[%c0_7, %c0_8], %9 {strides = array<i32>} : memref<8x1xf32, #tpu.memory_space<vmem>>, vector<8x1xf32>,
    return
  }
  func.func @transform_0(%arg0: i32) -> (i32, i32) {
    %c0_i32 = arith.constant 0 : i32
    %c0_i32_0 = arith.constant 0 : i32
    return %arg0, %c0_i32 : i32, i32
  }
  func.func @transform_1(%arg0: i32) -> (i32, i32) {
    %c0_i32 = arith.constant 0 : i32
    %c0_i32_0 = arith.constant 0 : i32
    %c0_i32_1 = arith.constant 0 : i32
    return %c0_i32, %c0_i32_0 : i32, i32
  }
  func.func @transform_2(%arg0: i32) -> (i32, i32) {
    %c0_i32 = arith.constant 0 : i32
    %c0_i32_0 = arith.constant 0 : i32
    return %arg0, %c0_i32 : i32, i32
  }
  func.func @transform_3(%arg0: i32) -> (i32, i32) {
    %c0_i32 = arith.constant 0 : i32
    %c0_i32_0 = arith.constant 0 : i32
    return %arg0, %c0_i32 : i32, i32
  }
}

module attributes {stable_mosaic.version = 11 : i64} {
  func.func @_project_kernel(%arg0: i32, %arg1: memref<8x12xf32, #tpu.memory_space<vmem>>, %arg2: memref<12x12xf32, #tpu.memory_space<vmem>>, %arg3: memref<8x12xf32, #tpu.memory_space<vmem>>) attributes {dimension_semantics = [#tpu.dimension_semantics<parallel>], iteration_bounds = array<i64: 2>, scalar_prefetch = 0 : i64, scratch_operands = 0 : i64, tpu.core_type = #tpu.core_type<tc>, window_params = [{transform_indices = @transform_0, window_bounds = array<i64: 8, 12>}, {pipeline_mode = #tpu.pipeline_mode<synchronous>, transform_indices = @transform_1, window_bounds = array<i64: 12, 12>}, {transform_indices = @transform_2, window_bounds = array<i64: 8, 12>}]} {
    %c0 = arith.constant 0 : index
    %c0_0 = arith.constant 0 : index
    %0 = vector.load %arg1[%c0, %c0_0] : memref<8x12xf32, #tpu.memory_space<vmem>>, vector<8x12xf32>
    %c0_1 = arith.constant 0 : index
    %c0_2 = arith.constant 0 : index
    %1 = vector.load %arg2[%c0_1, %c0_2] : memref<12x12xf32, #tpu.memory_space<vmem>>, vector<12x12xf32>
    %cst = arith.constant dense<0.000000e+00> : vector<8x12xf32>
    %2 = tpu.matmul %0, %1, %cst {dimension_numbers = #tpu.dot_dimension_numbers<[1], [0], [0], [1], [0, 0, 1, 1], [], []>} : vector<8x12xf32>, vector<12x12xf32>, vector<8x12xf32> -> vector<8x12xf32>
    %c0_3 = arith.constant 0 : index
    %c0_4 = arith.constant 0 : index
    %3 = vector.load %arg3[%c0_3, %c0_4] : memref<8x12xf32, #tpu.memory_space<vmem>>, vector<8x12xf32>
    tpu.vector_store %arg3[%c0_3, %c0_4], %2 {strides = array<i32>} : memref<8x12xf32, #tpu.memory_space<vmem>>, vector<8x12xf32>,
    return
  }
  func.func @transform_0(%arg0: i32) -> (i32, i32) {
    %c0_i32 = arith.constant 0 : i32
    %c0_i32_0 = arith.constant 0 : i32
    return %arg0, %c0_i32 : i32, i32
  }
  func.func @transform_1(%arg0: i32) -> (i32, i32) {
    %c0_i32 = arith.constant 0 : i32
    %c0_i32_0 = arith.constant 0 : i32
    %c0_i32_1 = arith.constant 0 : i32
    return %c0_i32, %c0_i32_0 : i32, i32
  }
  func.func @transform_2(%arg0: i32) -> (i32, i32) {
    %c0_i32 = arith.constant 0 : i32
    %c0_i32_0 = arith.constant 0 : i32
    return %arg0, %c0_i32 : i32, i32
  }
}

</mosaic_0001>

<llo_original>
// kernel: custom-call.57
$region0: #{custom-call.57}
  %s0 = inlined_call_operand.vmem [shape: f32[16,6,3], index: 0, kind: input, shape index: {}]
  %s1 = inlined_call_operand.vmem [shape: f32[16,6,3], index: 1, kind: output, shape index: {0}]
  %s2 = inlined_call_operand.vmem [shape: f32[16,3], index: 2, kind: output, shape index: {1}]
  %3 = xla_tuple %s1, %s2
  $region1: #{custom-call.57} parent=0
    #allocation0 [shape = 'u8[8192]{0}', space=vmem, size = 0x2000, scoped, tag = 'operand span for operand 0']
    #allocation1 [shape = 'u8[8192]{0}', space=vmem, size = 0x2000, scoped, tag = 'operand span for operand 1']
    #allocation2 [shape = 'u8[8192]{0}', space=vmem, size = 0x2000, scoped, tag = 'operand span for operand 2']
    loop: start=0, step=1, limit=18
    $region2: #{custom-call.57} parent=1 // loop_pre_header
      _
    $region3: #{custom-call.57} parent=1 // loop_header
      %s5 = sphi 0, %s9
      %p6 = scmp.ge.s32.totalorder %s5, 18
      %s12 = sphi 0, %s31
      %s13 = sphi 0, %s27
      %s14 = sphi 0, %s23
      %s15 = sphi 0, %s12
      %s16 = sphi 0, %s13
      %s17 = sphi 0, %s14
      %s18 = sphi 0, %s15
      %s19 = sphi 0, %s16
      %s20 = sphi 0, %s17
      %s46 = sphi 0, %s48
      %s49 = sphi 0, %s46
      %s50 = sphi 0, %s49
      %s66 = sphi 0, %s50
    $region4: #{custom-call.57} parent=1 // loop_header_branch
      %8 = sbr.rel (%p6) target = $region8
    $region5: #{custom-call.57} parent=1 // loop_body
      %s10 = ssub.s32 %s5, 1
      %s11 = ssub.s32 %s5, 2
      %s21 = sadd.s32 1, %s14
      %p22 = scmp.ge.s32.totalorder %s21, 1
      %s23 = scalar_select %p22, 0, %s21
      %s24 = sadd.s32 1, %s13
      %s25 = scalar_select %p22, %s24, %s13
      %p26 = scmp.ge.s32.totalorder %s25, 1
      %s27 = scalar_select %p26, 0, %s25
      %s28 = sadd.s32 1, %s12
      %s29 = scalar_select %p26, %s28, %s12
      %p30 = scmp.ge.s32.totalorder %s29, 16
      %s31 = scalar_select %p30, 0, %s29
      %p32 = scmp.lt.s32.totalorder %s12, 0
      %s33 = ssub.s32 0, %s12
      %s34 = scalar_select %p32, %s33, %s12
      %s35 = sshrl.u32 %s34, 3
      %s36 = ssub.s32 0, %s35
      %s37 = scalar_select %p32, %s36, %s35
      %p38 = scmp.lt.s32.totalorder %s31, 0
      %s39 = ssub.s32 0, %s31
      %s40 = scalar_select %p38, %s39, %s31
      %s41 = sshrl.u32 %s40, 3
      %s42 = ssub.s32 0, %s41
      %s43 = scalar_select %p38, %s42, %s41
      %s44 = ssub.s32 %s37, %s43
      %p45 = scmp.eq.s32.totalorder %s44, 0
      %s47 = sadd.s32 %s46, 1
      %s48 = scalar_select %p45, %s46, %s47
      %p51 = pneg %p45
      %p52 = scmp.eq.s32.totalorder %s5, 15
      %p53 = por %p51, %p52
      %p54 = scmp.ne.s32.totalorder %s46, %s49
      %p55 = scmp.eq.s32.totalorder %s5, 0
      %p56 = por %p54, %p55
      %p57 = scmp.ne.s32.totalorder %s46, %s49
      %p58 = scmp.eq.s32.totalorder %s10, 15
      %p59 = por %p57, %p58
      %p60 = scmp.ne.s32.totalorder %s49, %s50
      %p61 = scmp.eq.s32.totalorder %s10, 0
      %p62 = por %p60, %p61
      %p63 = scmp.ne.s32.totalorder %s49, %s50
      %p64 = scmp.eq.s32.totalorder %s11, 15
      %p65 = por %p63, %p64
      %p67 = scmp.ne.s32.totalorder %s50, %s66
      %p68 = scmp.eq.s32.totalorder %s11, 0
      %p69 = por %p67, %p68
      %p70 = scmp.le.s32.totalorder 1, %s5
      %p71 = scmp.lt.s32.totalorder %s5, 17
      %p72 = pnand %p70, %p71
      %p73 = pneg %p72
      // Predicated region
      $region9: #{custom-call.57} parent=5 // pred_check
        _
      $region10: #{custom-call.57} parent=5 // pred_check_branch
        %75 = sbr.rel (%p72) target = $region12
      $region11: #{custom-call.57} parent=5 // pred_region
        %s76 = ssub.s32 %s5, 1
      $region12: #{custom-call.57} parent=5 // pred_fallthru
        _
      %p77 = scmp.lt.s32.totalorder %s5, 16
      // Predicated region
      $region13: #{custom-call.57} parent=5 // pred_check
        %p78 = pneg %p77
      $region14: #{custom-call.57} parent=5 // pred_check_branch
        %80 = sbr.rel (%p78) target = $region16
      $region15: #{custom-call.57} parent=5 // pred_region
        %s81 = sand.u32 %s5, 1
        %s82 = sand.u32 %s5, 1
        %s83 = smul.addr %s82, 8
        %s84 = scalar_lea.vmem [#allocation0], %s83
        %s85 = sadd.s32 %s14, %s13
        %s86 = sadd.s32 %s85, %s12
        %s87 = smul.addr %s86, 8
        %s88 = scalar_lea.vmem %s0, %s87
        // Predicated region
        $region17: #{custom-call.57} parent=15 // pred_check
          _
        $region18: #{custom-call.57} parent=15 // pred_check_branch
          %90 = sbr.rel (0) target = $region20
        $region19: #{custom-call.57} parent=15 // pred_region
          // Predicated region
          $region21: #{custom-call.57} parent=19 // pred_check
            _
          $region22: #{custom-call.57} parent=19 // pred_check_branch
            %92 = sbr.rel (0) target = $region24
          $region23: #{custom-call.57} parent=19 // pred_region
            // Predicated region
            $region36: #{custom-call.57} parent=23 // pred_check
              _
            $region37: #{custom-call.57} parent=23 // pred_check_branch
              %108 = sbr.rel (0) target = $region39
            $region38: #{custom-call.57} parent=23 // pred_region
              loop: start=0, step=1, limit=1
              $region40: #{custom-call.57} parent=38 // loop_pre_header
                _
              $region41: #{custom-call.57} parent=38 // loop_header
                %s110 = sphi 0, %s114
                %p111 = scmp.ge.s32.totalorder %s110, 1
                %s115 = sphi %s88, %s88
                %s116 = sphi %s84, %s84
              $region42: #{custom-call.57} parent=38 // loop_header_branch
                %113 = sbr.rel (%p111) target = $region46
              $region43: #{custom-call.57} parent=38 // loop_body
                %v117 = vld [vmem:[%s115] sm:$0xff]
                %118 = vst [vmem:[%s116] sm:$0xff] %v117
              $region44: #{custom-call.57} parent=38 // loop_footer
                %s114 = sadd.s32 1, %s110
              $region45: #{custom-call.57} parent=38 // loop_footer_branch
                %109 = sbr.rel target = $region41
              $region46: #{custom-call.57} parent=38 // loop_exit
                _
            $region39: #{custom-call.57} parent=23 // pred_fallthru
              _
            // Predicated region
            $region47: #{custom-call.57} parent=23 // pred_check
              _
            $region48: #{custom-call.57} parent=23 // pred_check_branch
              %120 = sbr.rel target = $region50
            $region49: #{custom-call.57} parent=23 // pred_region
              _
            $region50: #{custom-call.57} parent=23 // pred_fallthru
              _
          $region24: #{custom-call.57} parent=19 // pred_fallthru
            _
          // Predicated region
          $region25: #{custom-call.57} parent=19 // pred_check
            _
          $region26: #{custom-call.57} parent=19 // pred_check_branch
            %94 = sbr.rel target = $region28
          $region27: #{custom-call.57} parent=19 // pred_region
            %s96 = ssub.s32 256, 1
            loop: start=0, step=1, limit=1
            $region29: #{custom-call.57} parent=27 // loop_pre_header
              _
            $region30: #{custom-call.57} parent=27 // loop_header
              %s98 = sphi 0, %s102
              %p99 = scmp.ge.s32.totalorder %s98, 1
              %s103 = sphi %s88, %s88
              %s104 = sphi %s84, %s84
            $region31: #{custom-call.57} parent=27 // loop_header_branch
              %101 = sbr.rel (%p99) target = $region35
            $region32: #{custom-call.57} parent=27 // loop_body
              %v105 = vld [vmem:[%s103] sm:%s96]
              %106 = vst [vmem:[%s104] sm:%s96] %v105
            $region33: #{custom-call.57} parent=27 // loop_footer
              %s102 = sadd.s32 1, %s98
            $region34: #{custom-call.57} parent=27 // loop_footer_branch
              %97 = sbr.rel target = $region30
            $region35: #{custom-call.57} parent=27 // loop_exit
              _
          $region28: #{custom-call.57} parent=19 // pred_fallthru
            _
        $region20: #{custom-call.57} parent=15 // pred_fallthru
          _
        %121 = vnop
      $region16: #{custom-call.57} parent=5 // pred_fallthru
        _
      %p122 = scmp.le.s32.totalorder 1, %s5
      %p123 = scmp.lt.s32.totalorder %s5, 17
      %p124 = pnand %p122, %p123
      %p125 = pneg %p124
      // Predicated region
      $region51: #{custom-call.57} parent=5 // pred_check
        _
      $region52: #{custom-call.57} parent=5 // pred_check_branch
        %127 = sbr.rel (%p124) target = $region54
      $region53: #{custom-call.57} parent=5 // pred_region
        #allocation3 [shape = 'f32[6,128]{1,0}', space=vmem, size = 0x1000, scoped, tag = 'scratch for Householder reflectors']
        %s128 = ssub.s32 %s5, 1
        %s129 = sand.u32 %s10, 1
        %s130 = sand.u32 %s10, 1
        %s131 = smul.addr %s130, 8
        %s132 = scalar_lea.vmem [#allocation0], %s131
        %s133 = sand.u32 %s10, 1
        %s134 = sand.u32 %s10, 1
        %s135 = smul.addr %s134, 8
        %s136 = scalar_lea.vmem [#allocation0], %s135
        %s137 = sand.u32 %s10, 1
        %s138 = sand.u32 %s10, 1
        %s139 = smul.addr %s138, 8
        %s140 = scalar_lea.vmem [#allocation1], %s139
        %p141 = pneg %p62
        %p142 = pneg %p59
        %s143 = sand.u32 %s49, 1
        %s144 = sand.u32 %s49, 1
        %s145 = smul.addr %s144, 8
        %s146 = scalar_lea.vmem [#allocation2], %s145
        %p147 = scmp.lt.s32.totalorder %s15, 0
        %s148 = ssub.s32 0, %s15
        %s149 = scalar_select %p147, %s148, %s15
        %s150 = sshrl.u32 %s149, 3
        %s151 = ssub.s32 0, %s150
        %s152 = scalar_select %p147, %s151, %s150
        %s153 = sand.u32 %s15, 7
        %s154 = scalar_lea.vmem %s146, %s153 [#allocation2]
        %v155 = vld [vmem:[%s132] sm:$0xff]
        %156 = vst [vmem:[%s140] sm:$0xff] %v155
        %157 = vst [vmem:[%s154] sm:$0x1] 0.0
        loop: start=0, step=1, limit=3
        $region55: #{custom-call.57} parent=53 // loop_pre_header
          _
        $region56: #{custom-call.57} parent=53 // loop_header
          %s159 = sphi 0, %s163
          %p160 = scmp.ge.s32.totalorder %s159, 3
        $region57: #{custom-call.57} parent=53 // loop_header_branch
          %162 = sbr.rel (%p160) target = $region61
        $region58: #{custom-call.57} parent=53 // loop_body
          %v164 = vld [vmem:[%s140] sm:$0xff]
          %v165 = vlaneseq
          %v166 = vshrl.u32 %v165, 7
          %v168 = vstv %s159
          %vm169 = vcmp.gt.s32.totalorder %v166, %v168
          %vm170 = vcmp.lt.s32.totalorder %v166, 6
          %vm171 = vmand %vm169, %vm170
          %v172 = vsel %vm171, %v164, 0.0
          %v173 = vmul.f32 %v172, %v172
          %v174 = vrot.slane %v173, 4
          %v175 = vadd.f32 %v173, %v174
          %v176 = vrot.slane %v175, 2
          %v177 = vadd.f32 %v175, %v176
          %v178 = vrot.slane %v177, 1
          %v179 = vadd.f32 %v177, %v178
          %v180 = vrsqrt.pop %v179
          %v181 = vmul.f32 %v179, %v180
          %vm182 = vcmp.eq.f32.partialorder %v179, inf
          %v183 = vsel %vm182, %v179, %v181
          %vm184 = vcmp.eq.f32.partialorder %v179, 0.0
          %v185 = vand.u32 %v179, 2147483648
          %v186 = vsel %vm184, %v185, %v183
          %vm187 = vcmp.eq.f32.partialorder %v179, 0.0
          %s188 = sshrl.u32 %s159, 3
          %s189 = sand.u32 %s159, 7
          %s190 = smul.addr %s188, 8
          %s191 = sadd.s32 %s189, %s190
          %s192 = scalar_lea.vmem %s140, %s191 [#allocation1]
          %v193 = vld [vmem:[%s192] ss:$0 sm:$0xff]
          %v194 = vand.u32 2147483647, %v193
          %v195 = vmax.f32 %v194, 0.0
          %v196 = vand.u32 2147483647, %v186
          %v197 = vmax.f32 %v195, %v196
          %v198 = vrcp.pop %v197
          %v199 = vmul.f32 %v194, %v198
          %v200 = vmul.f32 %v199, %v199
          %v201 = vrcp.pop %v197
          %v202 = vmul.f32 0.0, %v201
          %v203 = vmul.f32 %v202, %v202
          %v204 = vadd.f32 %v200, %v203
          %v205 = vrcp.pop %v197
          %v206 = vmul.f32 %v196, %v205
          %v207 = vmul.f32 %v206, %v206
          %v208 = vadd.f32 %v204, %v207
          %vm209 = vcmp.eq.f32.partialorder %v197, 0.0
          %v210 = vrsqrt.pop %v208
          %v211 = vmul.f32 %v208, %v210
          %vm212 = vcmp.eq.f32.partialorder %v208, inf
          %v213 = vsel %vm212, %v208, %v211
          %vm214 = vcmp.eq.f32.partialorder %v208, 0.0
          %v215 = vand.u32 %v208, 2147483648
          %v216 = vsel %vm214, %v215, %v213
          %v217 = vmul.f32 %v197, %v216
          %v218 = vsel %vm209, 0.0, %v217
          %vm219 = vcmp.lt.f32.partialorder %v193, 0.0
          %v220 = vxor.u32 %v218, 2147483648
          %v221 = vsel %vm219, %v218, %v220
          %v222 = vsub.f32 %v221, %v193
          %v223 = vrcp.pop %v221
          %v224 = vmul.f32 %v222, %v223
          %v225 = vsel %vm187, %v193, %v221
          %v226 = vsel %vm187, 0.0, %v224
          %v227 = vsub.f32 %v193, %v225
          %s228 = smov %s140
          %v229 = vlaneseq
          %v230 = vshrl.u32 %v229, 7
          %v231 = vmov %v230
          %v232 = vld [vmem:[%s228] sm:$0xff]
          %v234 = vstv %s159
          %vm235 = vcmp.gt.s32.totalorder %v231, %v234
          %vm236 = vcmp.lt.s32.totalorder %v231, 6
          %vm237 = vmand %vm235, %vm236
          %v238 = vsel %vm237, %v232, 0.0
          %v239 = vrcp.pop %v227
          %v240 = vmul.f32 %v238, %v239
          %v241 = vsel %vm187, 0.0, %v240
          %v242 = vstv %s159
          %v243 = vlaneseq
          %v244 = vand.u32 %v243, 127
          %vm245 = vcmp.eq.s32.totalorder %v244, %v242
          %v246 = vsel %vm245, %v241, 0.0
          %247 = vadd.xlane.f32.xlu0 %v246
          %v248 = vpop.xlane.xlu0 %247
          %249 = vst [vmem:[#allocation3] sm:$0xff] %v248
          %s250 = scalar_lea.vmem [#allocation3], %s159
          %251 = vst [vmem:[%s250] sm:$0x1] 1.0
          %v252 = vstv %s159
          %v253 = vlaneseq
          %v254 = vand.u32 %v253, 127
          %vm255 = vcmp.eq.s32.totalorder %v254, %v252
          %v256 = vsel %vm255, %v226, 0.0
          %257 = vadd.xlane.f32.xlu0 %v256
          %v258 = vpop.xlane.xlu0 %257
          %v259 = vstv %s159
          %v260 = vlaneseq
          %v261 = vand.u32 %v260, 127
          %vm262 = vcmp.eq.s32.totalorder %v261, %v259
          %v263 = vld [vmem:[%s154] ss:$0 sm:$0xff]
          %v264 = vsel %vm262, %v258, %v263
          %265 = vst [vmem:[%s154] sm:$0x1] %v264
          %s266 = smov %s140
          %s267 = smov [#allocation3]
          %v268 = vlaneseq
          %v269 = vshrl.u32 %v268, 7
          %v270 = vmov %v269
          %v272 = vld [vmem:[%s267] sm:$0xff]
          %v273 = vld [vmem:[%s266] sm:$0xff]
          %v274 = vmul.f32 %v272, %v273
          %vm275 = vcmp.lt.s32.totalorder %v270, 6
          %v276 = vsel %vm275, %v274, 0.0
          %v277 = vrot.slane %v276, 4
          %v278 = vadd.f32 %v276, %v277
          %v279 = vrot.slane %v278, 2
          %v280 = vadd.f32 %v278, %v279
          %v281 = vrot.slane %v280, 1
          %v282 = vadd.f32 %v280, %v281
          %s283 = smov %s266
          %s284 = smov %s267
          %v285 = vlaneseq
          %v286 = vshrl.u32 %v285, 7
          %v287 = vmov %v286
          %v288 = vmul.f32 %v282, %v258
          %v290 = vlaneseq
          %v291 = vand.u32 %v290, 127
          %v292 = vld [vmem:[%s284] sm:$0xff]
          %v293 = vmul.f32 %v292, %v288
          %v294 = vld [vmem:[%s283] sm:$0xff]
          %v295 = vstv %s159
          %vm296 = vcmp.gt.s32.totalorder %v291, %v295
          %v297 = vsub.f32 %v294, %v293
          %v298 = vsel %vm296, %v297, %v294
          %v299 = vstv %s159
          %v300 = vlaneseq
          %v301 = vand.u32 %v300, 127
          %vm302 = vcmp.eq.s32.totalorder %v301, %v299
          %v303 = vstv %s159
          %vm304 = vcmp.ge.s32.totalorder %v287, %v303
          %vm305 = vmand %vm302, %vm304
          %v306 = vsel %vm305, %v292, %v298
          %307 = vst [vmem:[%s283] sm:$0xff] %v306
          %s308 = scalar_lea.vmem %s283, %s159
          %v309 = vld [vmem:[%s308] ss:$0 sm:$0xff]
          %v310 = vstv %s159
          %v311 = vlaneseq
          %v312 = vand.u32 %v311, 127
          %vm313 = vcmp.eq.s32.totalorder %v312, %v310
          %v314 = vsel %vm313, %v225, %v309
          %315 = vst [vmem:[%s308] sm:$0x1] %v314
        $region59: #{custom-call.57} parent=53 // loop_footer
          %s163 = sadd.s32 1, %s159
        $region60: #{custom-call.57} parent=53 // loop_footer_branch
          %158 = sbr.rel target = $region56
        $region61: #{custom-call.57} parent=53 // loop_exit
          _
        %s316 = sand.u32 %s10, 1
        %s317 = sand.u32 %s10, 1
        %s318 = smul.addr %s317, 8
        %s319 = scalar_lea.vmem [#allocation1], %s318
        %s320 = sand.u32 %s49, 1
        %s321 = sand.u32 %s49, 1
        %s322 = smul.addr %s321, 8
        %s323 = scalar_lea.vmem [#allocation2], %s322
        %s324 = sadd.s32 %s17, %s16
        %s325 = sadd.s32 %s324, %s15
        %s326 = smul.addr %s325, 8
        %s327 = scalar_lea.vmem %s1, %s326
        // Predicated region
        $region62: #{custom-call.57} parent=53 // pred_check
          _
        $region63: #{custom-call.57} parent=53 // pred_check_branch
          %329 = sbr.rel (0) target = $region65
        $region64: #{custom-call.57} parent=53 // pred_region
          // Predicated region
          $region66: #{custom-call.57} parent=64 // pred_check
            _
          $region67: #{custom-call.57} parent=64 // pred_check_branch
            %331 = sbr.rel (0) target = $region69
          $region68: #{custom-call.57} parent=64 // pred_region
            // Predicated region
            $region81: #{custom-call.57} parent=68 // pred_check
              _
            $region82: #{custom-call.57} parent=68 // pred_check_branch
              %347 = sbr.rel (0) target = $region84
            $region83: #{custom-call.57} parent=68 // pred_region
              loop: start=0, step=1, limit=1
              $region85: #{custom-call.57} parent=83 // loop_pre_header
                _
              $region86: #{custom-call.57} parent=83 // loop_header
                %s349 = sphi 0, %s353
                %p350 = scmp.ge.s32.totalorder %s349, 1
                %s354 = sphi %s319, %s319
                %s355 = sphi %s327, %s327
              $region87: #{custom-call.57} parent=83 // loop_header_branch
                %352 = sbr.rel (%p350) target = $region91
              $region88: #{custom-call.57} parent=83 // loop_body
                %v356 = vld [vmem:[%s354] sm:$0xff]
                %357 = vst [vmem:[%s355] sm:$0xff] %v356
              $region89: #{custom-call.57} parent=83 // loop_footer
                %s353 = sadd.s32 1, %s349
              $region90: #{custom-call.57} parent=83 // loop_footer_branch
                %348 = sbr.rel target = $region86
              $region91: #{custom-call.57} parent=83 // loop_exit
                _
            $region84: #{custom-call.57} parent=68 // pred_fallthru
              _
            // Predicated region
            $region92: #{custom-call.57} parent=68 // pred_check
              _
            $region93: #{custom-call.57} parent=68 // pred_check_branch
              %359 = sbr.rel target = $region95
            $region94: #{custom-call.57} parent=68 // pred_region
              _
            $region95: #{custom-call.57} parent=68 // pred_fallthru
              _
          $region69: #{custom-call.57} parent=64 // pred_fallthru
            _
          // Predicated region
          $region70: #{custom-call.57} parent=64 // pred_check
            _
          $region71: #{custom-call.57} parent=64 // pred_check_branch
            %333 = sbr.rel target = $region73
          $region72: #{custom-call.57} parent=64 // pred_region
            %s335 = ssub.s32 256, 1
            loop: start=0, step=1, limit=1
            $region74: #{custom-call.57} parent=72 // loop_pre_header
              _
            $region75: #{custom-call.57} parent=72 // loop_header
              %s337 = sphi 0, %s341
              %p338 = scmp.ge.s32.totalorder %s337, 1
              %s342 = sphi %s319, %s319
              %s343 = sphi %s327, %s327
            $region76: #{custom-call.57} parent=72 // loop_header_branch
              %340 = sbr.rel (%p338) target = $region80
            $region77: #{custom-call.57} parent=72 // loop_body
              %v344 = vld [vmem:[%s342] sm:%s335]
              %345 = vst [vmem:[%s343] sm:%s335] %v344
            $region78: #{custom-call.57} parent=72 // loop_footer
              %s341 = sadd.s32 1, %s337
            $region79: #{custom-call.57} parent=72 // loop_footer_branch
              %336 = sbr.rel target = $region75
            $region80: #{custom-call.57} parent=72 // loop_exit
              _
          $region73: #{custom-call.57} parent=64 // pred_fallthru
            _
        $region65: #{custom-call.57} parent=53 // pred_fallthru
          _
        %360 = vnop
        // Predicated region
        $region96: #{custom-call.57} parent=53 // pred_check
          %p361 = pneg %p59
        $region97: #{custom-call.57} parent=53 // pred_check_branch
          %363 = sbr.rel (%p361) target = $region99
        $region98: #{custom-call.57} parent=53 // pred_region
          %p364 = scmp.lt.s32.totalorder %s15, 0
          %s365 = ssub.s32 0, %s15
          %s366 = scalar_select %p364, %s365, %s15
          %s367 = sshrl.u32 %s366, 3
          %s368 = ssub.s32 0, %s367
          %s369 = scalar_select %p364, %s368, %s367
          %s370 = smul.addr %s369, 8
          %s371 = scalar_lea.vmem %s2, %s370
          // Predicated region
          $region100: #{custom-call.57} parent=98 // pred_check
            _
          $region101: #{custom-call.57} parent=98 // pred_check_branch
            %373 = sbr.rel (0) target = $region103
          $region102: #{custom-call.57} parent=98 // pred_region
            // Predicated region
            $region104: #{custom-call.57} parent=102 // pred_check
              _
            $region105: #{custom-call.57} parent=102 // pred_check_branch
              %375 = sbr.rel (0) target = $region107
            $region106: #{custom-call.57} parent=102 // pred_region
              // Predicated region
              $region119: #{custom-call.57} parent=106 // pred_check
                _
              $region120: #{custom-call.57} parent=106 // pred_check_branch
                %391 = sbr.rel (0) target = $region122
              $region121: #{custom-call.57} parent=106 // pred_region
                loop: start=0, step=1, limit=1
                $region123: #{custom-call.57} parent=121 // loop_pre_header
                  _
                $region124: #{custom-call.57} parent=121 // loop_header
                  %s393 = sphi 0, %s397
                  %p394 = scmp.ge.s32.totalorder %s393, 1
                  %s398 = sphi %s323, %s323
                  %s399 = sphi %s371, %s371
                $region125: #{custom-call.57} parent=121 // loop_header_branch
                  %396 = sbr.rel (%p394) target = $region129
                $region126: #{custom-call.57} parent=121 // loop_body
                  %v400 = vld [vmem:[%s398] sm:$0xff]
                  %401 = vst [vmem:[%s399] sm:$0xff] %v400
                $region127: #{custom-call.57} parent=121 // loop_footer
                  %s397 = sadd.s32 1, %s393
                $region128: #{custom-call.57} parent=121 // loop_footer_branch
                  %392 = sbr.rel target = $region124
                $region129: #{custom-call.57} parent=121 // loop_exit
                  _
              $region122: #{custom-call.57} parent=106 // pred_fallthru
                _
              // Predicated region
              $region130: #{custom-call.57} parent=106 // pred_check
                _
              $region131: #{custom-call.57} parent=106 // pred_check_branch
                %403 = sbr.rel target = $region133
              $region132: #{custom-call.57} parent=106 // pred_region
                _
              $region133: #{custom-call.57} parent=106 // pred_fallthru
                _
            $region107: #{custom-call.57} parent=102 // pred_fallthru
              _
            // Predicated region
            $region108: #{custom-call.57} parent=102 // pred_check
              _
            $region109: #{custom-call.57} parent=102 // pred_check_branch
              %377 = sbr.rel target = $region111
            $region110: #{custom-call.57} parent=102 // pred_region
              %s379 = ssub.s32 256, 1
              loop: start=0, step=1, limit=1
              $region112: #{custom-call.57} parent=110 // loop_pre_header
                _
              $region113: #{custom-call.57} parent=110 // loop_header
                %s381 = sphi 0, %s385
                %p382 = scmp.ge.s32.totalorder %s381, 1
                %s386 = sphi %s323, %s323
                %s387 = sphi %s371, %s371
              $region114: #{custom-call.57} parent=110 // loop_header_branch
                %384 = sbr.rel (%p382) target = $region118
              $region115: #{custom-call.57} parent=110 // loop_body
                %v388 = vld [vmem:[%s386] sm:%s379]
                %389 = vst [vmem:[%s387] sm:%s379] %v388
              $region116: #{custom-call.57} parent=110 // loop_footer
                %s385 = sadd.s32 1, %s381
              $region117: #{custom-call.57} parent=110 // loop_footer_branch
                %380 = sbr.rel target = $region113
              $region118: #{custom-call.57} parent=110 // loop_exit
                _
            $region111: #{custom-call.57} parent=102 // pred_fallthru
              _
          $region103: #{custom-call.57} parent=98 // pred_fallthru
            _
          %404 = vnop
        $region99: #{custom-call.57} parent=53 // pred_fallthru
          _
      $region54: #{custom-call.57} parent=5 // pred_fallthru
        _
      %p405 = scmp.le.s32.totalorder 2, %s5
      // Predicated region
      $region134: #{custom-call.57} parent=5 // pred_check
        %p406 = pneg %p405
      $region135: #{custom-call.57} parent=5 // pred_check_branch
        %408 = sbr.rel (%p406) target = $region137
      $region136: #{custom-call.57} parent=5 // pred_region
        %s409 = ssub.s32 %s5, 2
        %s410 = sand.u32 %s11, 1
        %s411 = sand.u32 %s11, 1
        %s412 = smul.addr %s411, 8
        %s413 = scalar_lea.vmem [#allocation1], %s412
        // Predicated region
        $region138: #{custom-call.57} parent=136 // pred_check
          %p414 = pneg %p65
        $region139: #{custom-call.57} parent=136 // pred_check_branch
          %416 = sbr.rel (%p414) target = $region141
        $region140: #{custom-call.57} parent=136 // pred_region
          %s417 = sand.u32 %s50, 1
          %s418 = sand.u32 %s50, 1
          %s419 = smul.addr %s418, 8
          %s420 = scalar_lea.vmem [#allocation2], %s419
        $region141: #{custom-call.57} parent=136 // pred_fallthru
          _
      $region137: #{custom-call.57} parent=5 // pred_fallthru
        _
    $region6: #{custom-call.57} parent=1 // loop_footer
      %s9 = sadd.s32 1, %s5
    $region7: #{custom-call.57} parent=1 // loop_footer_branch
      %4 = sbr.rel target = $region3
    $region8: #{custom-call.57} parent=1 // loop_exit
      _

// kernel: custom-call.58
$region0: #{custom-call.58}
  %s0 = inlined_call_operand.vmem [shape: f32[16,3,3], index: 0, kind: input, shape index: {}]
  %s1 = inlined_call_operand.vmem [shape: f32[16,3,3], index: 1, kind: output, shape index: {}]
  $region1: #{custom-call.58} parent=0
    #allocation0 [shape = 'u8[4096]{0}', space=vmem, size = 0x1000, scoped, tag = 'operand span for operand 0']
    #allocation1 [shape = 'u8[4096]{0}', space=vmem, size = 0x1000, scoped, tag = 'packed  for operand 0']
    #allocation2 [shape = 'u8[4096]{0}', space=vmem, size = 0x1000, scoped, tag = 'operand span for operand 1']
    #allocation3 [shape = 'u8[4096]{0}', space=vmem, size = 0x1000, scoped, tag = 'packed  for operand 1']
    loop: start=0, step=1, limit=18
    $region2: #{custom-call.58} parent=1 // loop_pre_header
      _
    $region3: #{custom-call.58} parent=1 // loop_header
      %s3 = sphi 0, %s7
      %p4 = scmp.ge.s32.totalorder %s3, 18
    $region4: #{custom-call.58} parent=1 // loop_header_branch
      %6 = sbr.rel (%p4) target = $region8
    $region5: #{custom-call.58} parent=1 // loop_body
      %s8 = ssub.s32 %s3, 1
      %s9 = ssub.s32 %s3, 2
      %s10 = sadd.s32 %s3, 1
      %p11 = scmp.le.s32.totalorder 1, %s3
      %p12 = scmp.lt.s32.totalorder %s3, 17
      %p13 = pnand %p11, %p12
      %p14 = pneg %p13
      // Predicated region
      $region9: #{custom-call.58} parent=5 // pred_check
        _
      $region10: #{custom-call.58} parent=5 // pred_check_branch
        %16 = sbr.rel (%p13) target = $region12
      $region11: #{custom-call.58} parent=5 // pred_region
        %s17 = ssub.s32 %s3, 1
      $region12: #{custom-call.58} parent=5 // pred_fallthru
        _
      %p18 = scmp.lt.s32.totalorder %s3, 16
      // Predicated region
      $region13: #{custom-call.58} parent=5 // pred_check
        %p19 = pneg %p18
      $region14: #{custom-call.58} parent=5 // pred_check_branch
        %21 = sbr.rel (%p19) target = $region16
      $region15: #{custom-call.58} parent=5 // pred_region
        %s22 = sand.u32 %s3, 1
        %s23 = sand.u32 %s3, 1
        %s24 = smul.addr %s23, 4
        %s25 = scalar_lea.vmem [#allocation1], %s24
        %s26 = smul.addr %s3, 4
        %s27 = scalar_lea.vmem %s0, %s26
        // Predicated region
        $region17: #{custom-call.58} parent=15 // pred_check
          _
        $region18: #{custom-call.58} parent=15 // pred_check_branch
          %29 = sbr.rel (0) target = $region20
        $region19: #{custom-call.58} parent=15 // pred_region
          // Predicated region
          $region21: #{custom-call.58} parent=19 // pred_check
            _
          $region22: #{custom-call.58} parent=19 // pred_check_branch
            %31 = sbr.rel target = $region24
          $region23: #{custom-call.58} parent=19 // pred_region
            // Predicated region
            $region36: #{custom-call.58} parent=23 // pred_check
              _
            $region37: #{custom-call.58} parent=23 // pred_check_branch
              %47 = sbr.rel (0) target = $region39
            $region38: #{custom-call.58} parent=23 // pred_region
              %s49 = ssub.s32 16, 1
              loop: start=0, step=1, limit=1
              $region40: #{custom-call.58} parent=38 // loop_pre_header
                _
              $region41: #{custom-call.58} parent=38 // loop_header
                %s51 = sphi 0, %s55
                %p52 = scmp.ge.s32.totalorder %s51, 1
                %s56 = sphi %s27, %s27
                %s57 = sphi %s25, %s25
              $region42: #{custom-call.58} parent=38 // loop_header_branch
                %54 = sbr.rel (%p52) target = $region46
              $region43: #{custom-call.58} parent=38 // loop_body
                %v58 = vld [vmem:[%s56] sm:%s49]
                %59 = vst [vmem:[%s57] sm:%s49] %v58
              $region44: #{custom-call.58} parent=38 // loop_footer
                %s55 = sadd.s32 1, %s51
              $region45: #{custom-call.58} parent=38 // loop_footer_branch
                %50 = sbr.rel target = $region41
              $region46: #{custom-call.58} parent=38 // loop_exit
                _
            $region39: #{custom-call.58} parent=23 // pred_fallthru
              _
          $region24: #{custom-call.58} parent=19 // pred_fallthru
            _
          // Predicated region
          $region25: #{custom-call.58} parent=19 // pred_check
            _
          $region26: #{custom-call.58} parent=19 // pred_check_branch
            %33 = sbr.rel (0) target = $region28
          $region27: #{custom-call.58} parent=19 // pred_region
            %s35 = ssub.s32 16, 1
            loop: start=0, step=1, limit=1
            $region29: #{custom-call.58} parent=27 // loop_pre_header
              _
            $region30: #{custom-call.58} parent=27 // loop_header
              %s37 = sphi 0, %s41
              %p38 = scmp.ge.s32.totalorder %s37, 1
              %s42 = sphi %s27, %s27
              %s43 = sphi %s25, %s25
            $region31: #{custom-call.58} parent=27 // loop_header_branch
              %40 = sbr.rel (%p38) target = $region35
            $region32: #{custom-call.58} parent=27 // loop_body
              %v44 = vld [vmem:[%s42] sm:%s35]
              %45 = vst [vmem:[%s43] sm:%s35] %v44
            $region33: #{custom-call.58} parent=27 // loop_footer
              %s41 = sadd.s32 1, %s37
            $region34: #{custom-call.58} parent=27 // loop_footer_branch
              %36 = sbr.rel target = $region30
            $region35: #{custom-call.58} parent=27 // loop_exit
              _
          $region28: #{custom-call.58} parent=19 // pred_fallthru
            _
        $region20: #{custom-call.58} parent=15 // pred_fallthru
          _
        %60 = vnop
      $region16: #{custom-call.58} parent=5 // pred_fallthru
        _
      %p61 = scmp.le.s32.totalorder 1, %s3
      %p62 = scmp.lt.s32.totalorder %s3, 17
      %p63 = pnand %p61, %p62
      %p64 = pneg %p63
      // Predicated region
      $region47: #{custom-call.58} parent=5 // pred_check
        _
      $region48: #{custom-call.58} parent=5 // pred_check_branch
        %66 = sbr.rel (%p63) target = $region50
      $region49: #{custom-call.58} parent=5 // pred_region
        %s67 = ssub.s32 %s3, 1
        %s68 = sand.u32 %s8, 1
        %s69 = sand.u32 %s8, 1
        %s70 = smul.addr %s69, 4
        %s71 = scalar_lea.vmem [#allocation1], %s70
        %s72 = sand.u32 %s8, 1
        %s73 = sand.u32 %s8, 1
        %s74 = smul.addr %s73, 4
        %s75 = scalar_lea.vmem [#allocation1], %s74
        %s76 = sand.u32 %s8, 1
        %s77 = sand.u32 %s8, 1
        %s78 = smul.addr %s77, 4
        %s79 = scalar_lea.vmem [#allocation3], %s78
        %s81 = sshll.u32 1, 4
        %s82 = ssub.s32 %s81, 1
        %v83 = vld [vmem:[%s75] sm:%s82]
        %84 = vst [vmem:[#allocation0] sm:%s82] %v83
        %v85 = vlaneseq
        %v86 = vand.u32 %v85, 127
        %v87 = vlaneseq
        %v88 = vshrl.u32 %v87, 7
        %vm90 = vcmp.eq.s32.totalorder %v86, %v88
        %v91 = vld [vmem:[#allocation0] sm:$0xff]
        %v92 = vlaneseq
        %v93 = vand.u32 %v92, 127
        %vm94 = vcmp.eq.s32.totalorder %v93, 0
        %v95 = vsel %vm94, %v91, 1.0
        %v96 = vsel %vm90, %v95, 0.0
        %s97 = scalar_lea.vmem [#allocation0], 1
        %v98 = vld [vmem:[%s97] ss:$0 sm:$0xff]
        %vm99 = vcmask 23552
        %v100 = vsel %vm99, %v98, 0.0
        %v101 = vlaneseq
        %v102 = vand.u32 %v101, 127
        %vm103 = vcmp.eq.s32.totalorder %v102, 1
        %v104 = vmul.f32 %v100, %v96
        %105 = vadd.xlane.f32.xlu0 %v104
        %v106 = vpop.xlane.xlu0 %105
        %v107 = vsel %vm103, %v106, %v96
        %s108 = scalar_lea.vmem [#allocation0], 2
        %v109 = vld [vmem:[%s108] ss:$0 sm:$0xff]
        %vm110 = vcmask 23552
        %v111 = vsel %vm110, %v109, 0.0
        %v112 = vlaneseq
        %v113 = vand.u32 %v112, 127
        %vm114 = vcmp.eq.s32.totalorder %v113, 2
        %v115 = vmul.f32 %v111, %v107
        %116 = vadd.xlane.f32.xlu0 %v115
        %v117 = vpop.xlane.xlu0 %116
        %v118 = vsel %vm114, %v117, %v107
        %119 = vst [vmem:[#allocation2] sm:$0xff] %v118
        %s121 = sshll.u32 1, 4
        %s122 = ssub.s32 %s121, 1
        %v124 = vld [vmem:[#allocation2] sm:%s122]
        %s125 = sshll.u32 1, 4
        %s126 = ssub.s32 %s125, 1
        %127 = vst [vmem:[%s79] sm:%s126] %v124
        %s128 = sand.u32 %s8, 1
        %s129 = sand.u32 %s8, 1
        %s130 = smul.addr %s129, 4
        %s131 = scalar_lea.vmem [#allocation3], %s130
        %s132 = smul.addr %s8, 4
        %s133 = scalar_lea.vmem %s1, %s132
        // Predicated region
        $region51: #{custom-call.58} parent=49 // pred_check
          _
        $region52: #{custom-call.58} parent=49 // pred_check_branch
          %135 = sbr.rel (0) target = $region54
        $region53: #{custom-call.58} parent=49 // pred_region
          // Predicated region
          $region55: #{custom-call.58} parent=53 // pred_check
            _
          $region56: #{custom-call.58} parent=53 // pred_check_branch
            %137 = sbr.rel target = $region58
          $region57: #{custom-call.58} parent=53 // pred_region
            // Predicated region
            $region70: #{custom-call.58} parent=57 // pred_check
              _
            $region71: #{custom-call.58} parent=57 // pred_check_branch
              %153 = sbr.rel (0) target = $region73
            $region72: #{custom-call.58} parent=57 // pred_region
              %s155 = ssub.s32 16, 1
              loop: start=0, step=1, limit=1
              $region74: #{custom-call.58} parent=72 // loop_pre_header
                _
              $region75: #{custom-call.58} parent=72 // loop_header
                %s157 = sphi 0, %s161
                %p158 = scmp.ge.s32.totalorder %s157, 1
                %s162 = sphi %s131, %s131
                %s163 = sphi %s133, %s133
              $region76: #{custom-call.58} parent=72 // loop_header_branch
                %160 = sbr.rel (%p158) target = $region80
              $region77: #{custom-call.58} parent=72 // loop_body
                %v164 = vld [vmem:[%s162] sm:%s155]
                %165 = vst [vmem:[%s163] sm:%s155] %v164
              $region78: #{custom-call.58} parent=72 // loop_footer
                %s161 = sadd.s32 1, %s157
              $region79: #{custom-call.58} parent=72 // loop_footer_branch
                %156 = sbr.rel target = $region75
              $region80: #{custom-call.58} parent=72 // loop_exit
                _
            $region73: #{custom-call.58} parent=57 // pred_fallthru
              _
          $region58: #{custom-call.58} parent=53 // pred_fallthru
            _
          // Predicated region
          $region59: #{custom-call.58} parent=53 // pred_check
            _
          $region60: #{custom-call.58} parent=53 // pred_check_branch
            %139 = sbr.rel (0) target = $region62
          $region61: #{custom-call.58} parent=53 // pred_region
            %s141 = ssub.s32 16, 1
            loop: start=0, step=1, limit=1
            $region63: #{custom-call.58} parent=61 // loop_pre_header
              _
            $region64: #{custom-call.58} parent=61 // loop_header
              %s143 = sphi 0, %s147
              %p144 = scmp.ge.s32.totalorder %s143, 1
              %s148 = sphi %s131, %s131
              %s149 = sphi %s133, %s133
            $region65: #{custom-call.58} parent=61 // loop_header_branch
              %146 = sbr.rel (%p144) target = $region69
            $region66: #{custom-call.58} parent=61 // loop_body
              %v150 = vld [vmem:[%s148] sm:%s141]
              %151 = vst [vmem:[%s149] sm:%s141] %v150
            $region67: #{custom-call.58} parent=61 // loop_footer
              %s147 = sadd.s32 1, %s143
            $region68: #{custom-call.58} parent=61 // loop_footer_branch
              %142 = sbr.rel target = $region64
            $region69: #{custom-call.58} parent=61 // loop_exit
              _
          $region62: #{custom-call.58} parent=53 // pred_fallthru
            _
        $region54: #{custom-call.58} parent=49 // pred_fallthru
          _
        %166 = vnop
      $region50: #{custom-call.58} parent=5 // pred_fallthru
        _
      %p167 = scmp.le.s32.totalorder 2, %s3
      // Predicated region
      $region81: #{custom-call.58} parent=5 // pred_check
        %p168 = pneg %p167
      $region82: #{custom-call.58} parent=5 // pred_check_branch
        %170 = sbr.rel (%p168) target = $region84
      $region83: #{custom-call.58} parent=5 // pred_region
        %s171 = ssub.s32 %s3, 2
        %s172 = sand.u32 %s9, 1
        %s173 = sand.u32 %s9, 1
        %s174 = smul.addr %s173, 4
        %s175 = scalar_lea.vmem [#allocation3], %s174
      $region84: #{custom-call.58} parent=5 // pred_fallthru
        _
    $region6: #{custom-call.58} parent=1 // loop_footer
      %s7 = sadd.s32 1, %s3
    $region7: #{custom-call.58} parent=1 // loop_footer_branch
      %2 = sbr.rel target = $region3
    $region8: #{custom-call.58} parent=1 // loop_exit
      _

// kernel: residue_projection.2
$region0: #{residue_projection.2}
  #allocation0 [shape = 'u32[]', space=smem, size = 0x4, offset = 0x4, fixed_abs, tag = 'smem constant byte address 0x4 - core index']
  #allocation1 [shape = 'u32[144,128]{1,0:T(1,128)}', space=vmem, size = 0x12000, scoped, tag = 'internal scratch']
  %s0 = inlined_call_operand.vmem [shape: f32[16,12], index: 0, kind: input, shape index: {}]
  %s1 = inlined_call_operand.vmem [shape: f32[12,12], index: 1, kind: input, shape index: {}]
  %s2 = inlined_call_operand.vmem [shape: f32[16,12], index: 2, kind: output, shape index: {0}]
  %s3 = inlined_call_operand.vmem [shape: f32[16,1], index: 3, kind: output, shape index: {1}]
  %4 = xla_tuple %s2, %s3
  %s5 = sld [smem:[#allocation0]]
  $region49: #{residue_projection.2} parent=0
    _
  %s7 = ssub.s32 1, %s5
  %s8 = scalar_select 0, %s7, %s5
  loop: start=0, step=1, limit=4
  $region2: #{residue_projection.2} parent=0 // loop_pre_header
    _
  $region3: #{residue_projection.2} parent=0 // loop_header
    %s10 = sphi 0, %s14
    %p11 = scmp.ge.s32.totalorder %s10, 4
    %s20 = sphi 0, %s22
    %s23 = sphi 0, %s20
    %s24 = sphi 0, %s23
    %s40 = sphi 0, %s24
    %s44 = sphi 0, %s44
    %s46 = sphi 0, %s44
    %s47 = sphi 0, %s46
    %s61 = sphi 0, %s47
    %s67 = sphi 0, %s69
    %s70 = sphi 0, %s67
    %s71 = sphi 0, %s70
    %s87 = sphi 0, %s71
    %s93 = sphi 0, %s95
    %s96 = sphi 0, %s93
    %s97 = sphi 0, %s96
    %s113 = sphi 0, %s97
  $region4: #{residue_projection.2} parent=0 // loop_header_branch
    %13 = sbr.rel (%p11) target = $region8
  $region5: #{residue_projection.2} parent=0 // loop_body
    %s15 = ssub.s32 %s10, 1
    %s16 = ssub.s32 %s10, 2
    %s17 = sadd.s32 %s10, 1
    %s18 = ssub.s32 %s10, %s17
    %p19 = scmp.eq.s32.totalorder %s18, 0
    %s21 = sadd.s32 %s20, 1
    %s22 = scalar_select %p19, %s20, %s21
    %p25 = pneg %p19
    %p26 = scmp.eq.s32.totalorder %s10, 1
    %p27 = por %p25, %p26
    %p28 = scmp.ne.s32.totalorder %s20, %s23
    %p29 = scmp.eq.s32.totalorder %s10, 0
    %p30 = por %p28, %p29
    %p31 = scmp.ne.s32.totalorder %s20, %s23
    %p32 = scmp.eq.s32.totalorder %s15, 1
    %p33 = por %p31, %p32
    %p34 = scmp.ne.s32.totalorder %s23, %s24
    %p35 = scmp.eq.s32.totalorder %s15, 0
    %p36 = por %p34, %p35
    %p37 = scmp.ne.s32.totalorder %s23, %s24
    %p38 = scmp.eq.s32.totalorder %s16, 1
    %p39 = por %p37, %p38
    %p41 = scmp.ne.s32.totalorder %s24, %s40
    %p42 = scmp.eq.s32.totalorder %s16, 0
    %p43 = por %p41, %p42
    %s45 = sadd.s32 %s44, 1
    %p48 = scmp.eq.s32.totalorder %s10, 1
    %p49 = scmp.ne.s32.totalorder %s44, %s46
    %p50 = scmp.eq.s32.totalorder %s10, 0
    %p51 = por %p49, %p50
    %p52 = scmp.ne.s32.totalorder %s44, %s46
    %p53 = scmp.eq.s32.totalorder %s15, 1
    %p54 = por %p52, %p53
    %p55 = scmp.ne.s32.totalorder %s46, %s47
    %p56 = scmp.eq.s32.totalorder %s15, 0
    %p57 = por %p55, %p56
    %p58 = scmp.ne.s32.totalorder %s46, %s47
    %p59 = scmp.eq.s32.totalorder %s16, 1
    %p60 = por %p58, %p59
    %p62 = scmp.ne.s32.totalorder %s47, %s61
    %p63 = scmp.eq.s32.totalorder %s16, 0
    %p64 = por %p62, %p63
    %s65 = ssub.s32 %s10, %s17
    %p66 = scmp.eq.s32.totalorder %s65, 0
    %s68 = sadd.s32 %s67, 1
    %s69 = scalar_select %p66, %s67, %s68
    %p72 = pneg %p66
    %p73 = scmp.eq.s32.totalorder %s10, 1
    %p74 = por %p72, %p73
    %p75 = scmp.ne.s32.totalorder %s67, %s70
    %p76 = scmp.eq.s32.totalorder %s10, 0
    %p77 = por %p75, %p76
    %p78 = scmp.ne.s32.totalorder %s67, %s70
    %p79 = scmp.eq.s32.totalorder %s15, 1
    %p80 = por %p78, %p79
    %p81 = scmp.ne.s32.totalorder %s70, %s71
    %p82 = scmp.eq.s32.totalorder %s15, 0
    %p83 = por %p81, %p82
    %p84 = scmp.ne.s32.totalorder %s70, %s71
    %p85 = scmp.eq.s32.totalorder %s16, 1
    %p86 = por %p84, %p85
    %p88 = scmp.ne.s32.totalorder %s71, %s87
    %p89 = scmp.eq.s32.totalorder %s16, 0
    %p90 = por %p88, %p89
    %s91 = ssub.s32 %s10, %s17
    %p92 = scmp.eq.s32.totalorder %s91, 0
    %s94 = sadd.s32 %s93, 1
    %s95 = scalar_select %p92, %s93, %s94
    %p98 = pneg %p92
    %p99 = scmp.eq.s32.totalorder %s10, 1
    %p100 = por %p98, %p99
    %p101 = scmp.ne.s32.totalorder %s93, %s96
    %p102 = scmp.eq.s32.totalorder %s10, 0
    %p103 = por %p101, %p102
    %p104 = scmp.ne.s32.totalorder %s93, %s96
    %p105 = scmp.eq.s32.totalorder %s15, 1
    %p106 = por %p104, %p105
    %p107 = scmp.ne.s32.totalorder %s96, %s97
    %p108 = scmp.eq.s32.totalorder %s15, 0
    %p109 = por %p107, %p108
    %p110 = scmp.ne.s32.totalorder %s96, %s97
    %p111 = scmp.eq.s32.totalorder %s16, 1
    %p112 = por %p110, %p111
    %p114 = scmp.ne.s32.totalorder %s97, %s113
    %p115 = scmp.eq.s32.totalorder %s16, 0
    %p116 = por %p114, %p115
    %p117 = scmp.le.s32.totalorder 1, %s10
    %p118 = scmp.lt.s32.totalorder %s10, 3
    %p119 = pnand %p117, %p118
    %p120 = pneg %p119
    // Predicated region
    $region9: #{residue_projection.2} parent=5 // pred_check
      _
    $region10: #{residue_projection.2} parent=5 // pred_check_branch
      %122 = sbr.rel (%p119) target = $region12
    $region11: #{residue_projection.2} parent=5 // pred_region
      %s123 = ssub.s32 %s10, 1
      // Predicated region
      $region13: #{residue_projection.2} parent=11 // pred_check
        %p124 = pneg %p57
      $region14: #{residue_projection.2} parent=11 // pred_check_branch
        %126 = sbr.rel (%p124) target = $region16
      $region15: #{residue_projection.2} parent=11 // pred_region
        _
      $region16: #{residue_projection.2} parent=11 // pred_fallthru
        _
    $region12: #{residue_projection.2} parent=5 // pred_fallthru
      _
    %p127 = scmp.lt.s32.totalorder %s10, 2
    // Predicated region
    $region17: #{residue_projection.2} parent=5 // pred_check
      %p128 = pneg %p127
    $region18: #{residue_projection.2} parent=5 // pred_check_branch
      %130 = sbr.rel (%p128) target = $region20
    $region19: #{residue_projection.2} parent=5 // pred_region
      // Predicated region
      $region21: #{residue_projection.2} parent=19 // pred_check
        %p131 = pneg %p30
      $region22: #{residue_projection.2} parent=19 // pred_check_branch
        %133 = sbr.rel (%p131) target = $region24
      $region23: #{residue_projection.2} parent=19 // pred_region
        %p134 = scmp.lt.s32.totalorder %s10, 1
        %s135 = scalar_select %p134, %s10, 1
        %s136 = smul.addr %s135, 8
        %s137 = scalar_lea.vmem %s0, %s136
      $region24: #{residue_projection.2} parent=19 // pred_fallthru
        _
    $region20: #{residue_projection.2} parent=5 // pred_fallthru
      _
    %p138 = scmp.le.s32.totalorder 1, %s10
    %p139 = scmp.lt.s32.totalorder %s10, 3
    %p140 = pnand %p138, %p139
    %p141 = pneg %p140
    // Predicated region
    $region25: #{residue_projection.2} parent=5 // pred_check
      _
    $region26: #{residue_projection.2} parent=5 // pred_check_branch
      %143 = sbr.rel (%p140) target = $region28
    $region27: #{residue_projection.2} parent=5 // pred_region
      %s144 = ssub.s32 %s10, 1
      %p145 = scmp.lt.s32.totalorder %s15, 1
      %s146 = scalar_select %p145, %s15, 1
      %s147 = smul.addr %s146, 8
      %s148 = scalar_lea.vmem %s0, %s147
      %p149 = pneg %p36
      %p150 = pneg %p33
      %p151 = pneg %p57
      %p152 = pneg %p54
      %p153 = pneg %p83
      %p154 = pneg %p80
      %p155 = scmp.lt.s32.totalorder %s15, 1
      %s156 = scalar_select %p155, %s15, 1
      %s157 = smul.addr %s156, 8
      %s158 = scalar_lea.vmem %s2, %s157
      %p159 = pneg %p109
      %p160 = pneg %p106
      %p161 = scmp.lt.s32.totalorder %s15, 1
      %s162 = scalar_select %p161, %s15, 1
      %s163 = smul.addr %s162, 8
      %s164 = scalar_lea.vmem %s3, %s163
      %p165 = scmp.lt.s32.totalorder %s15, 1
      %s166 = scalar_select %p165, %s15, 1
      %s167 = smul.addr %s166, 8
      %s168 = scalar_lea.vmem %s0, %s167
      %p169 = scmp.lt.s32.totalorder %s15, 1
      %s170 = scalar_select %p169, %s15, 1
      %s171 = smul.addr %s170, 8
      %s172 = scalar_lea.vmem %s2, %s171
      %p173 = scmp.lt.s32.totalorder %s15, 1
      %s174 = scalar_select %p173, %s15, 1
      %s175 = smul.addr %s174, 8
      %s176 = scalar_lea.vmem %s3, %s175
      %v177 = vld [vmem:[%s168] sm:$0xff]
      %v178 = vld [vmem:[%s1] sm:$0xff]
      %v179 = vld [vmem:[%s1 + $0x8] sm:$0xf]
      %vm180 = vcmask 97280
      %v182 = vsel %vm180, %v177, 0
      %vm184 = vcmask 1043456
      %v186 = vsel %vm184, %v179, 0
      %188 = vmatprep.subr.mxu0 0.0
      %189 = vmatpush1.msra.mxu0 0.0
      %190 = vmatprep.subr.mxu0 0.0
      %191 = vmatpush1.msra.mxu0 0.0
      %192 = vmatprep.subr.mxu0 0.0
      %193 = vmatpush1.msra.mxu0 0.0
      %194 = vmatprep.subr.mxu0 0.0
      %195 = vmatpush1.msra.mxu0 0.0
      %196 = vmatprep.subr.mxu0 0.0
      %197 = vmatpush1.msra.mxu0 0.0
      %198 = vmatprep.subr.mxu0 0.0
      %199 = vmatpush1.msra.mxu0 0.0
      %200 = vmatprep.subr.mxu0 0.0
      %201 = vmatpush1.msra.mxu0 0.0
      %202 = vmatprep.subr.mxu0 0.0
      %203 = vmatpush1.msra.mxu0 0.0
      %204 = vmatprep.subr.mxu0 0.0
      %205 = vmatpush1.msra.mxu0 0.0
      %206 = vmatprep.subr.mxu0 0.0
      %207 = vmatpush1.msra.mxu0 0.0
      %208 = vmatprep.subr.mxu0 0.0
      %209 = vmatpush1.msra.mxu0 0.0
      %210 = vmatprep.subr.mxu0 0.0
      %211 = vmatpush1.msra.mxu0 0.0
      %212 = vmatprep.subr.mxu0 0.0
      %213 = vmatpush1.msra.mxu0 0.0
      %214 = vmatprep.subr.mxu0 0.0
      %215 = vmatpush1.msra.mxu0 0.0
      %216 = vmatprep.subr.mxu0 0.0
      %217 = vmatpush1.msra.mxu0 %v186
      %218 = vmatprep.subr.mxu0 0.0
      %219 = vmatpush1.msra.mxu0 %v178
      %220 = vmatprep.subr.mxu0 0.0
      %221 = vmatpush2.msra.mxu0 0.0
      %222 = vmatprep.subr.mxu0 0.0
      %223 = vmatpush2.msra.mxu0 0.0
      %224 = vmatprep.subr.mxu0 0.0
      %225 = vmatpush2.msra.mxu0 0.0
      %226 = vmatprep.subr.mxu0 0.0
      %227 = vmatpush2.msra.mxu0 0.0
      %228 = vmatprep.subr.mxu0 0.0
      %229 = vmatpush2.msra.mxu0 0.0
      %230 = vmatprep.subr.mxu0 0.0
      %231 = vmatpush2.msra.mxu0 0.0
      %232 = vmatprep.subr.mxu0 0.0
      %233 = vmatpush2.msra.mxu0 0.0
      %234 = vmatprep.subr.mxu0 0.0
      %235 = vmatpush2.msra.mxu0 0.0
      %236 = vmatprep.subr.mxu0 0.0
      %237 = vmatpush2.msra.mxu0 0.0
      %238 = vmatprep.subr.mxu0 0.0
      %239 = vmatpush2.msra.mxu0 0.0
      %240 = vmatprep.subr.mxu0 0.0
      %241 = vmatpush2.msra.mxu0 0.0
      %242 = vmatprep.subr.mxu0 0.0
      %243 = vmatpush2.msra.mxu0 0.0
      %244 = vmatprep.subr.mxu0 0.0
      %245 = vmatpush2.msra.mxu0 0.0
      %246 = vmatprep.subr.mxu0 0.0
      %247 = vmatpush2.msra.mxu0 0.0
      %248 = vmatprep.subr.mxu0 0.0
      %249 = vmatpush2.msra.mxu0 0.0
      %250 = vmatprep.subr.mxu0 0.0
      %251 = vmatpush2.msra.mxu0 0.0
      %252 = vmatprep.mubr.f32.mxu0 0.0
      %253 = vmatmul.mubr.f32.gmra.mxu0 %v182
      %v254 = vpop.f32.mrf.mxu0
      %v255 = vadd.f32 0.0, %v254
      %v256 = vpop.f32.mrf.mxu0
      %257 = vdwg.mxu0
      %258 = vst.msk [vmem:[%s172] sm:$0xff] %vm180, %v255
      %vm259 = vcmp.ne.f32.partialorder %v177, 0.0
      %v260 = vsel %vm259, 1, 0
      %v261 = vcvt.s32.f32 %v260
      %v262 = vsel %vm180, %v261, -inf
      %263 = vmax.xlane.f32.xlu0 %v262
      %v264 = vpop.xlane.xlu0 %263
      %vm265 = vcmask 7168
      %266 = vst.msk [vmem:[%s176] sm:$0xff] %vm265, %v264
      %p267 = scmp.lt.s32.totalorder %s15, 1
      %s268 = scalar_select %p267, %s15, 1
      %s269 = smul.addr %s268, 8
      %s270 = scalar_lea.vmem %s2, %s269
      %p271 = scmp.lt.s32.totalorder %s15, 1
      %s272 = scalar_select %p271, %s15, 1
      %s273 = smul.addr %s272, 8
      %s274 = scalar_lea.vmem %s3, %s273
      // Predicated region
      $region29: #{residue_projection.2} parent=27 // pred_check
        %p275 = pneg %p80
      $region30: #{residue_projection.2} parent=27 // pred_check_branch
        %277 = sbr.rel (%p275) target = $region32
      $region31: #{residue_projection.2} parent=27 // pred_region
        _
      $region32: #{residue_projection.2} parent=27 // pred_fallthru
        _
      // Predicated region
      $region33: #{residue_projection.2} parent=27 // pred_check
        %p278 = pneg %p106
      $region34: #{residue_projection.2} parent=27 // pred_check_branch
        %280 = sbr.rel (%p278) target = $region36
      $region35: #{residue_projection.2} parent=27 // pred_region
        _
      $region36: #{residue_projection.2} parent=27 // pred_fallthru
        _
    $region28: #{residue_projection.2} parent=5 // pred_fallthru
      _
    %p281 = scmp.le.s32.totalorder 2, %s10
    // Predicated region
    $region37: #{residue_projection.2} parent=5 // pred_check
      %p282 = pneg %p281
    $region38: #{residue_projection.2} parent=5 // pred_check_branch
      %284 = sbr.rel (%p282) target = $region40
    $region39: #{residue_projection.2} parent=5 // pred_region
      %s285 = ssub.s32 %s10, 2
      // Predicated region
      $region41: #{residue_projection.2} parent=39 // pred_check
        %p286 = pneg %p86
      $region42: #{residue_projection.2} parent=39 // pred_check_branch
        %288 = sbr.rel (%p286) target = $region44
      $region43: #{residue_projection.2} parent=39 // pred_region
        %p289 = scmp.lt.s32.totalorder %s16, 1
        %s290 = scalar_select %p289, %s16, 1
        %s291 = smul.addr %s290, 8
        %s292 = scalar_lea.vmem %s2, %s291
      $region44: #{residue_projection.2} parent=39 // pred_fallthru
        _
      // Predicated region
      $region45: #{residue_projection.2} parent=39 // pred_check
        %p293 = pneg %p112
      $region46: #{residue_projection.2} parent=39 // pred_check_branch
        %295 = sbr.rel (%p293) target = $region48
      $region47: #{residue_projection.2} parent=39 // pred_region
        %p296 = scmp.lt.s32.totalorder %s16, 1
        %s297 = scalar_select %p296, %s16, 1
        %s298 = smul.addr %s297, 8
        %s299 = scalar_lea.vmem %s3, %s298
      $region48: #{residue_projection.2} parent=39 // pred_fallthru
        _
    $region40: #{residue_projection.2} parent=5 // pred_fallthru
      _
  $region6: #{residue_projection.2} parent=0 // loop_footer
    %s14 = sadd.s32 1, %s10
  $region7: #{residue_projection.2} parent=0 // loop_footer_branch
    %9 = sbr.rel target = $region3
  $region8: #{residue_projection.2} parent=0 // loop_exit
    _

// kernel: custom-call.50
$region0: #{custom-call.50}
  %s0 = inlined_call_operand.hbm [shape: pred[16], index: 0, kind: output, shape index: {}]

// kernel: custom-call.55
$region0: #{custom-call.55}
  %s0 = inlined_call_operand.vmem [shape: f32[16,3,3], index: 0, kind: input, shape index: {}]
  %s1 = inlined_call_operand.vmem [shape: f32[16,3,3], index: 1, kind: output, shape index: {}]
  $region1: #{custom-call.55} parent=0
    #allocation0 [shape = 'u8[4096]{0}', space=vmem, size = 0x1000, scoped, tag = 'operand span for operand 0']
    #allocation1 [shape = 'u8[4096]{0}', space=vmem, size = 0x1000, scoped, tag = 'packed  for operand 0']
    #allocation2 [shape = 'u8[4096]{0}', space=vmem, size = 0x1000, scoped, tag = 'operand span for operand 1']
    #allocation3 [shape = 'u8[4096]{0}', space=vmem, size = 0x1000, scoped, tag = 'packed  for operand 1']
    loop: start=0, step=1, limit=18
    $region2: #{custom-call.55} parent=1 // loop_pre_header
      _
    $region3: #{custom-call.55} parent=1 // loop_header
      %s3 = sphi 0, %s7
      %p4 = scmp.ge.s32.totalorder %s3, 18
      %s10 = sphi 0, %s29
      %s11 = sphi 0, %s25
      %s12 = sphi 0, %s21
      %s13 = sphi 0, %s10
      %s14 = sphi 0, %s11
      %s15 = sphi 0, %s12
      %s16 = sphi 0, %s13
      %s17 = sphi 0, %s14
      %s18 = sphi 0, %s15
    $region4: #{custom-call.55} parent=1 // loop_header_branch
      %6 = sbr.rel (%p4) target = $region8
    $region5: #{custom-call.55} parent=1 // loop_body
      %s8 = ssub.s32 %s3, 1
      %s9 = ssub.s32 %s3, 2
      %s19 = sadd.s32 1, %s12
      %p20 = scmp.ge.s32.totalorder %s19, 1
      %s21 = scalar_select %p20, 0, %s19
      %s22 = sadd.s32 1, %s11
      %s23 = scalar_select %p20, %s22, %s11
      %p24 = scmp.ge.s32.totalorder %s23, 1
      %s25 = scalar_select %p24, 0, %s23
      %s26 = sadd.s32 1, %s10
      %s27 = scalar_select %p24, %s26, %s10
      %p28 = scmp.ge.s32.totalorder %s27, 16
      %s29 = scalar_select %p28, 0, %s27
      %p30 = scmp.le.s32.totalorder 1, %s3
      %p31 = scmp.lt.s32.totalorder %s3, 17
      %p32 = pnand %p30, %p31
      %p33 = pneg %p32
      // Predicated region
      $region9: #{custom-call.55} parent=5 // pred_check
        _
      $region10: #{custom-call.55} parent=5 // pred_check_branch
        %35 = sbr.rel (%p32) target = $region12
      $region11: #{custom-call.55} parent=5 // pred_region
        %s36 = ssub.s32 %s3, 1
      $region12: #{custom-call.55} parent=5 // pred_fallthru
        _
      %p37 = scmp.lt.s32.totalorder %s3, 16
      // Predicated region
      $region13: #{custom-call.55} parent=5 // pred_check
        %p38 = pneg %p37
      $region14: #{custom-call.55} parent=5 // pred_check_branch
        %40 = sbr.rel (%p38) target = $region16
      $region15: #{custom-call.55} parent=5 // pred_region
        %s41 = sand.u32 %s3, 1
        %s42 = sand.u32 %s3, 1
        %s43 = smul.addr %s42, 4
        %s44 = scalar_lea.vmem [#allocation1], %s43
        %s45 = sadd.s32 %s12, %s11
        %s46 = sadd.s32 %s45, %s10
        %s47 = smul.addr %s46, 4
        %s48 = scalar_lea.vmem %s0, %s47
        // Predicated region
        $region17: #{custom-call.55} parent=15 // pred_check
          _
        $region18: #{custom-call.55} parent=15 // pred_check_branch
          %50 = sbr.rel (0) target = $region20
        $region19: #{custom-call.55} parent=15 // pred_region
          // Predicated region
          $region21: #{custom-call.55} parent=19 // pred_check
            _
          $region22: #{custom-call.55} parent=19 // pred_check_branch
            %52 = sbr.rel target = $region24
          $region23: #{custom-call.55} parent=19 // pred_region
            // Predicated region
            $region36: #{custom-call.55} parent=23 // pred_check
              _
            $region37: #{custom-call.55} parent=23 // pred_check_branch
              %68 = sbr.rel (0) target = $region39
            $region38: #{custom-call.55} parent=23 // pred_region
              %s70 = ssub.s32 16, 1
              loop: start=0, step=1, limit=1
              $region40: #{custom-call.55} parent=38 // loop_pre_header
                _
              $region41: #{custom-call.55} parent=38 // loop_header
                %s72 = sphi 0, %s76
                %p73 = scmp.ge.s32.totalorder %s72, 1
                %s77 = sphi %s48, %s48
                %s78 = sphi %s44, %s44
              $region42: #{custom-call.55} parent=38 // loop_header_branch
                %75 = sbr.rel (%p73) target = $region46
              $region43: #{custom-call.55} parent=38 // loop_body
                %v79 = vld [vmem:[%s77] sm:%s70]
                %80 = vst [vmem:[%s78] sm:%s70] %v79
              $region44: #{custom-call.55} parent=38 // loop_footer
                %s76 = sadd.s32 1, %s72
              $region45: #{custom-call.55} parent=38 // loop_footer_branch
                %71 = sbr.rel target = $region41
              $region46: #{custom-call.55} parent=38 // loop_exit
                _
            $region39: #{custom-call.55} parent=23 // pred_fallthru
              _
          $region24: #{custom-call.55} parent=19 // pred_fallthru
            _
          // Predicated region
          $region25: #{custom-call.55} parent=19 // pred_check
            _
          $region26: #{custom-call.55} parent=19 // pred_check_branch
            %54 = sbr.rel (0) target = $region28
          $region27: #{custom-call.55} parent=19 // pred_region
            %s56 = ssub.s32 16, 1
            loop: start=0, step=1, limit=1
            $region29: #{custom-call.55} parent=27 // loop_pre_header
              _
            $region30: #{custom-call.55} parent=27 // loop_header
              %s58 = sphi 0, %s62
              %p59 = scmp.ge.s32.totalorder %s58, 1
              %s63 = sphi %s48, %s48
              %s64 = sphi %s44, %s44
            $region31: #{custom-call.55} parent=27 // loop_header_branch
              %61 = sbr.rel (%p59) target = $region35
            $region32: #{custom-call.55} parent=27 // loop_body
              %v65 = vld [vmem:[%s63] sm:%s56]
              %66 = vst [vmem:[%s64] sm:%s56] %v65
            $region33: #{custom-call.55} parent=27 // loop_footer
              %s62 = sadd.s32 1, %s58
            $region34: #{custom-call.55} parent=27 // loop_footer_branch
              %57 = sbr.rel target = $region30
            $region35: #{custom-call.55} parent=27 // loop_exit
              _
          $region28: #{custom-call.55} parent=19 // pred_fallthru
            _
        $region20: #{custom-call.55} parent=15 // pred_fallthru
          _
        %81 = vnop
      $region16: #{custom-call.55} parent=5 // pred_fallthru
        _
      %p82 = scmp.le.s32.totalorder 1, %s3
      %p83 = scmp.lt.s32.totalorder %s3, 17
      %p84 = pnand %p82, %p83
      %p85 = pneg %p84
      // Predicated region
      $region47: #{custom-call.55} parent=5 // pred_check
        _
      $region48: #{custom-call.55} parent=5 // pred_check_branch
        %87 = sbr.rel (%p84) target = $region50
      $region49: #{custom-call.55} parent=5 // pred_region
        %s88 = ssub.s32 %s3, 1
        %s89 = sand.u32 %s8, 1
        %s90 = sand.u32 %s8, 1
        %s91 = smul.addr %s90, 4
        %s92 = scalar_lea.vmem [#allocation1], %s91
        %s93 = sand.u32 %s8, 1
        %s94 = sand.u32 %s8, 1
        %s95 = smul.addr %s94, 4
        %s96 = scalar_lea.vmem [#allocation1], %s95
        %s97 = sand.u32 %s8, 1
        %s98 = sand.u32 %s8, 1
        %s99 = smul.addr %s98, 4
        %s100 = scalar_lea.vmem [#allocation3], %s99
        %s102 = sshll.u32 1, 4
        %s103 = ssub.s32 %s102, 1
        %v104 = vld [vmem:[%s96] sm:%s103]
        %105 = vst [vmem:[#allocation0] sm:%s103] %v104
        %106 = vst [vmem:[#allocation2] sm:$0xff] 0.0
        %vm107 = vcmask 7168
        %v108 = vld [vmem:[#allocation2] ss:$0 sm:$0xff]
        %v109 = vld [vmem:[#allocation0] ss:$0 sm:$0xff]
        %v110 = vmul.f32 %v108, %v108
        %111 = vadd.xlane.f32.xlu0 %v110
        %v112 = vpop.xlane.xlu0 %111
        %v113 = vsub.f32 %v109, %v112
        %v114 = vrsqrt.pop %v113
        %v115 = vld [vmem:[#allocation0] sm:$0xff]
        %v116 = vld [vmem:[#allocation2] sm:$0xff]
        %v117 = vmul.f32 %v116, %v108
        %118 = vadd.xlane.f32.xlu0 %v117
        %v119 = vpop.xlane.xlu0 %118
        %v120 = vsub.f32 %v115, %v119
        %v121 = vmul.f32 %v120, %v114
        %v122 = vsel %vm107, %v121, 0.0
        %v123 = vadd.f32 %v116, %v122
        %124 = vst [vmem:[#allocation2] sm:$0xff] %v123
        %vm125 = vcmask 15368
        %s126 = scalar_lea.vmem [#allocation2], 1
        %v127 = vld [vmem:[%s126] ss:$0 sm:$0xff]
        %s128 = scalar_lea.vmem [#allocation0], 1
        %v129 = vld [vmem:[%s128] ss:$0 sm:$0xff]
        %v130 = vmul.f32 %v127, %v127
        %131 = vadd.xlane.f32.xlu0 %v130
        %v132 = vpop.xlane.xlu0 %131
        %v133 = vsub.f32 %v129, %v132
        %v134 = vrsqrt.pop %v133
        %v135 = vld [vmem:[#allocation0] sm:$0xff]
        %v136 = vld [vmem:[#allocation2] sm:$0xff]
        %v137 = vmul.f32 %v136, %v127
        %138 = vadd.xlane.f32.xlu0 %v137
        %v139 = vpop.xlane.xlu0 %138
        %v140 = vsub.f32 %v135, %v139
        %v141 = vmul.f32 %v140, %v134
        %vm142 = vcmask 1047553
        %vm143 = vmand %vm125, %vm142
        %v144 = vsel %vm143, %v141, 0.0
        %v145 = vadd.f32 %v136, %v144
        %146 = vst [vmem:[#allocation2] sm:$0xff] %v145
        %vm147 = vcmask 23568
        %s148 = scalar_lea.vmem [#allocation2], 2
        %v149 = vld [vmem:[%s148] ss:$0 sm:$0xff]
        %s150 = scalar_lea.vmem [#allocation0], 2
        %v151 = vld [vmem:[%s150] ss:$0 sm:$0xff]
        %v152 = vmul.f32 %v149, %v149
        %153 = vadd.xlane.f32.xlu0 %v152
        %v154 = vpop.xlane.xlu0 %153
        %v155 = vsub.f32 %v151, %v154
        %v156 = vrsqrt.pop %v155
        %v157 = vld [vmem:[#allocation0] sm:$0xff]
        %v158 = vld [vmem:[#allocation2] sm:$0xff]
        %v159 = vmul.f32 %v158, %v149
        %160 = vadd.xlane.f32.xlu0 %v159
        %v161 = vpop.xlane.xlu0 %160
        %v162 = vsub.f32 %v157, %v161
        %v163 = vmul.f32 %v162, %v156
        %vm164 = vcmask 1047554
        %vm165 = vmand %vm147, %vm164
        %v166 = vsel %vm165, %v163, 0.0
        %v167 = vadd.f32 %v158, %v166
        %168 = vst [vmem:[#allocation2] sm:$0xff] %v167
        %s170 = sshll.u32 1, 4
        %s171 = ssub.s32 %s170, 1
        %v173 = vld [vmem:[#allocation2] sm:%s171]
        %s174 = sshll.u32 1, 4
        %s175 = ssub.s32 %s174, 1
        %176 = vst [vmem:[%s100] sm:%s175] %v173
        %s177 = sand.u32 %s8, 1
        %s178 = sand.u32 %s8, 1
        %s179 = smul.addr %s178, 4
        %s180 = scalar_lea.vmem [#allocation3], %s179
        %s181 = sadd.s32 %s15, %s14
        %s182 = sadd.s32 %s181, %s13
        %s183 = smul.addr %s182, 4
        %s184 = scalar_lea.vmem %s1, %s183
        // Predicated region
        $region51: #{custom-call.55} parent=49 // pred_check
          _
        $region52: #{custom-call.55} parent=49 // pred_check_branch
          %186 = sbr.rel (0) target = $region54
        $region53: #{custom-call.55} parent=49 // pred_region
          // Predicated region
          $region55: #{custom-call.55} parent=53 // pred_check
            _
          $region56: #{custom-call.55} parent=53 // pred_check_branch
            %188 = sbr.rel target = $region58
          $region57: #{custom-call.55} parent=53 // pred_region
            // Predicated region
            $region70: #{custom-call.55} parent=57 // pred_check
              _
            $region71: #{custom-call.55} parent=57 // pred_check_branch
              %204 = sbr.rel (0) target = $region73
            $region72: #{custom-call.55} parent=57 // pred_region
              %s206 = ssub.s32 16, 1
              loop: start=0, step=1, limit=1
              $region74: #{custom-call.55} parent=72 // loop_pre_header
                _
              $region75: #{custom-call.55} parent=72 // loop_header
                %s208 = sphi 0, %s212
                %p209 = scmp.ge.s32.totalorder %s208, 1
                %s213 = sphi %s180, %s180
                %s214 = sphi %s184, %s184
              $region76: #{custom-call.55} parent=72 // loop_header_branch
                %211 = sbr.rel (%p209) target = $region80
              $region77: #{custom-call.55} parent=72 // loop_body
                %v215 = vld [vmem:[%s213] sm:%s206]
                %216 = vst [vmem:[%s214] sm:%s206] %v215
              $region78: #{custom-call.55} parent=72 // loop_footer
                %s212 = sadd.s32 1, %s208
              $region79: #{custom-call.55} parent=72 // loop_footer_branch
                %207 = sbr.rel target = $region75
              $region80: #{custom-call.55} parent=72 // loop_exit
                _
            $region73: #{custom-call.55} parent=57 // pred_fallthru
              _
          $region58: #{custom-call.55} parent=53 // pred_fallthru
            _
          // Predicated region
          $region59: #{custom-call.55} parent=53 // pred_check
            _
          $region60: #{custom-call.55} parent=53 // pred_check_branch
            %190 = sbr.rel (0) target = $region62
          $region61: #{custom-call.55} parent=53 // pred_region
            %s192 = ssub.s32 16, 1
            loop: start=0, step=1, limit=1
            $region63: #{custom-call.55} parent=61 // loop_pre_header
              _
            $region64: #{custom-call.55} parent=61 // loop_header
              %s194 = sphi 0, %s198
              %p195 = scmp.ge.s32.totalorder %s194, 1
              %s199 = sphi %s180, %s180
              %s200 = sphi %s184, %s184
            $region65: #{custom-call.55} parent=61 // loop_header_branch
              %197 = sbr.rel (%p195) target = $region69
            $region66: #{custom-call.55} parent=61 // loop_body
              %v201 = vld [vmem:[%s199] sm:%s192]
              %202 = vst [vmem:[%s200] sm:%s192] %v201
            $region67: #{custom-call.55} parent=61 // loop_footer
              %s198 = sadd.s32 1, %s194
            $region68: #{custom-call.55} parent=61 // loop_footer_branch
              %193 = sbr.rel target = $region64
            $region69: #{custom-call.55} parent=61 // loop_exit
              _
          $region62: #{custom-call.55} parent=53 // pred_fallthru
            _
        $region54: #{custom-call.55} parent=49 // pred_fallthru
          _
        %217 = vnop
      $region50: #{custom-call.55} parent=5 // pred_fallthru
        _
      %p218 = scmp.le.s32.totalorder 2, %s3
      // Predicated region
      $region81: #{custom-call.55} parent=5 // pred_check
        %p219 = pneg %p218
      $region82: #{custom-call.55} parent=5 // pred_check_branch
        %221 = sbr.rel (%p219) target = $region84
      $region83: #{custom-call.55} parent=5 // pred_region
        %s222 = ssub.s32 %s3, 2
        %s223 = sand.u32 %s9, 1
        %s224 = sand.u32 %s9, 1
        %s225 = smul.addr %s224, 4
        %s226 = scalar_lea.vmem [#allocation3], %s225
      $region84: #{custom-call.55} parent=5 // pred_fallthru
        _
    $region6: #{custom-call.55} parent=1 // loop_footer
      %s7 = sadd.s32 1, %s3
    $region7: #{custom-call.55} parent=1 // loop_footer_branch
      %2 = sbr.rel target = $region3
    $region8: #{custom-call.55} parent=1 // loop_exit
      _

// kernel: custom-call.56
$region0: #{custom-call.56}
  %s0 = inlined_call_operand.vmem [shape: f32[16,1,3,3], index: 0, kind: input, shape index: {}]
  %s1 = inlined_call_operand.vmem [shape: f32[16,1,3,3], index: 1, kind: output, shape index: {}]
  $region1: #{custom-call.56} parent=0
    #allocation0 [shape = 'u8[4096]{0}', space=vmem, size = 0x1000, scoped, tag = 'operand span for operand 0']
    #allocation1 [shape = 'u8[4096]{0}', space=vmem, size = 0x1000, scoped, tag = 'packed  for operand 0']
    #allocation2 [shape = 'u8[4096]{0}', space=vmem, size = 0x1000, scoped, tag = 'operand span for operand 1']
    #allocation3 [shape = 'u8[4096]{0}', space=vmem, size = 0x1000, scoped, tag = 'packed  for operand 1']
    loop: start=0, step=1, limit=18
    $region2: #{custom-call.56} parent=1 // loop_pre_header
      _
    $region3: #{custom-call.56} parent=1 // loop_header
      %s3 = sphi 0, %s7
      %p4 = scmp.ge.s32.totalorder %s3, 18
      %s10 = sphi 0, %s36
      %s11 = sphi 0, %s32
      %s12 = sphi 0, %s28
      %s13 = sphi 0, %s24
      %s14 = sphi 0, %s10
      %s15 = sphi 0, %s11
      %s16 = sphi 0, %s12
      %s17 = sphi 0, %s13
      %s18 = sphi 0, %s14
      %s19 = sphi 0, %s15
      %s20 = sphi 0, %s16
      %s21 = sphi 0, %s17
    $region4: #{custom-call.56} parent=1 // loop_header_branch
      %6 = sbr.rel (%p4) target = $region8
    $region5: #{custom-call.56} parent=1 // loop_body
      %s8 = ssub.s32 %s3, 1
      %s9 = ssub.s32 %s3, 2
      %s22 = sadd.s32 1, %s13
      %p23 = scmp.ge.s32.totalorder %s22, 1
      %s24 = scalar_select %p23, 0, %s22
      %s25 = sadd.s32 1, %s12
      %s26 = scalar_select %p23, %s25, %s12
      %p27 = scmp.ge.s32.totalorder %s26, 1
      %s28 = scalar_select %p27, 0, %s26
      %s29 = sadd.s32 1, %s11
      %s30 = scalar_select %p27, %s29, %s11
      %p31 = scmp.ge.s32.totalorder %s30, 1
      %s32 = scalar_select %p31, 0, %s30
      %s33 = sadd.s32 1, %s10
      %s34 = scalar_select %p31, %s33, %s10
      %p35 = scmp.ge.s32.totalorder %s34, 16
      %s36 = scalar_select %p35, 0, %s34
      %p37 = scmp.le.s32.totalorder 1, %s3
      %p38 = scmp.lt.s32.totalorder %s3, 17
      %p39 = pnand %p37, %p38
      %p40 = pneg %p39
      // Predicated region
      $region9: #{custom-call.56} parent=5 // pred_check
        _
      $region10: #{custom-call.56} parent=5 // pred_check_branch
        %42 = sbr.rel (%p39) target = $region12
      $region11: #{custom-call.56} parent=5 // pred_region
        %s43 = ssub.s32 %s3, 1
      $region12: #{custom-call.56} parent=5 // pred_fallthru
        _
      %p44 = scmp.lt.s32.totalorder %s3, 16
      // Predicated region
      $region13: #{custom-call.56} parent=5 // pred_check
        %p45 = pneg %p44
      $region14: #{custom-call.56} parent=5 // pred_check_branch
        %47 = sbr.rel (%p45) target = $region16
      $region15: #{custom-call.56} parent=5 // pred_region
        %s48 = sand.u32 %s3, 1
        %s49 = sand.u32 %s3, 1
        %s50 = smul.addr %s49, 4
        %s51 = scalar_lea.vmem [#allocation1], %s50
        %s52 = sadd.s32 %s13, %s12
        %s53 = sadd.s32 %s52, %s11
        %s54 = sadd.s32 %s53, %s10
        %s55 = smul.addr %s54, 4
        %s56 = scalar_lea.vmem %s0, %s55
        // Predicated region
        $region17: #{custom-call.56} parent=15 // pred_check
          _
        $region18: #{custom-call.56} parent=15 // pred_check_branch
          %58 = sbr.rel (0) target = $region20
        $region19: #{custom-call.56} parent=15 // pred_region
          // Predicated region
          $region21: #{custom-call.56} parent=19 // pred_check
            _
          $region22: #{custom-call.56} parent=19 // pred_check_branch
            %60 = sbr.rel target = $region24
          $region23: #{custom-call.56} parent=19 // pred_region
            // Predicated region
            $region36: #{custom-call.56} parent=23 // pred_check
              _
            $region37: #{custom-call.56} parent=23 // pred_check_branch
              %76 = sbr.rel (0) target = $region39
            $region38: #{custom-call.56} parent=23 // pred_region
              %s78 = ssub.s32 16, 1
              loop: start=0, step=1, limit=1
              $region40: #{custom-call.56} parent=38 // loop_pre_header
                _
              $region41: #{custom-call.56} parent=38 // loop_header
                %s80 = sphi 0, %s84
                %p81 = scmp.ge.s32.totalorder %s80, 1
                %s85 = sphi %s56, %s56
                %s86 = sphi %s51, %s51
              $region42: #{custom-call.56} parent=38 // loop_header_branch
                %83 = sbr.rel (%p81) target = $region46
              $region43: #{custom-call.56} parent=38 // loop_body
                %v87 = vld [vmem:[%s85] sm:%s78]
                %88 = vst [vmem:[%s86] sm:%s78] %v87
              $region44: #{custom-call.56} parent=38 // loop_footer
                %s84 = sadd.s32 1, %s80
              $region45: #{custom-call.56} parent=38 // loop_footer_branch
                %79 = sbr.rel target = $region41
              $region46: #{custom-call.56} parent=38 // loop_exit
                _
            $region39: #{custom-call.56} parent=23 // pred_fallthru
              _
          $region24: #{custom-call.56} parent=19 // pred_fallthru
            _
          // Predicated region
          $region25: #{custom-call.56} parent=19 // pred_check
            _
          $region26: #{custom-call.56} parent=19 // pred_check_branch
            %62 = sbr.rel (0) target = $region28
          $region27: #{custom-call.56} parent=19 // pred_region
            %s64 = ssub.s32 16, 1
            loop: start=0, step=1, limit=1
            $region29: #{custom-call.56} parent=27 // loop_pre_header
              _
            $region30: #{custom-call.56} parent=27 // loop_header
              %s66 = sphi 0, %s70
              %p67 = scmp.ge.s32.totalorder %s66, 1
              %s71 = sphi %s56, %s56
              %s72 = sphi %s51, %s51
            $region31: #{custom-call.56} parent=27 // loop_header_branch
              %69 = sbr.rel (%p67) target = $region35
            $region32: #{custom-call.56} parent=27 // loop_body
              %v73 = vld [vmem:[%s71] sm:%s64]
              %74 = vst [vmem:[%s72] sm:%s64] %v73
            $region33: #{custom-call.56} parent=27 // loop_footer
              %s70 = sadd.s32 1, %s66
            $region34: #{custom-call.56} parent=27 // loop_footer_branch
              %65 = sbr.rel target = $region30
            $region35: #{custom-call.56} parent=27 // loop_exit
              _
          $region28: #{custom-call.56} parent=19 // pred_fallthru
            _
        $region20: #{custom-call.56} parent=15 // pred_fallthru
          _
        %89 = vnop
      $region16: #{custom-call.56} parent=5 // pred_fallthru
        _
      %p90 = scmp.le.s32.totalorder 1, %s3
      %p91 = scmp.lt.s32.totalorder %s3, 17
      %p92 = pnand %p90, %p91
      %p93 = pneg %p92
      // Predicated region
      $region47: #{custom-call.56} parent=5 // pred_check
        _
      $region48: #{custom-call.56} parent=5 // pred_check_branch
        %95 = sbr.rel (%p92) target = $region50
      $region49: #{custom-call.56} parent=5 // pred_region
        #allocation4 [shape = 'f32[3,3]{1,0}', space=vmem, size = 0x1000, scoped, tag = 'rescaled input a']
        %s96 = ssub.s32 %s3, 1
        %s97 = sand.u32 %s8, 1
        %s98 = sand.u32 %s8, 1
        %s99 = smul.addr %s98, 4
        %s100 = scalar_lea.vmem [#allocation1], %s99
        %s101 = sand.u32 %s8, 1
        %s102 = sand.u32 %s8, 1
        %s103 = smul.addr %s102, 4
        %s104 = scalar_lea.vmem [#allocation1], %s103
        %s105 = sand.u32 %s8, 1
        %s106 = sand.u32 %s8, 1
        %s107 = smul.addr %s106, 4
        %s108 = scalar_lea.vmem [#allocation3], %s107
        %s110 = sshll.u32 1, 4
        %s111 = ssub.s32 %s110, 1
        %v112 = vld [vmem:[%s104] sm:%s111]
        %113 = vst [vmem:[#allocation0] sm:%s111] %v112
        %v114 = vlaneseq
        %v115 = vand.u32 %v114, 127
        %vm116 = vcmp.lt.s32.totalorder %v115, 3
        %v117 = vlaneseq
        %v118 = vshrl.u32 %v117, 7
        %vm120 = vcmp.eq.s32.totalorder %v118, %v115
        %v121 = vld [vmem:[#allocation0] sm:$0xff]
        %v122 = vsel %vm120, %v121, 0.0
        %123 = vadd.xlane.f32.xlu0 %v122
        %v124 = vpop.xlane.xlu0 %123
        %vm125 = vcmp.ge.s32.totalorder %v118, %v115
        %vm126 = vmand %vm125, %vm116
        %v127 = vsel %vm126, %v121, 0.0
        %v128 = vrcp.pop %v124
        %v129 = vmul.f32 %v127, %v128
        %130 = vst [vmem:[#allocation4] sm:$0xff] %v129
        %v131 = vlaneseq
        %v132 = vand.u32 %v131, 127
        %v133 = vlaneseq
        %v134 = vshrl.u32 %v133, 7
        %vm136 = vcmp.eq.s32.totalorder %v132, %v134
        %v137 = vlaneseq
        %v138 = vand.u32 %v137, 127
        %vm139 = vcmp.eq.s32.totalorder %v138, 0
        %v140 = vsel %vm139, 1.0, -1.0
        %v141 = vsel %vm136, %v140, 0.0
        %s142 = scalar_lea.vmem [#allocation4], 1
        %v143 = vld [vmem:[%s142] ss:$0 sm:$0xff]
        %v144 = vxor.u32 %v143, 2147483648
        %v145 = vlaneseq
        %v146 = vand.u32 %v145, 127
        %vm147 = vcmp.eq.s32.totalorder %v146, 1
        %v148 = vmul.f32 %v144, %v141
        %149 = vadd.xlane.f32.xlu0 %v148
        %v150 = vpop.xlane.xlu0 %149
        %v151 = vsel %vm147, %v150, %v141
        %s152 = scalar_lea.vmem [#allocation4], 2
        %v153 = vld [vmem:[%s152] ss:$0 sm:$0xff]
        %v154 = vxor.u32 %v153, 2147483648
        %v155 = vlaneseq
        %v156 = vand.u32 %v155, 127
        %vm157 = vcmp.eq.s32.totalorder %v156, 2
        %v158 = vmul.f32 %v154, %v151
        %159 = vadd.xlane.f32.xlu0 %v158
        %v160 = vpop.xlane.xlu0 %159
        %v161 = vsel %vm157, %v160, %v151
        %v162 = vrcp.pop %v124
        %v163 = vmul.f32 %v161, %v162
        %vm164 = vweird.f32 %v124
        %v165 = vsel %vm164, %v161, %v163
        %166 = vst [vmem:[#allocation2] sm:$0xff] %v165
        %s168 = sshll.u32 1, 4
        %s169 = ssub.s32 %s168, 1
        %v171 = vld [vmem:[#allocation2] sm:%s169]
        %s172 = sshll.u32 1, 4
        %s173 = ssub.s32 %s172, 1
        %174 = vst [vmem:[%s108] sm:%s173] %v171
        %s175 = sand.u32 %s8, 1
        %s176 = sand.u32 %s8, 1
        %s177 = smul.addr %s176, 4
        %s178 = scalar_lea.vmem [#allocation3], %s177
        %s179 = sadd.s32 %s17, %s16
        %s180 = sadd.s32 %s179, %s15
        %s181 = sadd.s32 %s180, %s14
        %s182 = smul.addr %s181, 4
        %s183 = scalar_lea.vmem %s1, %s182
        // Predicated region
        $region51: #{custom-call.56} parent=49 // pred_check
          _
        $region52: #{custom-call.56} parent=49 // pred_check_branch
          %185 = sbr.rel (0) target = $region54
        $region53: #{custom-call.56} parent=49 // pred_region
          // Predicated region
          $region55: #{custom-call.56} parent=53 // pred_check
            _
          $region56: #{custom-call.56} parent=53 // pred_check_branch
            %187 = sbr.rel target = $region58
          $region57: #{custom-call.56} parent=53 // pred_region
            // Predicated region
            $region70: #{custom-call.56} parent=57 // pred_check
              _
            $region71: #{custom-call.56} parent=57 // pred_check_branch
              %203 = sbr.rel (0) target = $region73
            $region72: #{custom-call.56} parent=57 // pred_region
              %s205 = ssub.s32 16, 1
              loop: start=0, step=1, limit=1
              $region74: #{custom-call.56} parent=72 // loop_pre_header
                _
              $region75: #{custom-call.56} parent=72 // loop_header
                %s207 = sphi 0, %s211
                %p208 = scmp.ge.s32.totalorder %s207, 1
                %s212 = sphi %s178, %s178
                %s213 = sphi %s183, %s183
              $region76: #{custom-call.56} parent=72 // loop_header_branch
                %210 = sbr.rel (%p208) target = $region80
              $region77: #{custom-call.56} parent=72 // loop_body
                %v214 = vld [vmem:[%s212] sm:%s205]
                %215 = vst [vmem:[%s213] sm:%s205] %v214
              $region78: #{custom-call.56} parent=72 // loop_footer
                %s211 = sadd.s32 1, %s207
              $region79: #{custom-call.56} parent=72 // loop_footer_branch
                %206 = sbr.rel target = $region75
              $region80: #{custom-call.56} parent=72 // loop_exit
                _
            $region73: #{custom-call.56} parent=57 // pred_fallthru
              _
          $region58: #{custom-call.56} parent=53 // pred_fallthru
            _
          // Predicated region
          $region59: #{custom-call.56} parent=53 // pred_check
            _
          $region60: #{custom-call.56} parent=53 // pred_check_branch
            %189 = sbr.rel (0) target = $region62
          $region61: #{custom-call.56} parent=53 // pred_region
            %s191 = ssub.s32 16, 1
            loop: start=0, step=1, limit=1
            $region63: #{custom-call.56} parent=61 // loop_pre_header
              _
            $region64: #{custom-call.56} parent=61 // loop_header
              %s193 = sphi 0, %s197
              %p194 = scmp.ge.s32.totalorder %s193, 1
              %s198 = sphi %s178, %s178
              %s199 = sphi %s183, %s183
            $region65: #{custom-call.56} parent=61 // loop_header_branch
              %196 = sbr.rel (%p194) target = $region69
            $region66: #{custom-call.56} parent=61 // loop_body
              %v200 = vld [vmem:[%s198] sm:%s191]
              %201 = vst [vmem:[%s199] sm:%s191] %v200
            $region67: #{custom-call.56} parent=61 // loop_footer
              %s197 = sadd.s32 1, %s193
            $region68: #{custom-call.56} parent=61 // loop_footer_branch
              %192 = sbr.rel target = $region64
            $region69: #{custom-call.56} parent=61 // loop_exit
              _
          $region62: #{custom-call.56} parent=53 // pred_fallthru
            _
        $region54: #{custom-call.56} parent=49 // pred_fallthru
          _
        %216 = vnop
      $region50: #{custom-call.56} parent=5 // pred_fallthru
        _
      %p217 = scmp.le.s32.totalorder 2, %s3
      // Predicated region
      $region81: #{custom-call.56} parent=5 // pred_check
        %p218 = pneg %p217
      $region82: #{custom-call.56} parent=5 // pred_check_branch
        %220 = sbr.rel (%p218) target = $region84
      $region83: #{custom-call.56} parent=5 // pred_region
        %s221 = ssub.s32 %s3, 2
        %s222 = sand.u32 %s9, 1
        %s223 = sand.u32 %s9, 1
        %s224 = smul.addr %s223, 4
        %s225 = scalar_lea.vmem [#allocation3], %s224
      $region84: #{custom-call.56} parent=5 // pred_fallthru
        _
    $region6: #{custom-call.56} parent=1 // loop_footer
      %s7 = sadd.s32 1, %s3
    $region7: #{custom-call.56} parent=1 // loop_footer_branch
      %2 = sbr.rel target = $region3
    $region8: #{custom-call.56} parent=1 // loop_exit
      _

// kernel: custom-call.22
$region0: #{custom-call.22}
  %s0 = inlined_call_operand.vmem [shape: f32[16,2,2], index: 0, kind: input, shape index: {}]
  %s1 = inlined_call_operand.vmem [shape: f32[16,2,2], index: 1, kind: input, shape index: {}]
  %s2 = inlined_call_operand.vmem [shape: f32[16,2,2], index: 2, kind: input, shape index: {}]
  %s3 = inlined_call_operand.vmem [shape: f32[16,2,2], index: 3, kind: input, shape index: {}]
  %s4 = inlined_call_operand.vmem [shape: f32[16,2], index: 4, kind: output, shape index: {0}]
  %s5 = inlined_call_operand.vmem [shape: f32[16,2], index: 5, kind: output, shape index: {1}]
  %s6 = inlined_call_operand.vmem [shape: f32[16,2,2], index: 6, kind: output, shape index: {2}]
  %s7 = inlined_call_operand.vmem [shape: f32[16,2,2], index: 7, kind: output, shape index: {3}]
  %s8 = inlined_call_operand.vmem [shape: f32[16,2,2], index: 8, kind: output, shape index: {4}]
  %s9 = inlined_call_operand.vmem [shape: f32[16,2,2], index: 9, kind: output, shape index: {5}]
  %10 = xla_tuple %s4, %s5, %s6, %s7, %s8, %s9
  $region1: #{custom-call.22} parent=0
    #allocation0 [shape = 'u8[4096]{0}', space=vmem, size = 0x1000, scoped, tag = 'operand span for operand 0']
    #allocation1 [shape = 'u8[2048]{0}', space=vmem, size = 0x800, scoped, tag = 'packed  for operand 0']
    #allocation2 [shape = 'u8[4096]{0}', space=vmem, size = 0x1000, scoped, tag = 'operand span for operand 1']
    #allocation3 [shape = 'u8[2048]{0}', space=vmem, size = 0x800, scoped, tag = 'packed  for operand 1']
    #allocation4 [shape = 'u8[4096]{0}', space=vmem, size = 0x1000, scoped, tag = 'operand span for operand 2']
    #allocation5 [shape = 'u8[2048]{0}', space=vmem, size = 0x800, scoped, tag = 'packed  for operand 2']
    #allocation6 [shape = 'u8[4096]{0}', space=vmem, size = 0x1000, scoped, tag = 'operand span for operand 3']
    #allocation7 [shape = 'u8[2048]{0}', space=vmem, size = 0x800, scoped, tag = 'packed  for operand 3']
    #allocation8 [shape = 'u8[8192]{0}', space=vmem, size = 0x2000, scoped, tag = 'operand span for operand 4']
    #allocation9 [shape = 'u8[8192]{0}', space=vmem, size = 0x2000, scoped, tag = 'operand span for operand 5']
    #allocation10 [shape = 'u8[4096]{0}', space=vmem, size = 0x1000, scoped, tag = 'operand span for operand 6']
    #allocation11 [shape = 'u8[2048]{0}', space=vmem, size = 0x800, scoped, tag = 'packed  for operand 6']
    #allocation12 [shape = 'u8[4096]{0}', space=vmem, size = 0x1000, scoped, tag = 'operand span for operand 7']
    #allocation13 [shape = 'u8[2048]{0}', space=vmem, size = 0x800, scoped, tag = 'packed  for operand 7']
    #allocation14 [shape = 'u8[4096]{0}', space=vmem, size = 0x1000, scoped, tag = 'operand span for operand 8']
    #allocation15 [shape = 'u8[2048]{0}', space=vmem, size = 0x800, scoped, tag = 'packed  for operand 8']
    #allocation16 [shape = 'u8[4096]{0}', space=vmem, size = 0x1000, scoped, tag = 'operand span for operand 9']
    #allocation17 [shape = 'u8[2048]{0}', space=vmem, size = 0x800, scoped, tag = 'packed  for operand 9']
    loop: start=0, step=1, limit=18
    $region2: #{custom-call.22} parent=1 // loop_pre_header
      _
    $region3: #{custom-call.22} parent=1 // loop_header
      %s12 = sphi 0, %s16
      %p13 = scmp.ge.s32.totalorder %s12, 18
      %s24 = sphi 0, %s26
      %s27 = sphi 0, %s24
      %s28 = sphi 0, %s27
      %s44 = sphi 0, %s28
      %s52 = sphi 0, %s54
      %s55 = sphi 0, %s52
      %s56 = sphi 0, %s55
      %s72 = sphi 0, %s56
    $region4: #{custom-call.22} parent=1 // loop_header_branch
      %15 = sbr.rel (%p13) target = $region8
    $region5: #{custom-call.22} parent=1 // loop_body
      %s17 = ssub.s32 %s12, 1
      %s18 = ssub.s32 %s12, 2
      %s19 = sadd.s32 %s12, 1
      %s20 = sshrl.u32 %s12, 3
      %s21 = sshrl.u32 %s19, 3
      %s22 = ssub.s32 %s20, %s21
      %p23 = scmp.eq.s32.totalorder %s22, 0
      %s25 = sadd.s32 %s24, 1
      %s26 = scalar_select %p23, %s24, %s25
      %p29 = pneg %p23
      %p30 = scmp.eq.s32.totalorder %s12, 15
      %p31 = por %p29, %p30
      %p32 = scmp.ne.s32.totalorder %s24, %s27
      %p33 = scmp.eq.s32.totalorder %s12, 0
      %p34 = por %p32, %p33
      %p35 = scmp.ne.s32.totalorder %s24, %s27
      %p36 = scmp.eq.s32.totalorder %s17, 15
      %p37 = por %p35, %p36
      %p38 = scmp.ne.s32.totalorder %s27, %s28
      %p39 = scmp.eq.s32.totalorder %s17, 0
      %p40 = por %p38, %p39
      %p41 = scmp.ne.s32.totalorder %s27, %s28
      %p42 = scmp.eq.s32.totalorder %s18, 15
      %p43 = por %p41, %p42
      %p45 = scmp.ne.s32.totalorder %s28, %s44
      %p46 = scmp.eq.s32.totalorder %s18, 0
      %p47 = por %p45, %p46
      %s48 = sshrl.u32 %s12, 3
      %s49 = sshrl.u32 %s19, 3
      %s50 = ssub.s32 %s48, %s49
      %p51 = scmp.eq.s32.totalorder %s50, 0
      %s53 = sadd.s32 %s52, 1
      %s54 = scalar_select %p51, %s52, %s53
      %p57 = pneg %p51
      %p58 = scmp.eq.s32.totalorder %s12, 15
      %p59 = por %p57, %p58
      %p60 = scmp.ne.s32.totalorder %s52, %s55
      %p61 = scmp.eq.s32.totalorder %s12, 0
      %p62 = por %p60, %p61
      %p63 = scmp.ne.s32.totalorder %s52, %s55
      %p64 = scmp.eq.s32.totalorder %s17, 15
      %p65 = por %p63, %p64
      %p66 = scmp.ne.s32.totalorder %s55, %s56
      %p67 = scmp.eq.s32.totalorder %s17, 0
      %p68 = por %p66, %p67
      %p69 = scmp.ne.s32.totalorder %s55, %s56
      %p70 = scmp.eq.s32.totalorder %s18, 15
      %p71 = por %p69, %p70
      %p73 = scmp.ne.s32.totalorder %s56, %s72
      %p74 = scmp.eq.s32.totalorder %s18, 0
      %p75 = por %p73, %p74
      %p76 = scmp.le.s32.totalorder 1, %s12
      %p77 = scmp.lt.s32.totalorder %s12, 17
      %p78 = pnand %p76, %p77
      %p79 = pneg %p78
      // Predicated region
      $region9: #{custom-call.22} parent=5 // pred_check
        _
      $region10: #{custom-call.22} parent=5 // pred_check_branch
        %81 = sbr.rel (%p78) target = $region12
      $region11: #{custom-call.22} parent=5 // pred_region
        %s82 = ssub.s32 %s12, 1
      $region12: #{custom-call.22} parent=5 // pred_fallthru
        _
      %p83 = scmp.lt.s32.totalorder %s12, 16
      // Predicated region
      $region13: #{custom-call.22} parent=5 // pred_check
        %p84 = pneg %p83
      $region14: #{custom-call.22} parent=5 // pred_check_branch
        %86 = sbr.rel (%p84) target = $region16
      $region15: #{custom-call.22} parent=5 // pred_region
        %s87 = sand.u32 %s12, 1
        %s88 = sand.u32 %s12, 1
        %s89 = smul.addr %s88, 2
        %s90 = scalar_lea.vmem [#allocation1], %s89
        %s91 = smul.addr %s12, 2
        %s92 = scalar_lea.vmem %s0, %s91
        // Predicated region
        $region17: #{custom-call.22} parent=15 // pred_check
          _
        $region18: #{custom-call.22} parent=15 // pred_check_branch
          %94 = sbr.rel (0) target = $region20
        $region19: #{custom-call.22} parent=15 // pred_region
          // Predicated region
          $region21: #{custom-call.22} parent=19 // pred_check
            _
          $region22: #{custom-call.22} parent=19 // pred_check_branch
            %96 = sbr.rel target = $region24
          $region23: #{custom-call.22} parent=19 // pred_region
            // Predicated region
            $region36: #{custom-call.22} parent=23 // pred_check
              _
            $region37: #{custom-call.22} parent=23 // pred_check_branch
              %112 = sbr.rel (0) target = $region39
            $region38: #{custom-call.22} parent=23 // pred_region
              %s114 = ssub.s32 4, 1
              loop: start=0, step=1, limit=1
              $region40: #{custom-call.22} parent=38 // loop_pre_header
                _
              $region41: #{custom-call.22} parent=38 // loop_header
                %s116 = sphi 0, %s120
                %p117 = scmp.ge.s32.totalorder %s116, 1
                %s121 = sphi %s92, %s92
                %s122 = sphi %s90, %s90
              $region42: #{custom-call.22} parent=38 // loop_header_branch
                %119 = sbr.rel (%p117) target = $region46
              $region43: #{custom-call.22} parent=38 // loop_body
                %v123 = vld [vmem:[%s121] sm:%s114]
                %124 = vst [vmem:[%s122] sm:%s114] %v123
              $region44: #{custom-call.22} parent=38 // loop_footer
                %s120 = sadd.s32 1, %s116
              $region45: #{custom-call.22} parent=38 // loop_footer_branch
                %115 = sbr.rel target = $region41
              $region46: #{custom-call.22} parent=38 // loop_exit
                _
            $region39: #{custom-call.22} parent=23 // pred_fallthru
              _
          $region24: #{custom-call.22} parent=19 // pred_fallthru
            _
          // Predicated region
          $region25: #{custom-call.22} parent=19 // pred_check
            _
          $region26: #{custom-call.22} parent=19 // pred_check_branch
            %98 = sbr.rel (0) target = $region28
          $region27: #{custom-call.22} parent=19 // pred_region
            %s100 = ssub.s32 4, 1
            loop: start=0, step=1, limit=1
            $region29: #{custom-call.22} parent=27 // loop_pre_header
              _
            $region30: #{custom-call.22} parent=27 // loop_header
              %s102 = sphi 0, %s106
              %p103 = scmp.ge.s32.totalorder %s102, 1
              %s107 = sphi %s92, %s92
              %s108 = sphi %s90, %s90
            $region31: #{custom-call.22} parent=27 // loop_header_branch
              %105 = sbr.rel (%p103) target = $region35
            $region32: #{custom-call.22} parent=27 // loop_body
              %v109 = vld [vmem:[%s107] sm:%s100]
              %110 = vst [vmem:[%s108] sm:%s100] %v109
            $region33: #{custom-call.22} parent=27 // loop_footer
              %s106 = sadd.s32 1, %s102
            $region34: #{custom-call.22} parent=27 // loop_footer_branch
              %101 = sbr.rel target = $region30
            $region35: #{custom-call.22} parent=27 // loop_exit
              _
          $region28: #{custom-call.22} parent=19 // pred_fallthru
            _
        $region20: #{custom-call.22} parent=15 // pred_fallthru
          _
        %125 = vnop
        %s126 = sand.u32 %s12, 1
        %s127 = sand.u32 %s12, 1
        %s128 = smul.addr %s127, 2
        %s129 = scalar_lea.vmem [#allocation3], %s128
        %s130 = smul.addr %s12, 2
        %s131 = scalar_lea.vmem %s1, %s130
        // Predicated region
        $region47: #{custom-call.22} parent=15 // pred_check
          _
        $region48: #{custom-call.22} parent=15 // pred_check_branch
          %133 = sbr.rel (0) target = $region50
        $region49: #{custom-call.22} parent=15 // pred_region
          // Predicated region
          $region51: #{custom-call.22} parent=49 // pred_check
            _
          $region52: #{custom-call.22} parent=49 // pred_check_branch
            %135 = sbr.rel target = $region54
          $region53: #{custom-call.22} parent=49 // pred_region
            // Predicated region
            $region66: #{custom-call.22} parent=53 // pred_check
              _
            $region67: #{custom-call.22} parent=53 // pred_check_branch
              %151 = sbr.rel (0) target = $region69
            $region68: #{custom-call.22} parent=53 // pred_region
              %s153 = ssub.s32 4, 1
              loop: start=0, step=1, limit=1
              $region70: #{custom-call.22} parent=68 // loop_pre_header
                _
              $region71: #{custom-call.22} parent=68 // loop_header
                %s155 = sphi 0, %s159
                %p156 = scmp.ge.s32.totalorder %s155, 1
                %s160 = sphi %s131, %s131
                %s161 = sphi %s129, %s129
              $region72: #{custom-call.22} parent=68 // loop_header_branch
                %158 = sbr.rel (%p156) target = $region76
              $region73: #{custom-call.22} parent=68 // loop_body
                %v162 = vld [vmem:[%s160] sm:%s153]
                %163 = vst [vmem:[%s161] sm:%s153] %v162
              $region74: #{custom-call.22} parent=68 // loop_footer
                %s159 = sadd.s32 1, %s155
              $region75: #{custom-call.22} parent=68 // loop_footer_branch
                %154 = sbr.rel target = $region71
              $region76: #{custom-call.22} parent=68 // loop_exit
                _
            $region69: #{custom-call.22} parent=53 // pred_fallthru
              _
          $region54: #{custom-call.22} parent=49 // pred_fallthru
            _
          // Predicated region
          $region55: #{custom-call.22} parent=49 // pred_check
            _
          $region56: #{custom-call.22} parent=49 // pred_check_branch
            %137 = sbr.rel (0) target = $region58
          $region57: #{custom-call.22} parent=49 // pred_region
            %s139 = ssub.s32 4, 1
            loop: start=0, step=1, limit=1
            $region59: #{custom-call.22} parent=57 // loop_pre_header
              _
            $region60: #{custom-call.22} parent=57 // loop_header
              %s141 = sphi 0, %s145
              %p142 = scmp.ge.s32.totalorder %s141, 1
              %s146 = sphi %s131, %s131
              %s147 = sphi %s129, %s129
            $region61: #{custom-call.22} parent=57 // loop_header_branch
              %144 = sbr.rel (%p142) target = $region65
            $region62: #{custom-call.22} parent=57 // loop_body
              %v148 = vld [vmem:[%s146] sm:%s139]
              %149 = vst [vmem:[%s147] sm:%s139] %v148
            $region63: #{custom-call.22} parent=57 // loop_footer
              %s145 = sadd.s32 1, %s141
            $region64: #{custom-call.22} parent=57 // loop_footer_branch
              %140 = sbr.rel target = $region60
            $region65: #{custom-call.22} parent=57 // loop_exit
              _
          $region58: #{custom-call.22} parent=49 // pred_fallthru
            _
        $region50: #{custom-call.22} parent=15 // pred_fallthru
          _
        %164 = vnop
        %s165 = sand.u32 %s12, 1
        %s166 = sand.u32 %s12, 1
        %s167 = smul.addr %s166, 2
        %s168 = scalar_lea.vmem [#allocation5], %s167
        %s169 = smul.addr %s12, 2
        %s170 = scalar_lea.vmem %s2, %s169
        // Predicated region
        $region77: #{custom-call.22} parent=15 // pred_check
          _
        $region78: #{custom-call.22} parent=15 // pred_check_branch
          %172 = sbr.rel (0) target = $region80
        $region79: #{custom-call.22} parent=15 // pred_region
          // Predicated region
          $region81: #{custom-call.22} parent=79 // pred_check
            _
          $region82: #{custom-call.22} parent=79 // pred_check_branch
            %174 = sbr.rel target = $region84
          $region83: #{custom-call.22} parent=79 // pred_region
            // Predicated region
            $region96: #{custom-call.22} parent=83 // pred_check
              _
            $region97: #{custom-call.22} parent=83 // pred_check_branch
              %190 = sbr.rel (0) target = $region99
            $region98: #{custom-call.22} parent=83 // pred_region
              %s192 = ssub.s32 4, 1
              loop: start=0, step=1, limit=1
              $region100: #{custom-call.22} parent=98 // loop_pre_header
                _
              $region101: #{custom-call.22} parent=98 // loop_header
                %s194 = sphi 0, %s198
                %p195 = scmp.ge.s32.totalorder %s194, 1
                %s199 = sphi %s170, %s170
                %s200 = sphi %s168, %s168
              $region102: #{custom-call.22} parent=98 // loop_header_branch
                %197 = sbr.rel (%p195) target = $region106
              $region103: #{custom-call.22} parent=98 // loop_body
                %v201 = vld [vmem:[%s199] sm:%s192]
                %202 = vst [vmem:[%s200] sm:%s192] %v201
              $region104: #{custom-call.22} parent=98 // loop_footer
                %s198 = sadd.s32 1, %s194
              $region105: #{custom-call.22} parent=98 // loop_footer_branch
                %193 = sbr.rel target = $region101
              $region106: #{custom-call.22} parent=98 // loop_exit
                _
            $region99: #{custom-call.22} parent=83 // pred_fallthru
              _
          $region84: #{custom-call.22} parent=79 // pred_fallthru
            _
          // Predicated region
          $region85: #{custom-call.22} parent=79 // pred_check
            _
          $region86: #{custom-call.22} parent=79 // pred_check_branch
            %176 = sbr.rel (0) target = $region88
          $region87: #{custom-call.22} parent=79 // pred_region
            %s178 = ssub.s32 4, 1
            loop: start=0, step=1, limit=1
            $region89: #{custom-call.22} parent=87 // loop_pre_header
              _
            $region90: #{custom-call.22} parent=87 // loop_header
              %s180 = sphi 0, %s184
              %p181 = scmp.ge.s32.totalorder %s180, 1
              %s185 = sphi %s170, %s170
              %s186 = sphi %s168, %s168
            $region91: #{custom-call.22} parent=87 // loop_header_branch
              %183 = sbr.rel (%p181) target = $region95
            $region92: #{custom-call.22} parent=87 // loop_body
              %v187 = vld [vmem:[%s185] sm:%s178]
              %188 = vst [vmem:[%s186] sm:%s178] %v187
            $region93: #{custom-call.22} parent=87 // loop_footer
              %s184 = sadd.s32 1, %s180
            $region94: #{custom-call.22} parent=87 // loop_footer_branch
              %179 = sbr.rel target = $region90
            $region95: #{custom-call.22} parent=87 // loop_exit
              _
          $region88: #{custom-call.22} parent=79 // pred_fallthru
            _
        $region80: #{custom-call.22} parent=15 // pred_fallthru
          _
        %203 = vnop
        %s204 = sand.u32 %s12, 1
        %s205 = sand.u32 %s12, 1
        %s206 = smul.addr %s205, 2
        %s207 = scalar_lea.vmem [#allocation7], %s206
        %s208 = smul.addr %s12, 2
        %s209 = scalar_lea.vmem %s3, %s208
        // Predicated region
        $region107: #{custom-call.22} parent=15 // pred_check
          _
        $region108: #{custom-call.22} parent=15 // pred_check_branch
          %211 = sbr.rel (0) target = $region110
        $region109: #{custom-call.22} parent=15 // pred_region
          // Predicated region
          $region111: #{custom-call.22} parent=109 // pred_check
            _
          $region112: #{custom-call.22} parent=109 // pred_check_branch
            %213 = sbr.rel target = $region114
          $region113: #{custom-call.22} parent=109 // pred_region
            // Predicated region
            $region126: #{custom-call.22} parent=113 // pred_check
              _
            $region127: #{custom-call.22} parent=113 // pred_check_branch
              %229 = sbr.rel (0) target = $region129
            $region128: #{custom-call.22} parent=113 // pred_region
              %s231 = ssub.s32 4, 1
              loop: start=0, step=1, limit=1
              $region130: #{custom-call.22} parent=128 // loop_pre_header
                _
              $region131: #{custom-call.22} parent=128 // loop_header
                %s233 = sphi 0, %s237
                %p234 = scmp.ge.s32.totalorder %s233, 1
                %s238 = sphi %s209, %s209
                %s239 = sphi %s207, %s207
              $region132: #{custom-call.22} parent=128 // loop_header_branch
                %236 = sbr.rel (%p234) target = $region136
              $region133: #{custom-call.22} parent=128 // loop_body
                %v240 = vld [vmem:[%s238] sm:%s231]
                %241 = vst [vmem:[%s239] sm:%s231] %v240
              $region134: #{custom-call.22} parent=128 // loop_footer
                %s237 = sadd.s32 1, %s233
              $region135: #{custom-call.22} parent=128 // loop_footer_branch
                %232 = sbr.rel target = $region131
              $region136: #{custom-call.22} parent=128 // loop_exit
                _
            $region129: #{custom-call.22} parent=113 // pred_fallthru
              _
          $region114: #{custom-call.22} parent=109 // pred_fallthru
            _
          // Predicated region
          $region115: #{custom-call.22} parent=109 // pred_check
            _
          $region116: #{custom-call.22} parent=109 // pred_check_branch
            %215 = sbr.rel (0) target = $region118
          $region117: #{custom-call.22} parent=109 // pred_region
            %s217 = ssub.s32 4, 1
            loop: start=0, step=1, limit=1
            $region119: #{custom-call.22} parent=117 // loop_pre_header
              _
            $region120: #{custom-call.22} parent=117 // loop_header
              %s219 = sphi 0, %s223
              %p220 = scmp.ge.s32.totalorder %s219, 1
              %s224 = sphi %s209, %s209
              %s225 = sphi %s207, %s207
            $region121: #{custom-call.22} parent=117 // loop_header_branch
              %222 = sbr.rel (%p220) target = $region125
            $region122: #{custom-call.22} parent=117 // loop_body
              %v226 = vld [vmem:[%s224] sm:%s217]
              %227 = vst [vmem:[%s225] sm:%s217] %v226
            $region123: #{custom-call.22} parent=117 // loop_footer
              %s223 = sadd.s32 1, %s219
            $region124: #{custom-call.22} parent=117 // loop_footer_branch
              %218 = sbr.rel target = $region120
            $region125: #{custom-call.22} parent=117 // loop_exit
              _
          $region118: #{custom-call.22} parent=109 // pred_fallthru
            _
        $region110: #{custom-call.22} parent=15 // pred_fallthru
          _
        %242 = vnop
      $region16: #{custom-call.22} parent=5 // pred_fallthru
        _
      %p243 = scmp.le.s32.totalorder 1, %s12
      %p244 = scmp.lt.s32.totalorder %s12, 17
      %p245 = pnand %p243, %p244
      %p246 = pneg %p245
      // Predicated region
      $region137: #{custom-call.22} parent=5 // pred_check
        _
      $region138: #{custom-call.22} parent=5 // pred_check_branch
        %248 = sbr.rel (%p245) target = $region140
      $region139: #{custom-call.22} parent=5 // pred_region
        #allocation18 [shape = 'f32[2,2]{1,0}', space=vmem, size = 0x1000, scoped, tag = 'a top-left matrix']
        #allocation19 [shape = 'f32[2,2]{1,0}', space=vmem, size = 0x1000, scoped, tag = 'a top-right matrix']
        #allocation20 [shape = 'f32[2,2]{1,0}', space=vmem, size = 0x1000, scoped, tag = 'a bottom-left matrix']
        #allocation21 [shape = 'f32[2,2]{1,0}', space=vmem, size = 0x1000, scoped, tag = 'a bottom-right matrix']
        %s249 = ssub.s32 %s12, 1
        %s250 = sand.u32 %s17, 1
        %s251 = sand.u32 %s17, 1
        %s252 = smul.addr %s251, 2
        %s253 = scalar_lea.vmem [#allocation1], %s252
        %s254 = sand.u32 %s17, 1
        %s255 = sand.u32 %s17, 1
        %s256 = smul.addr %s255, 2
        %s257 = scalar_lea.vmem [#allocation3], %s256
        %s258 = sand.u32 %s17, 1
        %s259 = sand.u32 %s17, 1
        %s260 = smul.addr %s259, 2
        %s261 = scalar_lea.vmem [#allocation5], %s260
        %s262 = sand.u32 %s17, 1
        %s263 = sand.u32 %s17, 1
        %s264 = smul.addr %s263, 2
        %s265 = scalar_lea.vmem [#allocation7], %s264
        %s266 = sand.u32 %s17, 1
        %s267 = sand.u32 %s17, 1
        %s268 = smul.addr %s267, 2
        %s269 = scalar_lea.vmem [#allocation1], %s268
        %s270 = sand.u32 %s17, 1
        %s271 = sand.u32 %s17, 1
        %s272 = smul.addr %s271, 2
        %s273 = scalar_lea.vmem [#allocation3], %s272
        %s274 = sand.u32 %s17, 1
        %s275 = sand.u32 %s17, 1
        %s276 = smul.addr %s275, 2
        %s277 = scalar_lea.vmem [#allocation5], %s276
        %s278 = sand.u32 %s17, 1
        %s279 = sand.u32 %s17, 1
        %s280 = smul.addr %s279, 2
        %s281 = scalar_lea.vmem [#allocation7], %s280
        %p282 = pneg %p40
        %p283 = pneg %p37
        %s284 = sand.u32 %s27, 1
        %s285 = sand.u32 %s27, 1
        %s286 = smul.addr %s285, 8
        %s287 = scalar_lea.vmem [#allocation8], %s286
        %p288 = pneg %p68
        %p289 = pneg %p65
        %s290 = sand.u32 %s55, 1
        %s291 = sand.u32 %s55, 1
        %s292 = smul.addr %s291, 8
        %s293 = scalar_lea.vmem [#allocation9], %s292
        %s294 = sand.u32 %s17, 1
        %s295 = sand.u32 %s17, 1
        %s296 = smul.addr %s295, 2
        %s297 = scalar_lea.vmem [#allocation11], %s296
        %s298 = sand.u32 %s17, 1
        %s299 = sand.u32 %s17, 1
        %s300 = smul.addr %s299, 2
        %s301 = scalar_lea.vmem [#allocation13], %s300
        %s302 = sand.u32 %s17, 1
        %s303 = sand.u32 %s17, 1
        %s304 = smul.addr %s303, 2
        %s305 = scalar_lea.vmem [#allocation15], %s304
        %s306 = sand.u32 %s17, 1
        %s307 = sand.u32 %s17, 1
        %s308 = smul.addr %s307, 2
        %s309 = scalar_lea.vmem [#allocation17], %s308
        %s311 = sshll.u32 1, 2
        %s312 = ssub.s32 %s311, 1
        %v313 = vld [vmem:[%s269] sm:%s312]
        %314 = vst [vmem:[#allocation0] sm:%s312] %v313
        %s316 = sshll.u32 1, 2
        %s317 = ssub.s32 %s316, 1
        %v318 = vld [vmem:[%s273] sm:%s317]
        %319 = vst [vmem:[#allocation2] sm:%s317] %v318
        %s321 = sshll.u32 1, 2
        %s322 = ssub.s32 %s321, 1
        %v323 = vld [vmem:[%s277] sm:%s322]
        %324 = vst [vmem:[#allocation4] sm:%s322] %v323
        %s326 = sshll.u32 1, 2
        %s327 = ssub.s32 %s326, 1
        %v328 = vld [vmem:[%s281] sm:%s327]
        %329 = vst [vmem:[#allocation6] sm:%s327] %v328
        %s330 = sshrl.u32 %s17, 3
        %s331 = sshrl.u32 %s17, 3
        %s332 = smov [#allocation18]
        %v333 = vld [vmem:[#allocation0] sm:$0xff]
        %334 = vst [vmem:[%s332] sm:$0xff] %v333
        %s335 = smov [#allocation19]
        %v336 = vld [vmem:[#allocation2] sm:$0xff]
        %337 = vst [vmem:[%s335] sm:$0xff] %v336
        %s338 = smov [#allocation20]
        %v339 = vld [vmem:[#allocation4] sm:$0xff]
        %340 = vst [vmem:[%s338] sm:$0xff] %v339
        %s341 = smov [#allocation21]
        %v342 = vld [vmem:[#allocation6] sm:$0xff]
        %343 = vst [vmem:[%s341] sm:$0xff] %v342
        %344 = vst [vmem:[#allocation10] sm:$0xff] 0.0
        %345 = vst [vmem:[#allocation12] sm:$0xff] 0.0
        %346 = vst [vmem:[#allocation14] sm:$0xff] 0.0
        %347 = vst [vmem:[#allocation16] sm:$0xff] 0.0
        %s348 = smov [#allocation10]
        %v349 = vlaneseq
        %v350 = vand.u32 %v349, 127
        %v351 = vmov %v350
        %v352 = vlaneseq
        %v353 = vshrl.u32 %v352, 7
        %v354 = vmov %v353
        %v355 = vld [vmem:[%s348] sm:$0x3]
        %vm358 = vcmp.eq.s32.totalorder %v354, %v351
        %v359 = vsel %vm358, 1.0, %v355
        %360 = vst [vmem:[%s348] sm:$0x3] %v359
        %s361 = smov [#allocation16]
        %v362 = vlaneseq
        %v363 = vand.u32 %v362, 127
        %v364 = vmov %v363
        %v365 = vlaneseq
        %v366 = vshrl.u32 %v365, 7
        %v367 = vmov %v366
        %v368 = vld [vmem:[%s361] sm:$0x3]
        %vm371 = vcmp.eq.s32.totalorder %v367, %v364
        %v372 = vsel %vm371, 1.0, %v368
        %373 = vst [vmem:[%s361] sm:$0x3] %v372
        // While loop
        $region141: #{custom-call.22} parent=139 // loop_pre_header
          _
        $region142: #{custom-call.22} parent=139 // loop_header
          %s375 = sphi 0, %s917
          %v376 = vlaneseq
          %v377 = vand.u32 %v376, 127
          %v378 = vmov %v377
          %v379 = vlaneseq
          %v380 = vshrl.u32 %v379, 7
          %v381 = vmov %v380
          %s382 = smov [#allocation18]
          %v383 = vlaneseq
          %v384 = vand.u32 %v383, 127
          %vm385 = vcmp.ge.s32.totalorder %v384, 0
          %vm386 = vcmp.lt.s32.totalorder %v384, 2
          %vm387 = vmand %vm385, %vm386
          %v388 = vld [vmem:[%s382] sm:$0x3]
          %v389 = vsel %vm387, %v388, 0.0
          %v390 = vmul.f32 %v389, %v389
          %vm393 = vcmp.eq.s32.totalorder %v381, %v378
          %v394 = vsel %vm393, 0.0, %v390
          %v395 = vlaneseq
          %v396 = vand.u32 %v395, 127
          %v397 = vmov %v396
          %v398 = vlaneseq
          %v399 = vshrl.u32 %v398, 7
          %v400 = vmov %v399
          %s401 = smov [#allocation19]
          %v402 = vlaneseq
          %v403 = vand.u32 %v402, 127
          %vm404 = vcmp.ge.s32.totalorder %v403, 0
          %vm405 = vcmp.lt.s32.totalorder %v403, 2
          %vm406 = vmand %vm404, %vm405
          %v407 = vld [vmem:[%s401] sm:$0x3]
          %v408 = vsel %vm406, %v407, 0.0
          %v409 = vmul.f32 %v408, %v408
          %v410 = vadd.f32 %v394, %v409
          %v411 = vadd.f32 %v390, %v409
          %v412 = vlaneseq
          %v413 = vand.u32 %v412, 127
          %v414 = vmov %v413
          %v415 = vlaneseq
          %v416 = vshrl.u32 %v415, 7
          %v417 = vmov %v416
          %s418 = smov [#allocation20]
          %v419 = vlaneseq
          %v420 = vand.u32 %v419, 127
          %vm421 = vcmp.ge.s32.totalorder %v420, 0
          %vm422 = vcmp.lt.s32.totalorder %v420, 2
          %vm423 = vmand %vm421, %vm422
          %v424 = vld [vmem:[%s418] sm:$0x3]
          %v425 = vsel %vm423, %v424, 0.0
          %v426 = vmul.f32 %v425, %v425
          %v427 = vadd.f32 %v410, %v426
          %v428 = vadd.f32 %v411, %v426
          %v429 = vlaneseq
          %v430 = vand.u32 %v429, 127
          %v431 = vmov %v430
          %v432 = vlaneseq
          %v433 = vshrl.u32 %v432, 7
          %v434 = vmov %v433
          %s435 = smov [#allocation21]
          %v436 = vlaneseq
          %v437 = vand.u32 %v436, 127
          %vm438 = vcmp.ge.s32.totalorder %v437, 0
          %vm439 = vcmp.lt.s32.totalorder %v437, 2
          %vm440 = vmand %vm438, %vm439
          %v441 = vld [vmem:[%s435] sm:$0x3]
          %v442 = vsel %vm440, %v441, 0.0
          %v443 = vmul.f32 %v442, %v442
          %vm446 = vcmp.eq.s32.totalorder %v434, %v431
          %v447 = vsel %vm446, 0.0, %v443
          %v448 = vadd.f32 %v427, %v447
          %v449 = vadd.f32 %v428, %v443
          %450 = vadd.xlane.f32.xlu0 %v449
          %v451 = vpop.xlane.xlu0 %450
          %v452 = vrot.slane %v451, 4
          %v453 = vadd.f32 %v451, %v452
          %v454 = vrot.slane %v453, 2
          %v455 = vadd.f32 %v453, %v454
          %v456 = vrot.slane %v455, 1
          %v457 = vadd.f32 %v455, %v456
          %458 = vadd.xlane.f32.xlu0 %v448
          %v459 = vpop.xlane.xlu0 %458
          %v460 = vrot.slane %v459, 4
          %v461 = vadd.f32 %v459, %v460
          %v462 = vrot.slane %v461, 2
          %v463 = vadd.f32 %v461, %v462
          %v464 = vrot.slane %v463, 1
          %v465 = vadd.f32 %v463, %v464
          %s466 = vtos %v465
          %s467 = vtos %v457
          %s468 = smul.f32 1e-10, %s467
          %p469 = scmp.le.f32.partialorder %s466, %s468
          %p470 = scmp.ge.s32.totalorder %s375, 15
          %p471 = por %p469, %p470
        $region143: #{custom-call.22} parent=139 // loop_header_branch
          %919 = sbr.rel (%p471) target = $region147
        $region144: #{custom-call.22} parent=139 // loop_body
          loop: start=0, step=1, limit=3
          $region148: #{custom-call.22} parent=144 // loop_pre_header
            _
          $region149: #{custom-call.22} parent=144 // loop_header
            %s473 = sphi 0, %s477
            %p474 = scmp.ge.s32.totalorder %s473, 3
          $region150: #{custom-call.22} parent=144 // loop_header_branch
            %476 = sbr.rel (%p474) target = $region154
          $region151: #{custom-call.22} parent=144 // loop_body
            #allocation22 [shape = 'f32[1024]{0}', space=vmem, size = 0x1000, scoped, tag = 'a_tl_diag vmem']
            #allocation23 [shape = 'f32[1024]{0}', space=vmem, size = 0x1000, scoped, tag = 'a_tr_diag vmem']
            #allocation24 [shape = 'f32[1024]{0}', space=vmem, size = 0x1000, scoped, tag = 'a_br_diag vmem']
            #allocation25 [shape = 'f32[1024]{0}', space=vmem, size = 0x1000, scoped, tag = 'rt1 vmem']
            #allocation26 [shape = 'f32[1024]{0}', space=vmem, size = 0x1000, scoped, tag = 'rt2 vmem']
            #allocation27 [shape = 'f32[1024]{0}', space=vmem, size = 0x1000, scoped, tag = 'c vmem']
            #allocation28 [shape = 'f32[1024]{0}', space=vmem, size = 0x1000, scoped, tag = 's vmem']
            #allocation29 [shape = 'f32[4096]{0}', space=vmem, size = 0x4000, scoped, tag = 'c broadcast']
            #allocation30 [shape = 'f32[4096]{0}', space=vmem, size = 0x4000, scoped, tag = 's broadcast']
            %s478 = smov [#allocation18]
            %s479 = smov [#allocation22]
            %v480 = vlaneseq
            %v481 = vand.u32 %v480, 127
            %v482 = vmov %v481
            %v483 = vlaneseq
            %v484 = vshrl.u32 %v483, 7
            %v485 = vmov %v484
            %v486 = vld [vmem:[%s478] sm:$0x3]
            %vm489 = vcmp.eq.s32.totalorder %v485, %v482
            %v490 = vsel %vm489, %v486, 0.0
            %v491 = vrot.slane %v490, 4
            %v492 = vadd.f32 %v490, %v491
            %v493 = vrot.slane %v492, 2
            %v494 = vadd.f32 %v492, %v493
            %v495 = vrot.slane %v494, 1
            %v496 = vadd.f32 %v494, %v495
            %497 = vst [vmem:[%s479] sm:$0x1] %v496
            %s498 = smov [#allocation19]
            %s499 = smov [#allocation23]
            %v500 = vlaneseq
            %v501 = vand.u32 %v500, 127
            %v502 = vmov %v501
            %v503 = vlaneseq
            %v504 = vshrl.u32 %v503, 7
            %v505 = vmov %v504
            %v506 = vld [vmem:[%s498] sm:$0x3]
            %vm509 = vcmp.eq.s32.totalorder %v505, %v502
            %v510 = vsel %vm509, %v506, 0.0
            %v511 = vrot.slane %v510, 4
            %v512 = vadd.f32 %v510, %v511
            %v513 = vrot.slane %v512, 2
            %v514 = vadd.f32 %v512, %v513
            %v515 = vrot.slane %v514, 1
            %v516 = vadd.f32 %v514, %v515
            %517 = vst [vmem:[%s499] sm:$0x1] %v516
            %s518 = smov [#allocation21]
            %s519 = smov [#allocation24]
            %v520 = vlaneseq
            %v521 = vand.u32 %v520, 127
            %v522 = vmov %v521
            %v523 = vlaneseq
            %v524 = vshrl.u32 %v523, 7
            %v525 = vmov %v524
            %v526 = vld [vmem:[%s518] sm:$0x3]
            %vm529 = vcmp.eq.s32.totalorder %v525, %v522
            %v530 = vsel %vm529, %v526, 0.0
            %v531 = vrot.slane %v530, 4
            %v532 = vadd.f32 %v530, %v531
            %v533 = vrot.slane %v532, 2
            %v534 = vadd.f32 %v532, %v533
            %v535 = vrot.slane %v534, 1
            %v536 = vadd.f32 %v534, %v535
            %537 = vst [vmem:[%s519] sm:$0x1] %v536
            %s538 = smov [#allocation27]
            %s539 = smov [#allocation28]
            %s540 = smov [#allocation22]
            %v541 = vld [vmem:[%s540] sm:$0xff]
            %s542 = smov [#allocation23]
            %v543 = vld [vmem:[%s542] sm:$0xff]
            %s544 = smov [#allocation24]
            %v545 = vld [vmem:[%s544] sm:$0xff]
            %v546 = vsub.f32 %v545, %v541
            %v547 = vmul.f32 2.0, %v543
            %v548 = vrcp.pop %v547
            %v549 = vmul.f32 %v546, %v548
            %vm550 = vcmp.ge.f32.partialorder %v549, 0.0
            %v551 = vmul.f32 %v549, %v549
            %v552 = vadd.f32 1.0, %v551
            %v553 = vrsqrt.pop %v552
            %v554 = vmul.f32 %v552, %v553
            %vm555 = vcmp.eq.f32.partialorder %v552, inf
            %v556 = vsel %vm555, %v552, %v554
            %vm557 = vcmp.eq.f32.partialorder %v552, 0.0
            %v558 = vand.u32 %v552, 2147483648
            %v559 = vsel %vm557, %v558, %v556
            %v560 = vxor.u32 %v559, 2147483648
            %v561 = vsel %vm550, %v559, %v560
            %v562 = vadd.f32 %v549, %v561
            %v563 = vrcp.pop %v562
            %v564 = vand.u32 2147483647, %v541
            %v565 = vand.u32 2147483647, %v543
            %v566 = vand.u32 2147483647, %v545
            %v567 = vmin.f32 %v564, %v566
            %v568 = vmul.f32 1.1920929e-08, %v567
            %vm569 = vcmp.le.f32.partialorder %v565, %v568
            %v570 = vsel %vm569, 0.0, %v563
            %v571 = vmul.f32 %v570, %v570
            %v572 = vadd.f32 1.0, %v571
            %v573 = vrsqrt.pop %v572
            %v574 = vmul.f32 %v570, %v573
            %v575 = vmul.f32 %v570, %v543
            %v576 = vsub.f32 %v541, %v575
            %v577 = vmul.f32 %v570, %v543
            %v578 = vadd.f32 %v545, %v577
            %s579 = smov [#allocation25]
            %580 = vst [vmem:[%s579] sm:$0xff] %v576
            %s581 = smov [#allocation26]
            %582 = vst [vmem:[%s581] sm:$0xff] %v578
            %s583 = smov %s538
            %584 = vst [vmem:[%s583] sm:$0xff] %v573
            %s585 = smov %s539
            %586 = vst [vmem:[%s585] sm:$0xff] %v574
            %s587 = smov [#allocation27]
            %v588 = vld [vmem:[%s587] ss:$0 sm:$0xff]
            %v589 = vlaneseq
            %v590 = vand.u32 %v589, 127
            %v591 = vmov %v590
            %v592 = vlaneseq
            %v593 = vshrl.u32 %v592, 7
            %v594 = vmov %v593
            %vm596 = vcmp.eq.s32.totalorder %v594, %v591
            %v597 = vsel %vm596, %v588, 0.0
            %598 = vadd.xlane.f32.xlu0 %v597
            %v599 = vpop.xlane.xlu0 %598
            %s600 = smov [#allocation29]
            %601 = vst [vmem:[%s600] sm:$0xff] %v599
            %s602 = smov [#allocation28]
            %v603 = vld [vmem:[%s602] ss:$0 sm:$0xff]
            %v604 = vlaneseq
            %v605 = vand.u32 %v604, 127
            %v606 = vmov %v605
            %v607 = vlaneseq
            %v608 = vshrl.u32 %v607, 7
            %v609 = vmov %v608
            %vm611 = vcmp.eq.s32.totalorder %v609, %v606
            %v612 = vsel %vm611, %v603, 0.0
            %613 = vadd.xlane.f32.xlu0 %v612
            %v614 = vpop.xlane.xlu0 %613
            %s615 = smov [#allocation30]
            %616 = vst [vmem:[%s615] sm:$0xff] %v614
            %s617 = smov [#allocation29]
            %v618 = vld [vmem:[%s617] sm:$0xff]
            %s619 = smov [#allocation30]
            %v620 = vld [vmem:[%s619] sm:$0xff]
            %s621 = smov [#allocation18]
            %s622 = smov [#allocation19]
            %s623 = smov [#allocation20]
            %s624 = smov [#allocation21]
            %v625 = vld [vmem:[%s621] sm:$0x3]
            %v626 = vld [vmem:[%s622] sm:$0x3]
            %v627 = vld [vmem:[%s623] sm:$0x3]
            %v628 = vld [vmem:[%s624] sm:$0x3]
            %v629 = vmul.f32 %v618, %v625
            %v630 = vmul.f32 %v620, %v627
            %v631 = vsub.f32 %v629, %v630
            %v632 = vmul.f32 %v618, %v626
            %v633 = vmul.f32 %v620, %v628
            %v634 = vsub.f32 %v632, %v633
            %v635 = vmul.f32 %v620, %v625
            %v636 = vmul.f32 %v618, %v627
            %v637 = vadd.f32 %v635, %v636
            %v638 = vmul.f32 %v620, %v626
            %v639 = vmul.f32 %v618, %v628
            %v640 = vadd.f32 %v638, %v639
            %641 = vst [vmem:[%s621] sm:$0x3] %v631
            %642 = vst [vmem:[%s622] sm:$0x3] %v634
            %643 = vst [vmem:[%s623] sm:$0x3] %v637
            %644 = vst [vmem:[%s624] sm:$0x3] %v640
            %s645 = smov [#allocation27]
            %v646 = vld [vmem:[%s645] ss:$0 sm:$0xff]
            %s647 = smov [#allocation28]
            %v648 = vld [vmem:[%s647] ss:$0 sm:$0xff]
            %s649 = smov [#allocation18]
            %s650 = smov [#allocation19]
            %s651 = smov [#allocation20]
            %s652 = smov [#allocation21]
            %v653 = vld [vmem:[%s649] sm:$0x3]
            %v654 = vld [vmem:[%s650] sm:$0x3]
            %v655 = vld [vmem:[%s651] sm:$0x3]
            %v656 = vld [vmem:[%s652] sm:$0x3]
            %v657 = vmul.f32 %v646, %v653
            %v658 = vmul.f32 %v648, %v654
            %v659 = vsub.f32 %v657, %v658
            %v660 = vmul.f32 %v648, %v653
            %v661 = vmul.f32 %v646, %v654
            %v662 = vadd.f32 %v660, %v661
            %v663 = vmul.f32 %v646, %v655
            %v664 = vmul.f32 %v648, %v656
            %v665 = vsub.f32 %v663, %v664
            %v666 = vmul.f32 %v648, %v655
            %v667 = vmul.f32 %v646, %v656
            %v668 = vadd.f32 %v666, %v667
            %669 = vst [vmem:[%s649] sm:$0x3] %v659
            %670 = vst [vmem:[%s650] sm:$0x3] %v662
            %671 = vst [vmem:[%s651] sm:$0x3] %v665
            %672 = vst [vmem:[%s652] sm:$0x3] %v668
            %s673 = smov [#allocation18]
            %s674 = smov [#allocation25]
            %v675 = vlaneseq
            %v676 = vand.u32 %v675, 127
            %v677 = vmov %v676
            %v678 = vlaneseq
            %v679 = vshrl.u32 %v678, 7
            %v680 = vmov %v679
            %v681 = vld [vmem:[%s674] ss:$0 sm:$0xff]
            %v682 = vld [vmem:[%s673] sm:$0x3]
            %vm685 = vcmp.eq.s32.totalorder %v680, %v677
            %v686 = vsel %vm685, %v681, %v682
            %687 = vst [vmem:[%s673] sm:$0x3] %v686
            %s688 = smov [#allocation19]
            %v689 = vlaneseq
            %v690 = vand.u32 %v689, 127
            %v691 = vmov %v690
            %v692 = vlaneseq
            %v693 = vshrl.u32 %v692, 7
            %v694 = vmov %v693
            %v695 = vld [vmem:[%s688] sm:$0x3]
            %vm698 = vcmp.eq.s32.totalorder %v694, %v691
            %v699 = vsel %vm698, 0.0, %v695
            %700 = vst [vmem:[%s688] sm:$0x3] %v699
            %s701 = smov [#allocation20]
            %v702 = vlaneseq
            %v703 = vand.u32 %v702, 127
            %v704 = vmov %v703
            %v705 = vlaneseq
            %v706 = vshrl.u32 %v705, 7
            %v707 = vmov %v706
            %v708 = vld [vmem:[%s701] sm:$0x3]
            %vm711 = vcmp.eq.s32.totalorder %v707, %v704
            %v712 = vsel %vm711, 0.0, %v708
            %713 = vst [vmem:[%s701] sm:$0x3] %v712
            %s714 = smov [#allocation21]
            %s715 = smov [#allocation26]
            %v716 = vlaneseq
            %v717 = vand.u32 %v716, 127
            %v718 = vmov %v717
            %v719 = vlaneseq
            %v720 = vshrl.u32 %v719, 7
            %v721 = vmov %v720
            %v722 = vld [vmem:[%s715] ss:$0 sm:$0xff]
            %v723 = vld [vmem:[%s714] sm:$0x3]
            %vm726 = vcmp.eq.s32.totalorder %v721, %v718
            %v727 = vsel %vm726, %v722, %v723
            %728 = vst [vmem:[%s714] sm:$0x3] %v727
            %s729 = smov [#allocation18]
            %s730 = smov [#allocation19]
            %v731 = vld [vmem:[%s730] sm:$0x3]
            %732 = vrot.lane.b32.xlu0 %v731, 1
            %v733 = vpop.permute.xlu0 %732
            %v734 = vld [vmem:[%s729] sm:$0x3]
            %v735 = vld [vmem:[%s729] sm:$0x3]
            %736 = vrot.lane.b32.xlu0 %v735, 1
            %v737 = vpop.permute.xlu0 %736
            %v738 = vlaneseq
            %v739 = vand.u32 %v738, 127
            %vm740 = vcmp.eq.s32.totalorder %v739, 0
            %v741 = vsel %vm740, %v735, %v737
            %v742 = vlaneseq
            %v743 = vand.u32 %v742, 127
            %vm744 = vcmp.eq.s32.totalorder %v743, 1
            %v745 = vsel %vm744, %v733, %v741
            %v746 = vlaneseq
            %v747 = vand.u32 %v746, 127
            %vm748 = vcmp.ge.s32.totalorder %v747, 0
            %vm749 = vcmp.lt.s32.totalorder %v747, 2
            %vm750 = vmand %vm748, %vm749
            %v751 = vsel %vm750, %v745, 0.0
            %v752 = vld [vmem:[%s730] sm:$0x3]
            %753 = vrot.lane.b32.xlu0 %v752, 127
            %v754 = vpop.permute.xlu0 %753
            %v755 = vlaneseq
            %v756 = vand.u32 %v755, 127
            %vm757 = vcmp.eq.s32.totalorder %v756, 1
            %v758 = vsel %vm757, %v734, %v754
            %759 = vst [vmem:[%s729] sm:$0x3] %v751
            %760 = vst [vmem:[%s730] sm:$0x3] %v758
            %s761 = smov [#allocation20]
            %s762 = smov [#allocation21]
            %v763 = vld [vmem:[%s762] sm:$0x3]
            %764 = vrot.lane.b32.xlu0 %v763, 1
            %v765 = vpop.permute.xlu0 %764
            %v766 = vld [vmem:[%s761] sm:$0x3]
            %v767 = vld [vmem:[%s761] sm:$0x3]
            %768 = vrot.lane.b32.xlu0 %v767, 1
            %v769 = vpop.permute.xlu0 %768
            %v770 = vlaneseq
            %v771 = vand.u32 %v770, 127
            %vm772 = vcmp.eq.s32.totalorder %v771, 0
            %v773 = vsel %vm772, %v767, %v769
            %v774 = vlaneseq
            %v775 = vand.u32 %v774, 127
            %vm776 = vcmp.eq.s32.totalorder %v775, 1
            %v777 = vsel %vm776, %v765, %v773
            %v778 = vlaneseq
            %v779 = vand.u32 %v778, 127
            %vm780 = vcmp.ge.s32.totalorder %v779, 0
            %vm781 = vcmp.lt.s32.totalorder %v779, 2
            %vm782 = vmand %vm780, %vm781
            %v783 = vsel %vm782, %v777, 0.0
            %v784 = vld [vmem:[%s762] sm:$0x3]
            %785 = vrot.lane.b32.xlu0 %v784, 127
            %v786 = vpop.permute.xlu0 %785
            %v787 = vlaneseq
            %v788 = vand.u32 %v787, 127
            %vm789 = vcmp.eq.s32.totalorder %v788, 1
            %v790 = vsel %vm789, %v766, %v786
            %791 = vst [vmem:[%s761] sm:$0x3] %v783
            %792 = vst [vmem:[%s762] sm:$0x3] %v790
            %s793 = smov [#allocation18]
            %s794 = smov [#allocation20]
            %v795 = vld [vmem:[%s793] ss:$0 sm:$0xff]
            %s797 = scalar_lea.vmem %s793, 4294967295
            %v798 = vld [vmem:[%s797] sm:$0x2]
            %v799 = vlaneseq
            %v800 = vshrl.u32 %v799, 7
            %vm801 = vcmp.eq.s32.totalorder %v800, 0
            %v802 = vsel %vm801, %v795, %v798
            %s803 = scalar_lea.vmem %s793, 1
            %v804 = vld [vmem:[%s803] ss:$0 sm:$0xff]
            %805 = vst [vmem:[%s793] sm:$0x3] %v802
            %v806 = vld [vmem:[%s794] ss:$0 sm:$0xff]
            %s807 = scalar_lea.vmem %s793, 1
            %808 = vst [vmem:[%s807] sm:$0x1] %v806
            %s809 = scalar_lea.vmem %s794, 1
            %v810 = vld [vmem:[%s809] sm:$0x1]
            %v811 = vlaneseq
            %v812 = vshrl.u32 %v811, 7
            %vm813 = vcmp.eq.s32.totalorder %v812, 1
            %v814 = vsel %vm813, %v804, %v810
            %v815 = vld [vmem:[%s794] ss:$0 sm:$0xff]
            %816 = vst [vmem:[%s794] sm:$0x3] %v814
            %s817 = smov [#allocation19]
            %s818 = smov [#allocation21]
            %v819 = vld [vmem:[%s817] ss:$0 sm:$0xff]
            %s821 = scalar_lea.vmem %s817, 4294967295
            %v822 = vld [vmem:[%s821] sm:$0x2]
            %v823 = vlaneseq
            %v824 = vshrl.u32 %v823, 7
            %vm825 = vcmp.eq.s32.totalorder %v824, 0
            %v826 = vsel %vm825, %v819, %v822
            %s827 = scalar_lea.vmem %s817, 1
            %v828 = vld [vmem:[%s827] ss:$0 sm:$0xff]
            %829 = vst [vmem:[%s817] sm:$0x3] %v826
            %v830 = vld [vmem:[%s818] ss:$0 sm:$0xff]
            %s831 = scalar_lea.vmem %s817, 1
            %832 = vst [vmem:[%s831] sm:$0x1] %v830
            %s833 = scalar_lea.vmem %s818, 1
            %v834 = vld [vmem:[%s833] sm:$0x1]
            %v835 = vlaneseq
            %v836 = vshrl.u32 %v835, 7
            %vm837 = vcmp.eq.s32.totalorder %v836, 1
            %v838 = vsel %vm837, %v828, %v834
            %v839 = vld [vmem:[%s818] ss:$0 sm:$0xff]
            %840 = vst [vmem:[%s818] sm:$0x3] %v838
            %s841 = smov [#allocation29]
            %v842 = vld [vmem:[%s841] sm:$0xff]
            %s843 = smov [#allocation30]
            %v844 = vld [vmem:[%s843] sm:$0xff]
            %s845 = smov [#allocation10]
            %s846 = smov [#allocation12]
            %s847 = smov [#allocation14]
            %s848 = smov [#allocation16]
            %v849 = vld [vmem:[%s845] sm:$0x3]
            %v850 = vld [vmem:[%s846] sm:$0x3]
            %v851 = vld [vmem:[%s847] sm:$0x3]
            %v852 = vld [vmem:[%s848] sm:$0x3]
            %v853 = vmul.f32 %v842, %v849
            %v854 = vmul.f32 %v844, %v851
            %v855 = vsub.f32 %v853, %v854
            %v856 = vmul.f32 %v842, %v850
            %v857 = vmul.f32 %v844, %v852
            %v858 = vsub.f32 %v856, %v857
            %v859 = vmul.f32 %v844, %v849
            %v860 = vmul.f32 %v842, %v851
            %v861 = vadd.f32 %v859, %v860
            %v862 = vmul.f32 %v844, %v850
            %v863 = vmul.f32 %v842, %v852
            %v864 = vadd.f32 %v862, %v863
            %865 = vst [vmem:[%s845] sm:$0x3] %v855
            %866 = vst [vmem:[%s846] sm:$0x3] %v858
            %867 = vst [vmem:[%s847] sm:$0x3] %v861
            %868 = vst [vmem:[%s848] sm:$0x3] %v864
            %s869 = smov [#allocation10]
            %s870 = smov [#allocation14]
            %v871 = vld [vmem:[%s869] ss:$0 sm:$0xff]
            %s873 = scalar_lea.vmem %s869, 4294967295
            %v874 = vld [vmem:[%s873] sm:$0x2]
            %v875 = vlaneseq
            %v876 = vshrl.u32 %v875, 7
            %vm877 = vcmp.eq.s32.totalorder %v876, 0
            %v878 = vsel %vm877, %v871, %v874
            %s879 = scalar_lea.vmem %s869, 1
            %v880 = vld [vmem:[%s879] ss:$0 sm:$0xff]
            %881 = vst [vmem:[%s869] sm:$0x3] %v878
            %v882 = vld [vmem:[%s870] ss:$0 sm:$0xff]
            %s883 = scalar_lea.vmem %s869, 1
            %884 = vst [vmem:[%s883] sm:$0x1] %v882
            %s885 = scalar_lea.vmem %s870, 1
            %v886 = vld [vmem:[%s885] sm:$0x1]
            %v887 = vlaneseq
            %v888 = vshrl.u32 %v887, 7
            %vm889 = vcmp.eq.s32.totalorder %v888, 1
            %v890 = vsel %vm889, %v880, %v886
            %v891 = vld [vmem:[%s870] ss:$0 sm:$0xff]
            %892 = vst [vmem:[%s870] sm:$0x3] %v890
            %s893 = smov [#allocation12]
            %s894 = smov [#allocation16]
            %v895 = vld [vmem:[%s893] ss:$0 sm:$0xff]
            %s897 = scalar_lea.vmem %s893, 4294967295
            %v898 = vld [vmem:[%s897] sm:$0x2]
            %v899 = vlaneseq
            %v900 = vshrl.u32 %v899, 7
            %vm901 = vcmp.eq.s32.totalorder %v900, 0
            %v902 = vsel %vm901, %v895, %v898
            %s903 = scalar_lea.vmem %s893, 1
            %v904 = vld [vmem:[%s903] ss:$0 sm:$0xff]
            %905 = vst [vmem:[%s893] sm:$0x3] %v902
            %v906 = vld [vmem:[%s894] ss:$0 sm:$0xff]
            %s907 = scalar_lea.vmem %s893, 1
            %908 = vst [vmem:[%s907] sm:$0x1] %v906
            %s909 = scalar_lea.vmem %s894, 1
            %v910 = vld [vmem:[%s909] sm:$0x1]
            %v911 = vlaneseq
            %v912 = vshrl.u32 %v911, 7
            %vm913 = vcmp.eq.s32.totalorder %v912, 1
            %v914 = vsel %vm913, %v904, %v910
            %v915 = vld [vmem:[%s894] ss:$0 sm:$0xff]
            %916 = vst [vmem:[%s894] sm:$0x3] %v914
          $region152: #{custom-call.22} parent=144 // loop_footer
            %s477 = sadd.s32 1, %s473
          $region153: #{custom-call.22} parent=144 // loop_footer_branch
            %472 = sbr.rel target = $region149
          $region154: #{custom-call.22} parent=144 // loop_exit
            _
          %s917 = sadd.s32 %s375, 1
        $region145: #{custom-call.22} parent=139 // loop_footer
          _
        $region146: #{custom-call.22} parent=139 // loop_footer_branch
          %374 = sbr.rel target = $region142
        $region147: #{custom-call.22} parent=139 // loop_exit
          _
        %s920 = sand.u32 %s17, 7
        %s921 = scalar_lea.vmem %s287, %s920 [#allocation8]
        %s922 = sand.u32 %s17, 7
        %s923 = scalar_lea.vmem %s293, %s922 [#allocation9]
        %s924 = smov [#allocation18]
        %s925 = smov %s921
        %v926 = vlaneseq
        %v927 = vand.u32 %v926, 127
        %v928 = vmov %v927
        %v929 = vlaneseq
        %v930 = vshrl.u32 %v929, 7
        %v931 = vmov %v930
        %v932 = vld [vmem:[%s924] sm:$0x3]
        %vm935 = vcmp.eq.s32.totalorder %v931, %v928
        %v936 = vsel %vm935, %v932, 0.0
        %v937 = vrot.slane %v936, 4
        %v938 = vadd.f32 %v936, %v937
        %v939 = vrot.slane %v938, 2
        %v940 = vadd.f32 %v938, %v939
        %v941 = vrot.slane %v940, 1
        %v942 = vadd.f32 %v940, %v941
        %943 = vst [vmem:[%s925] sm:$0x1] %v942
        %s944 = smov [#allocation21]
        %s945 = smov %s923
        %v946 = vlaneseq
        %v947 = vand.u32 %v946, 127
        %v948 = vmov %v947
        %v949 = vlaneseq
        %v950 = vshrl.u32 %v949, 7
        %v951 = vmov %v950
        %v952 = vld [vmem:[%s944] sm:$0x3]
        %vm955 = vcmp.eq.s32.totalorder %v951, %v948
        %v956 = vsel %vm955, %v952, 0.0
        %v957 = vrot.slane %v956, 4
        %v958 = vadd.f32 %v956, %v957
        %v959 = vrot.slane %v958, 2
        %v960 = vadd.f32 %v958, %v959
        %v961 = vrot.slane %v960, 1
        %v962 = vadd.f32 %v960, %v961
        %963 = vst [vmem:[%s945] sm:$0x1] %v962
        %s965 = sshll.u32 1, 2
        %s966 = ssub.s32 %s965, 1
        %v968 = vld [vmem:[#allocation10] sm:%s966]
        %s969 = sshll.u32 1, 2
        %s970 = ssub.s32 %s969, 1
        %971 = vst [vmem:[%s297] sm:%s970] %v968
        %s973 = sshll.u32 1, 2
        %s974 = ssub.s32 %s973, 1
        %v976 = vld [vmem:[#allocation12] sm:%s974]
        %s977 = sshll.u32 1, 2
        %s978 = ssub.s32 %s977, 1
        %979 = vst [vmem:[%s301] sm:%s978] %v976
        %s981 = sshll.u32 1, 2
        %s982 = ssub.s32 %s981, 1
        %v984 = vld [vmem:[#allocation14] sm:%s982]
        %s985 = sshll.u32 1, 2
        %s986 = ssub.s32 %s985, 1
        %987 = vst [vmem:[%s305] sm:%s986] %v984
        %s989 = sshll.u32 1, 2
        %s990 = ssub.s32 %s989, 1
        %v992 = vld [vmem:[#allocation16] sm:%s990]
        %s993 = sshll.u32 1, 2
        %s994 = ssub.s32 %s993, 1
        %995 = vst [vmem:[%s309] sm:%s994] %v992
        %s996 = sand.u32 %s27, 1
        %s997 = sand.u32 %s27, 1
        %s998 = smul.addr %s997, 8
        %s999 = scalar_lea.vmem [#allocation8], %s998
        %s1000 = sand.u32 %s55, 1
        %s1001 = sand.u32 %s55, 1
        %s1002 = smul.addr %s1001, 8
        %s1003 = scalar_lea.vmem [#allocation9], %s1002
        %s1004 = sand.u32 %s17, 1
        %s1005 = sand.u32 %s17, 1
        %s1006 = smul.addr %s1005, 2
        %s1007 = scalar_lea.vmem [#allocation11], %s1006
        %s1008 = sand.u32 %s17, 1
        %s1009 = sand.u32 %s17, 1
        %s1010 = smul.addr %s1009, 2
        %s1011 = scalar_lea.vmem [#allocation13], %s1010
        %s1012 = sand.u32 %s17, 1
        %s1013 = sand.u32 %s17, 1
        %s1014 = smul.addr %s1013, 2
        %s1015 = scalar_lea.vmem [#allocation15], %s1014
        %s1016 = sand.u32 %s17, 1
        %s1017 = sand.u32 %s17, 1
        %s1018 = smul.addr %s1017, 2
        %s1019 = scalar_lea.vmem [#allocation17], %s1018
        // Predicated region
        $region155: #{custom-call.22} parent=139 // pred_check
          %p1020 = pneg %p37
        $region156: #{custom-call.22} parent=139 // pred_check_branch
          %1022 = sbr.rel (%p1020) target = $region158
        $region157: #{custom-call.22} parent=139 // pred_region
          %s1023 = sshrl.u32 %s17, 3
          %s1024 = smul.addr %s1023, 8
          %s1025 = scalar_lea.vmem %s4, %s1024
          // Predicated region
          $region159: #{custom-call.22} parent=157 // pred_check
            _
          $region160: #{custom-call.22} parent=157 // pred_check_branch
            %1027 = sbr.rel (0) target = $region162
          $region161: #{custom-call.22} parent=157 // pred_region
            // Predicated region
            $region163: #{custom-call.22} parent=161 // pred_check
              _
            $region164: #{custom-call.22} parent=161 // pred_check_branch
              %1029 = sbr.rel (0) target = $region166
            $region165: #{custom-call.22} parent=161 // pred_region
              // Predicated region
              $region178: #{custom-call.22} parent=165 // pred_check
                _
              $region179: #{custom-call.22} parent=165 // pred_check_branch
                %1045 = sbr.rel (0) target = $region181
              $region180: #{custom-call.22} parent=165 // pred_region
                loop: start=0, step=1, limit=1
                $region182: #{custom-call.22} parent=180 // loop_pre_header
                  _
                $region183: #{custom-call.22} parent=180 // loop_header
                  %s1047 = sphi 0, %s1051
                  %p1048 = scmp.ge.s32.totalorder %s1047, 1
                  %s1052 = sphi %s999, %s999
                  %s1053 = sphi %s1025, %s1025
                $region184: #{custom-call.22} parent=180 // loop_header_branch
                  %1050 = sbr.rel (%p1048) target = $region188
                $region185: #{custom-call.22} parent=180 // loop_body
                  %v1054 = vld [vmem:[%s1052] sm:$0xff]
                  %1055 = vst [vmem:[%s1053] sm:$0xff] %v1054
                $region186: #{custom-call.22} parent=180 // loop_footer
                  %s1051 = sadd.s32 1, %s1047
                $region187: #{custom-call.22} parent=180 // loop_footer_branch
                  %1046 = sbr.rel target = $region183
                $region188: #{custom-call.22} parent=180 // loop_exit
                  _
              $region181: #{custom-call.22} parent=165 // pred_fallthru
                _
              // Predicated region
              $region189: #{custom-call.22} parent=165 // pred_check
                _
              $region190: #{custom-call.22} parent=165 // pred_check_branch
                %1057 = sbr.rel target = $region192
              $region191: #{custom-call.22} parent=165 // pred_region
                _
              $region192: #{custom-call.22} parent=165 // pred_fallthru
                _
            $region166: #{custom-call.22} parent=161 // pred_fallthru
              _
            // Predicated region
            $region167: #{custom-call.22} parent=161 // pred_check
              _
            $region168: #{custom-call.22} parent=161 // pred_check_branch
              %1031 = sbr.rel target = $region170
            $region169: #{custom-call.22} parent=161 // pred_region
              %s1033 = ssub.s32 256, 1
              loop: start=0, step=1, limit=1
              $region171: #{custom-call.22} parent=169 // loop_pre_header
                _
              $region172: #{custom-call.22} parent=169 // loop_header
                %s1035 = sphi 0, %s1039
                %p1036 = scmp.ge.s32.totalorder %s1035, 1
                %s1040 = sphi %s999, %s999
                %s1041 = sphi %s1025, %s1025
              $region173: #{custom-call.22} parent=169 // loop_header_branch
                %1038 = sbr.rel (%p1036) target = $region177
              $region174: #{custom-call.22} parent=169 // loop_body
                %v1042 = vld [vmem:[%s1040] sm:%s1033]
                %1043 = vst [vmem:[%s1041] sm:%s1033] %v1042
              $region175: #{custom-call.22} parent=169 // loop_footer
                %s1039 = sadd.s32 1, %s1035
              $region176: #{custom-call.22} parent=169 // loop_footer_branch
                %1034 = sbr.rel target = $region172
              $region177: #{custom-call.22} parent=169 // loop_exit
                _
            $region170: #{custom-call.22} parent=161 // pred_fallthru
              _
          $region162: #{custom-call.22} parent=157 // pred_fallthru
            _
          %1058 = vnop
        $region158: #{custom-call.22} parent=139 // pred_fallthru
          _
        // Predicated region
        $region193: #{custom-call.22} parent=139 // pred_check
          %p1059 = pneg %p65
        $region194: #{custom-call.22} parent=139 // pred_check_branch
          %1061 = sbr.rel (%p1059) target = $region196
        $region195: #{custom-call.22} parent=139 // pred_region
          %s1062 = sshrl.u32 %s17, 3
          %s1063 = smul.addr %s1062, 8
          %s1064 = scalar_lea.vmem %s5, %s1063
          // Predicated region
          $region197: #{custom-call.22} parent=195 // pred_check
            _
          $region198: #{custom-call.22} parent=195 // pred_check_branch
            %1066 = sbr.rel (0) target = $region200
          $region199: #{custom-call.22} parent=195 // pred_region
            // Predicated region
            $region201: #{custom-call.22} parent=199 // pred_check
              _
            $region202: #{custom-call.22} parent=199 // pred_check_branch
              %1068 = sbr.rel (0) target = $region204
            $region203: #{custom-call.22} parent=199 // pred_region
              // Predicated region
              $region216: #{custom-call.22} parent=203 // pred_check
                _
              $region217: #{custom-call.22} parent=203 // pred_check_branch
                %1084 = sbr.rel (0) target = $region219
              $region218: #{custom-call.22} parent=203 // pred_region
                loop: start=0, step=1, limit=1
                $region220: #{custom-call.22} parent=218 // loop_pre_header
                  _
                $region221: #{custom-call.22} parent=218 // loop_header
                  %s1086 = sphi 0, %s1090
                  %p1087 = scmp.ge.s32.totalorder %s1086, 1
                  %s1091 = sphi %s1003, %s1003
                  %s1092 = sphi %s1064, %s1064
                $region222: #{custom-call.22} parent=218 // loop_header_branch
                  %1089 = sbr.rel (%p1087) target = $region226
                $region223: #{custom-call.22} parent=218 // loop_body
                  %v1093 = vld [vmem:[%s1091] sm:$0xff]
                  %1094 = vst [vmem:[%s1092] sm:$0xff] %v1093
                $region224: #{custom-call.22} parent=218 // loop_footer
                  %s1090 = sadd.s32 1, %s1086
                $region225: #{custom-call.22} parent=218 // loop_footer_branch
                  %1085 = sbr.rel target = $region221
                $region226: #{custom-call.22} parent=218 // loop_exit
                  _
              $region219: #{custom-call.22} parent=203 // pred_fallthru
                _
              // Predicated region
              $region227: #{custom-call.22} parent=203 // pred_check
                _
              $region228: #{custom-call.22} parent=203 // pred_check_branch
                %1096 = sbr.rel target = $region230
              $region229: #{custom-call.22} parent=203 // pred_region
                _
              $region230: #{custom-call.22} parent=203 // pred_fallthru
                _
            $region204: #{custom-call.22} parent=199 // pred_fallthru
              _
            // Predicated region
            $region205: #{custom-call.22} parent=199 // pred_check
              _
            $region206: #{custom-call.22} parent=199 // pred_check_branch
              %1070 = sbr.rel target = $region208
            $region207: #{custom-call.22} parent=199 // pred_region
              %s1072 = ssub.s32 256, 1
              loop: start=0, step=1, limit=1
              $region209: #{custom-call.22} parent=207 // loop_pre_header
                _
              $region210: #{custom-call.22} parent=207 // loop_header
                %s1074 = sphi 0, %s1078
                %p1075 = scmp.ge.s32.totalorder %s1074, 1
                %s1079 = sphi %s1003, %s1003
                %s1080 = sphi %s1064, %s1064
              $region211: #{custom-call.22} parent=207 // loop_header_branch
                %1077 = sbr.rel (%p1075) target = $region215
              $region212: #{custom-call.22} parent=207 // loop_body
                %v1081 = vld [vmem:[%s1079] sm:%s1072]
                %1082 = vst [vmem:[%s1080] sm:%s1072] %v1081
              $region213: #{custom-call.22} parent=207 // loop_footer
                %s1078 = sadd.s32 1, %s1074
              $region214: #{custom-call.22} parent=207 // loop_footer_branch
                %1073 = sbr.rel target = $region210
              $region215: #{custom-call.22} parent=207 // loop_exit
                _
            $region208: #{custom-call.22} parent=199 // pred_fallthru
              _
          $region200: #{custom-call.22} parent=195 // pred_fallthru
            _
          %1097 = vnop
        $region196: #{custom-call.22} parent=139 // pred_fallthru
          _
        %s1098 = smul.addr %s17, 2
        %s1099 = scalar_lea.vmem %s6, %s1098
        // Predicated region
        $region231: #{custom-call.22} parent=139 // pred_check
          _
        $region232: #{custom-call.22} parent=139 // pred_check_branch
          %1101 = sbr.rel (0) target = $region234
        $region233: #{custom-call.22} parent=139 // pred_region
          // Predicated region
          $region235: #{custom-call.22} parent=233 // pred_check
            _
          $region236: #{custom-call.22} parent=233 // pred_check_branch
            %1103 = sbr.rel target = $region238
          $region237: #{custom-call.22} parent=233 // pred_region
            // Predicated region
            $region250: #{custom-call.22} parent=237 // pred_check
              _
            $region251: #{custom-call.22} parent=237 // pred_check_branch
              %1119 = sbr.rel (0) target = $region253
            $region252: #{custom-call.22} parent=237 // pred_region
              %s1121 = ssub.s32 4, 1
              loop: start=0, step=1, limit=1
              $region254: #{custom-call.22} parent=252 // loop_pre_header
                _
              $region255: #{custom-call.22} parent=252 // loop_header
                %s1123 = sphi 0, %s1127
                %p1124 = scmp.ge.s32.totalorder %s1123, 1
                %s1128 = sphi %s1007, %s1007
                %s1129 = sphi %s1099, %s1099
              $region256: #{custom-call.22} parent=252 // loop_header_branch
                %1126 = sbr.rel (%p1124) target = $region260
              $region257: #{custom-call.22} parent=252 // loop_body
                %v1130 = vld [vmem:[%s1128] sm:%s1121]
                %1131 = vst [vmem:[%s1129] sm:%s1121] %v1130
              $region258: #{custom-call.22} parent=252 // loop_footer
                %s1127 = sadd.s32 1, %s1123
              $region259: #{custom-call.22} parent=252 // loop_footer_branch
                %1122 = sbr.rel target = $region255
              $region260: #{custom-call.22} parent=252 // loop_exit
                _
            $region253: #{custom-call.22} parent=237 // pred_fallthru
              _
          $region238: #{custom-call.22} parent=233 // pred_fallthru
            _
          // Predicated region
          $region239: #{custom-call.22} parent=233 // pred_check
            _
          $region240: #{custom-call.22} parent=233 // pred_check_branch
            %1105 = sbr.rel (0) target = $region242
          $region241: #{custom-call.22} parent=233 // pred_region
            %s1107 = ssub.s32 4, 1
            loop: start=0, step=1, limit=1
            $region243: #{custom-call.22} parent=241 // loop_pre_header
              _
            $region244: #{custom-call.22} parent=241 // loop_header
              %s1109 = sphi 0, %s1113
              %p1110 = scmp.ge.s32.totalorder %s1109, 1
              %s1114 = sphi %s1007, %s1007
              %s1115 = sphi %s1099, %s1099
            $region245: #{custom-call.22} parent=241 // loop_header_branch
              %1112 = sbr.rel (%p1110) target = $region249
            $region246: #{custom-call.22} parent=241 // loop_body
              %v1116 = vld [vmem:[%s1114] sm:%s1107]
              %1117 = vst [vmem:[%s1115] sm:%s1107] %v1116
            $region247: #{custom-call.22} parent=241 // loop_footer
              %s1113 = sadd.s32 1, %s1109
            $region248: #{custom-call.22} parent=241 // loop_footer_branch
              %1108 = sbr.rel target = $region244
            $region249: #{custom-call.22} parent=241 // loop_exit
              _
          $region242: #{custom-call.22} parent=233 // pred_fallthru
            _
        $region234: #{custom-call.22} parent=139 // pred_fallthru
          _
        %1132 = vnop
        %s1133 = smul.addr %s17, 2
        %s1134 = scalar_lea.vmem %s7, %s1133
        // Predicated region
        $region261: #{custom-call.22} parent=139 // pred_check
          _
        $region262: #{custom-call.22} parent=139 // pred_check_branch
          %1136 = sbr.rel (0) target = $region264
        $region263: #{custom-call.22} parent=139 // pred_region
          // Predicated region
          $region265: #{custom-call.22} parent=263 // pred_check
            _
          $region266: #{custom-call.22} parent=263 // pred_check_branch
            %1138 = sbr.rel target = $region268
          $region267: #{custom-call.22} parent=263 // pred_region
            // Predicated region
            $region280: #{custom-call.22} parent=267 // pred_check
              _
            $region281: #{custom-call.22} parent=267 // pred_check_branch
              %1154 = sbr.rel (0) target = $region283
            $region282: #{custom-call.22} parent=267 // pred_region
              %s1156 = ssub.s32 4, 1
              loop: start=0, step=1, limit=1
              $region284: #{custom-call.22} parent=282 // loop_pre_header
                _
              $region285: #{custom-call.22} parent=282 // loop_header
                %s1158 = sphi 0, %s1162
                %p1159 = scmp.ge.s32.totalorder %s1158, 1
                %s1163 = sphi %s1011, %s1011
                %s1164 = sphi %s1134, %s1134
              $region286: #{custom-call.22} parent=282 // loop_header_branch
                %1161 = sbr.rel (%p1159) target = $region290
              $region287: #{custom-call.22} parent=282 // loop_body
                %v1165 = vld [vmem:[%s1163] sm:%s1156]
                %1166 = vst [vmem:[%s1164] sm:%s1156] %v1165
              $region288: #{custom-call.22} parent=282 // loop_footer
                %s1162 = sadd.s32 1, %s1158
              $region289: #{custom-call.22} parent=282 // loop_footer_branch
                %1157 = sbr.rel target = $region285
              $region290: #{custom-call.22} parent=282 // loop_exit
                _
            $region283: #{custom-call.22} parent=267 // pred_fallthru
              _
          $region268: #{custom-call.22} parent=263 // pred_fallthru
            _
          // Predicated region
          $region269: #{custom-call.22} parent=263 // pred_check
            _
          $region270: #{custom-call.22} parent=263 // pred_check_branch
            %1140 = sbr.rel (0) target = $region272
          $region271: #{custom-call.22} parent=263 // pred_region
            %s1142 = ssub.s32 4, 1
            loop: start=0, step=1, limit=1
            $region273: #{custom-call.22} parent=271 // loop_pre_header
              _
            $region274: #{custom-call.22} parent=271 // loop_header
              %s1144 = sphi 0, %s1148
              %p1145 = scmp.ge.s32.totalorder %s1144, 1
              %s1149 = sphi %s1011, %s1011
              %s1150 = sphi %s1134, %s1134
            $region275: #{custom-call.22} parent=271 // loop_header_branch
              %1147 = sbr.rel (%p1145) target = $region279
            $region276: #{custom-call.22} parent=271 // loop_body
              %v1151 = vld [vmem:[%s1149] sm:%s1142]
              %1152 = vst [vmem:[%s1150] sm:%s1142] %v1151
            $region277: #{custom-call.22} parent=271 // loop_footer
              %s1148 = sadd.s32 1, %s1144
            $region278: #{custom-call.22} parent=271 // loop_footer_branch
              %1143 = sbr.rel target = $region274
            $region279: #{custom-call.22} parent=271 // loop_exit
              _
          $region272: #{custom-call.22} parent=263 // pred_fallthru
            _
        $region264: #{custom-call.22} parent=139 // pred_fallthru
          _
        %1167 = vnop
        %s1168 = smul.addr %s17, 2
        %s1169 = scalar_lea.vmem %s8, %s1168
        // Predicated region
        $region291: #{custom-call.22} parent=139 // pred_check
          _
        $region292: #{custom-call.22} parent=139 // pred_check_branch
          %1171 = sbr.rel (0) target = $region294
        $region293: #{custom-call.22} parent=139 // pred_region
          // Predicated region
          $region295: #{custom-call.22} parent=293 // pred_check
            _
          $region296: #{custom-call.22} parent=293 // pred_check_branch
            %1173 = sbr.rel target = $region298
          $region297: #{custom-call.22} parent=293 // pred_region
            // Predicated region
            $region310: #{custom-call.22} parent=297 // pred_check
              _
            $region311: #{custom-call.22} parent=297 // pred_check_branch
              %1189 = sbr.rel (0) target = $region313
            $region312: #{custom-call.22} parent=297 // pred_region
              %s1191 = ssub.s32 4, 1
              loop: start=0, step=1, limit=1
              $region314: #{custom-call.22} parent=312 // loop_pre_header
                _
              $region315: #{custom-call.22} parent=312 // loop_header
                %s1193 = sphi 0, %s1197
                %p1194 = scmp.ge.s32.totalorder %s1193, 1
                %s1198 = sphi %s1015, %s1015
                %s1199 = sphi %s1169, %s1169
              $region316: #{custom-call.22} parent=312 // loop_header_branch
                %1196 = sbr.rel (%p1194) target = $region320
              $region317: #{custom-call.22} parent=312 // loop_body
                %v1200 = vld [vmem:[%s1198] sm:%s1191]
                %1201 = vst [vmem:[%s1199] sm:%s1191] %v1200
              $region318: #{custom-call.22} parent=312 // loop_footer
                %s1197 = sadd.s32 1, %s1193
              $region319: #{custom-call.22} parent=312 // loop_footer_branch
                %1192 = sbr.rel target = $region315
              $region320: #{custom-call.22} parent=312 // loop_exit
                _
            $region313: #{custom-call.22} parent=297 // pred_fallthru
              _
          $region298: #{custom-call.22} parent=293 // pred_fallthru
            _
          // Predicated region
          $region299: #{custom-call.22} parent=293 // pred_check
            _
          $region300: #{custom-call.22} parent=293 // pred_check_branch
            %1175 = sbr.rel (0) target = $region302
          $region301: #{custom-call.22} parent=293 // pred_region
            %s1177 = ssub.s32 4, 1
            loop: start=0, step=1, limit=1
            $region303: #{custom-call.22} parent=301 // loop_pre_header
              _
            $region304: #{custom-call.22} parent=301 // loop_header
              %s1179 = sphi 0, %s1183
              %p1180 = scmp.ge.s32.totalorder %s1179, 1
              %s1184 = sphi %s1015, %s1015
              %s1185 = sphi %s1169, %s1169
            $region305: #{custom-call.22} parent=301 // loop_header_branch
              %1182 = sbr.rel (%p1180) target = $region309
            $region306: #{custom-call.22} parent=301 // loop_body
              %v1186 = vld [vmem:[%s1184] sm:%s1177]
              %1187 = vst [vmem:[%s1185] sm:%s1177] %v1186
            $region307: #{custom-call.22} parent=301 // loop_footer
              %s1183 = sadd.s32 1, %s1179
            $region308: #{custom-call.22} parent=301 // loop_footer_branch
              %1178 = sbr.rel target = $region304
            $region309: #{custom-call.22} parent=301 // loop_exit
              _
          $region302: #{custom-call.22} parent=293 // pred_fallthru
            _
        $region294: #{custom-call.22} parent=139 // pred_fallthru
          _
        %1202 = vnop
        %s1203 = smul.addr %s17, 2
        %s1204 = scalar_lea.vmem %s9, %s1203
        // Predicated region
        $region321: #{custom-call.22} parent=139 // pred_check
          _
        $region322: #{custom-call.22} parent=139 // pred_check_branch
          %1206 = sbr.rel (0) target = $region324
        $region323: #{custom-call.22} parent=139 // pred_region
          // Predicated region
          $region325: #{custom-call.22} parent=323 // pred_check
            _
          $region326: #{custom-call.22} parent=323 // pred_check_branch
            %1208 = sbr.rel target = $region328
          $region327: #{custom-call.22} parent=323 // pred_region
            // Predicated region
            $region340: #{custom-call.22} parent=327 // pred_check
              _
            $region341: #{custom-call.22} parent=327 // pred_check_branch
              %1224 = sbr.rel (0) target = $region343
            $region342: #{custom-call.22} parent=327 // pred_region
              %s1226 = ssub.s32 4, 1
              loop: start=0, step=1, limit=1
              $region344: #{custom-call.22} parent=342 // loop_pre_header
                _
              $region345: #{custom-call.22} parent=342 // loop_header
                %s1228 = sphi 0, %s1232
                %p1229 = scmp.ge.s32.totalorder %s1228, 1
                %s1233 = sphi %s1019, %s1019
                %s1234 = sphi %s1204, %s1204
              $region346: #{custom-call.22} parent=342 // loop_header_branch
                %1231 = sbr.rel (%p1229) target = $region350
              $region347: #{custom-call.22} parent=342 // loop_body
                %v1235 = vld [vmem:[%s1233] sm:%s1226]
                %1236 = vst [vmem:[%s1234] sm:%s1226] %v1235
              $region348: #{custom-call.22} parent=342 // loop_footer
                %s1232 = sadd.s32 1, %s1228
              $region349: #{custom-call.22} parent=342 // loop_footer_branch
                %1227 = sbr.rel target = $region345
              $region350: #{custom-call.22} parent=342 // loop_exit
                _
            $region343: #{custom-call.22} parent=327 // pred_fallthru
              _
          $region328: #{custom-call.22} parent=323 // pred_fallthru
            _
          // Predicated region
          $region329: #{custom-call.22} parent=323 // pred_check
            _
          $region330: #{custom-call.22} parent=323 // pred_check_branch
            %1210 = sbr.rel (0) target = $region332
          $region331: #{custom-call.22} parent=323 // pred_region
            %s1212 = ssub.s32 4, 1
            loop: start=0, step=1, limit=1
            $region333: #{custom-call.22} parent=331 // loop_pre_header
              _
            $region334: #{custom-call.22} parent=331 // loop_header
              %s1214 = sphi 0, %s1218
              %p1215 = scmp.ge.s32.totalorder %s1214, 1
              %s1219 = sphi %s1019, %s1019
              %s1220 = sphi %s1204, %s1204
            $region335: #{custom-call.22} parent=331 // loop_header_branch
              %1217 = sbr.rel (%p1215) target = $region339
            $region336: #{custom-call.22} parent=331 // loop_body
              %v1221 = vld [vmem:[%s1219] sm:%s1212]
              %1222 = vst [vmem:[%s1220] sm:%s1212] %v1221
            $region337: #{custom-call.22} parent=331 // loop_footer
              %s1218 = sadd.s32 1, %s1214
            $region338: #{custom-call.22} parent=331 // loop_footer_branch
              %1213 = sbr.rel target = $region334
            $region339: #{custom-call.22} parent=331 // loop_exit
              _
          $region332: #{custom-call.22} parent=323 // pred_fallthru
            _
        $region324: #{custom-call.22} parent=139 // pred_fallthru
          _
        %1237 = vnop
      $region140: #{custom-call.22} parent=5 // pred_fallthru
        _
      %p1238 = scmp.le.s32.totalorder 2, %s12
      // Predicated region
      $region351: #{custom-call.22} parent=5 // pred_check
        %p1239 = pneg %p1238
      $region352: #{custom-call.22} parent=5 // pred_check_branch
        %1241 = sbr.rel (%p1239) target = $region354
      $region353: #{custom-call.22} parent=5 // pred_region
        %s1242 = ssub.s32 %s12, 2
        // Predicated region
        $region355: #{custom-call.22} parent=353 // pred_check
          %p1243 = pneg %p43
        $region356: #{custom-call.22} parent=353 // pred_check_branch
          %1245 = sbr.rel (%p1243) target = $region358
        $region357: #{custom-call.22} parent=353 // pred_region
          %s1246 = sand.u32 %s28, 1
          %s1247 = sand.u32 %s28, 1
          %s1248 = smul.addr %s1247, 8
          %s1249 = scalar_lea.vmem [#allocation8], %s1248
        $region358: #{custom-call.22} parent=353 // pred_fallthru
          _
        // Predicated region
        $region359: #{custom-call.22} parent=353 // pred_check
          %p1250 = pneg %p71
        $region360: #{custom-call.22} parent=353 // pred_check_branch
          %1252 = sbr.rel (%p1250) target = $region362
        $region361: #{custom-call.22} parent=353 // pred_region
          %s1253 = sand.u32 %s56, 1
          %s1254 = sand.u32 %s56, 1
          %s1255 = smul.addr %s1254, 8
          %s1256 = scalar_lea.vmem [#allocation9], %s1255
        $region362: #{custom-call.22} parent=353 // pred_fallthru
          _
        %s1257 = sand.u32 %s18, 1
        %s1258 = sand.u32 %s18, 1
        %s1259 = smul.addr %s1258, 2
        %s1260 = scalar_lea.vmem [#allocation11], %s1259
        %s1261 = sand.u32 %s18, 1
        %s1262 = sand.u32 %s18, 1
        %s1263 = smul.addr %s1262, 2
        %s1264 = scalar_lea.vmem [#allocation13], %s1263
        %s1265 = sand.u32 %s18, 1
        %s1266 = sand.u32 %s18, 1
        %s1267 = smul.addr %s1266, 2
        %s1268 = scalar_lea.vmem [#allocation15], %s1267
        %s1269 = sand.u32 %s18, 1
        %s1270 = sand.u32 %s18, 1
        %s1271 = smul.addr %s1270, 2
        %s1272 = scalar_lea.vmem [#allocation17], %s1271
      $region354: #{custom-call.22} parent=5 // pred_fallthru
        _
    $region6: #{custom-call.22} parent=1 // loop_footer
      %s16 = sadd.s32 1, %s12
    $region7: #{custom-call.22} parent=1 // loop_footer_branch
      %11 = sbr.rel target = $region3
    $region8: #{custom-call.22} parent=1 // loop_exit
      _

// kernel: reverse
$region0: #{reverse}
  %s0 = inlined_call_operand.vmem [shape: f32[16,3], index: 0, kind: input, shape index: {}]
  %s1 = inlined_call_operand.vmem [shape: f32[16,3], index: 1, kind: output, shape index: {}]
  %v2 = vlaneseq
  %v3 = vsub.s32 2, %v2
  %4 = vset.pattern.permute.xlu0 %v3
  $region1: #{reverse} parent=0
    #allocation0 [shape = 'u8[8192]{0}', space=vmem, size = 0x2000, scoped, tag = 'operand span for operand 0']
    #allocation1 [shape = 'u8[8192]{0}', space=vmem, size = 0x2000, scoped, tag = 'operand span for operand 1']
    // Predicated region
    $region2: #{reverse} parent=1 // pred_check
      _
    $region3: #{reverse} parent=1 // pred_check_branch
      %6 = sbr.rel (0) target = $region5
    $region4: #{reverse} parent=1 // pred_region
      // Predicated region
      $region6: #{reverse} parent=4 // pred_check
        _
      $region7: #{reverse} parent=4 // pred_check_branch
        %8 = sbr.rel (0) target = $region9
      $region8: #{reverse} parent=4 // pred_region
        // Predicated region
        $region21: #{reverse} parent=8 // pred_check
          _
        $region22: #{reverse} parent=8 // pred_check_branch
          %26 = sbr.rel (0) target = $region24
        $region23: #{reverse} parent=8 // pred_region
          loop: start=0, step=1, limit=1
          $region25: #{reverse} parent=23 // loop_pre_header
            _
          $region26: #{reverse} parent=23 // loop_header
            %s28 = sphi 0, %s32
            %p29 = scmp.ge.s32.totalorder %s28, 1
            %s33 = sphi %s0, %s0
            %s34 = sphi [#allocation0], [#allocation0]
          $region27: #{reverse} parent=23 // loop_header_branch
            %31 = sbr.rel (%p29) target = $region31
          $region28: #{reverse} parent=23 // loop_body
            %v35 = vld [vmem:[%s33] sm:$0xff]
            %36 = vst [vmem:[%s34] sm:$0xff] %v35
            %v37 = vld [vmem:[%s33 + $0x8] sm:$0xff]
            %38 = vst [vmem:[%s34 + $0x8] sm:$0xff] %v37
          $region29: #{reverse} parent=23 // loop_footer
            %s32 = sadd.s32 1, %s28
          $region30: #{reverse} parent=23 // loop_footer_branch
            %27 = sbr.rel target = $region26
          $region31: #{reverse} parent=23 // loop_exit
            _
        $region24: #{reverse} parent=8 // pred_fallthru
          _
        // Predicated region
        $region32: #{reverse} parent=8 // pred_check
          _
        $region33: #{reverse} parent=8 // pred_check_branch
          %40 = sbr.rel target = $region35
        $region34: #{reverse} parent=8 // pred_region
          _
        $region35: #{reverse} parent=8 // pred_fallthru
          _
      $region9: #{reverse} parent=4 // pred_fallthru
        _
      // Predicated region
      $region10: #{reverse} parent=4 // pred_check
        _
      $region11: #{reverse} parent=4 // pred_check_branch
        %10 = sbr.rel target = $region13
      $region12: #{reverse} parent=4 // pred_region
        %s12 = ssub.s32 256, 1
        loop: start=0, step=1, limit=1
        $region14: #{reverse} parent=12 // loop_pre_header
          _
        $region15: #{reverse} parent=12 // loop_header
          %s14 = sphi 0, %s18
          %p15 = scmp.ge.s32.totalorder %s14, 1
          %s19 = sphi %s0, %s0
          %s20 = sphi [#allocation0], [#allocation0]
        $region16: #{reverse} parent=12 // loop_header_branch
          %17 = sbr.rel (%p15) target = $region20
        $region17: #{reverse} parent=12 // loop_body
          %v21 = vld [vmem:[%s19] sm:%s12]
          %22 = vst [vmem:[%s20] sm:%s12] %v21
          %v23 = vld [vmem:[%s19 + $0x8] sm:%s12]
          %24 = vst [vmem:[%s20 + $0x8] sm:%s12] %v23
        $region18: #{reverse} parent=12 // loop_footer
          %s18 = sadd.s32 1, %s14
        $region19: #{reverse} parent=12 // loop_footer_branch
          %13 = sbr.rel target = $region15
        $region20: #{reverse} parent=12 // loop_exit
          _
      $region13: #{reverse} parent=4 // pred_fallthru
        _
    $region5: #{reverse} parent=1 // pred_fallthru
      _
    %41 = vnop
    %v42 = vld [vmem:[#allocation0] sm:$0xff]
    %43 = vperm.xlu0 %4, %v42
    %v44 = vpop.permute.xlu0 %43
    %45 = vst [vmem:[#allocation1] sm:$0xff] %v44
    %s46 = scalar_lea.vmem [#allocation1], 8
    %s47 = scalar_lea.vmem [#allocation0], 8
    %v48 = vld [vmem:[%s47] sm:$0xff]
    %49 = vperm.xlu0 %4, %v48
    %v50 = vpop.permute.xlu0 %49
    %51 = vst [vmem:[%s46] sm:$0xff] %v50
    // Predicated region
    $region36: #{reverse} parent=1 // pred_check
      _
    $region37: #{reverse} parent=1 // pred_check_branch
      %53 = sbr.rel (0) target = $region39
    $region38: #{reverse} parent=1 // pred_region
      // Predicated region
      $region40: #{reverse} parent=38 // pred_check
        _
      $region41: #{reverse} parent=38 // pred_check_branch
        %55 = sbr.rel (0) target = $region43
      $region42: #{reverse} parent=38 // pred_region
        // Predicated region
        $region55: #{reverse} parent=42 // pred_check
          _
        $region56: #{reverse} parent=42 // pred_check_branch
          %73 = sbr.rel (0) target = $region58
        $region57: #{reverse} parent=42 // pred_region
          loop: start=0, step=1, limit=1
          $region59: #{reverse} parent=57 // loop_pre_header
            _
          $region60: #{reverse} parent=57 // loop_header
            %s75 = sphi 0, %s79
            %p76 = scmp.ge.s32.totalorder %s75, 1
            %s80 = sphi [#allocation1], [#allocation1]
            %s81 = sphi %s1, %s1
          $region61: #{reverse} parent=57 // loop_header_branch
            %78 = sbr.rel (%p76) target = $region65
          $region62: #{reverse} parent=57 // loop_body
            %v82 = vld [vmem:[%s80] sm:$0xff]
            %83 = vst [vmem:[%s81] sm:$0xff] %v82
            %v84 = vld [vmem:[%s80 + $0x8] sm:$0xff]
            %85 = vst [vmem:[%s81 + $0x8] sm:$0xff] %v84
          $region63: #{reverse} parent=57 // loop_footer
            %s79 = sadd.s32 1, %s75
          $region64: #{reverse} parent=57 // loop_footer_branch
            %74 = sbr.rel target = $region60
          $region65: #{reverse} parent=57 // loop_exit
            _
        $region58: #{reverse} parent=42 // pred_fallthru
          _
        // Predicated region
        $region66: #{reverse} parent=42 // pred_check
          _
        $region67: #{reverse} parent=42 // pred_check_branch
          %87 = sbr.rel target = $region69
        $region68: #{reverse} parent=42 // pred_region
          _
        $region69: #{reverse} parent=42 // pred_fallthru
          _
      $region43: #{reverse} parent=38 // pred_fallthru
        _
      // Predicated region
      $region44: #{reverse} parent=38 // pred_check
        _
      $region45: #{reverse} parent=38 // pred_check_branch
        %57 = sbr.rel target = $region47
      $region46: #{reverse} parent=38 // pred_region
        %s59 = ssub.s32 256, 1
        loop: start=0, step=1, limit=1
        $region48: #{reverse} parent=46 // loop_pre_header
          _
        $region49: #{reverse} parent=46 // loop_header
          %s61 = sphi 0, %s65
          %p62 = scmp.ge.s32.totalorder %s61, 1
          %s66 = sphi [#allocation1], [#allocation1]
          %s67 = sphi %s1, %s1
        $region50: #{reverse} parent=46 // loop_header_branch
          %64 = sbr.rel (%p62) target = $region54
        $region51: #{reverse} parent=46 // loop_body
          %v68 = vld [vmem:[%s66] sm:%s59]
          %69 = vst [vmem:[%s67] sm:%s59] %v68
          %v70 = vld [vmem:[%s66 + $0x8] sm:%s59]
          %71 = vst [vmem:[%s67 + $0x8] sm:%s59] %v70
        $region52: #{reverse} parent=46 // loop_footer
          %s65 = sadd.s32 1, %s61
        $region53: #{reverse} parent=46 // loop_footer_branch
          %60 = sbr.rel target = $region49
        $region54: #{reverse} parent=46 // loop_exit
          _
      $region47: #{reverse} parent=38 // pred_fallthru
        _
    $region39: #{reverse} parent=1 // pred_fallthru
      _
    %88 = vnop

// kernel: custom-call.16
$region0: #{custom-call.16}
  %s0 = inlined_call_operand.vmem [shape: f32[16,3,3], index: 0, kind: input, shape index: {}]
  %s1 = inlined_call_operand.vmem [shape: f32[16,3,3], index: 1, kind: output, shape index: {0}]
  %s2 = inlined_call_operand.vmem [shape: f32[16,3], index: 2, kind: output, shape index: {1}]
  %3 = xla_tuple %s1, %s2
  $region1: #{custom-call.16} parent=0
    #allocation0 [shape = 'u8[4096]{0}', space=vmem, size = 0x1000, scoped, tag = 'operand span for operand 0']
    #allocation1 [shape = 'u8[4096]{0}', space=vmem, size = 0x1000, scoped, tag = 'packed  for operand 0']
    #allocation2 [shape = 'u8[4096]{0}', space=vmem, size = 0x1000, scoped, tag = 'operand span for operand 1']
    #allocation3 [shape = 'u8[4096]{0}', space=vmem, size = 0x1000, scoped, tag = 'packed  for operand 1']
    #allocation4 [shape = 'u8[8192]{0}', space=vmem, size = 0x2000, scoped, tag = 'operand span for operand 2']
    loop: start=0, step=1, limit=18
    $region2: #{custom-call.16} parent=1 // loop_pre_header
      _
    $region3: #{custom-call.16} parent=1 // loop_header
      %s5 = sphi 0, %s9
      %p6 = scmp.ge.s32.totalorder %s5, 18
      %s12 = sphi 0, %s31
      %s13 = sphi 0, %s27
      %s14 = sphi 0, %s23
      %s15 = sphi 0, %s12
      %s16 = sphi 0, %s13
      %s17 = sphi 0, %s14
      %s18 = sphi 0, %s15
      %s19 = sphi 0, %s16
      %s20 = sphi 0, %s17
      %s46 = sphi 0, %s48
      %s49 = sphi 0, %s46
      %s50 = sphi 0, %s49
      %s66 = sphi 0, %s50
    $region4: #{custom-call.16} parent=1 // loop_header_branch
      %8 = sbr.rel (%p6) target = $region8
    $region5: #{custom-call.16} parent=1 // loop_body
      %s10 = ssub.s32 %s5, 1
      %s11 = ssub.s32 %s5, 2
      %s21 = sadd.s32 1, %s14
      %p22 = scmp.ge.s32.totalorder %s21, 1
      %s23 = scalar_select %p22, 0, %s21
      %s24 = sadd.s32 1, %s13
      %s25 = scalar_select %p22, %s24, %s13
      %p26 = scmp.ge.s32.totalorder %s25, 1
      %s27 = scalar_select %p26, 0, %s25
      %s28 = sadd.s32 1, %s12
      %s29 = scalar_select %p26, %s28, %s12
      %p30 = scmp.ge.s32.totalorder %s29, 16
      %s31 = scalar_select %p30, 0, %s29
      %p32 = scmp.lt.s32.totalorder %s12, 0
      %s33 = ssub.s32 0, %s12
      %s34 = scalar_select %p32, %s33, %s12
      %s35 = sshrl.u32 %s34, 3
      %s36 = ssub.s32 0, %s35
      %s37 = scalar_select %p32, %s36, %s35
      %p38 = scmp.lt.s32.totalorder %s31, 0
      %s39 = ssub.s32 0, %s31
      %s40 = scalar_select %p38, %s39, %s31
      %s41 = sshrl.u32 %s40, 3
      %s42 = ssub.s32 0, %s41
      %s43 = scalar_select %p38, %s42, %s41
      %s44 = ssub.s32 %s37, %s43
      %p45 = scmp.eq.s32.totalorder %s44, 0
      %s47 = sadd.s32 %s46, 1
      %s48 = scalar_select %p45, %s46, %s47
      %p51 = pneg %p45
      %p52 = scmp.eq.s32.totalorder %s5, 15
      %p53 = por %p51, %p52
      %p54 = scmp.ne.s32.totalorder %s46, %s49
      %p55 = scmp.eq.s32.totalorder %s5, 0
      %p56 = por %p54, %p55
      %p57 = scmp.ne.s32.totalorder %s46, %s49
      %p58 = scmp.eq.s32.totalorder %s10, 15
      %p59 = por %p57, %p58
      %p60 = scmp.ne.s32.totalorder %s49, %s50
      %p61 = scmp.eq.s32.totalorder %s10, 0
      %p62 = por %p60, %p61
      %p63 = scmp.ne.s32.totalorder %s49, %s50
      %p64 = scmp.eq.s32.totalorder %s11, 15
      %p65 = por %p63, %p64
      %p67 = scmp.ne.s32.totalorder %s50, %s66
      %p68 = scmp.eq.s32.totalorder %s11, 0
      %p69 = por %p67, %p68
      %p70 = scmp.le.s32.totalorder 1, %s5
      %p71 = scmp.lt.s32.totalorder %s5, 17
      %p72 = pnand %p70, %p71
      %p73 = pneg %p72
      // Predicated region
      $region9: #{custom-call.16} parent=5 // pred_check
        _
      $region10: #{custom-call.16} parent=5 // pred_check_branch
        %75 = sbr.rel (%p72) target = $region12
      $region11: #{custom-call.16} parent=5 // pred_region
        %s76 = ssub.s32 %s5, 1
      $region12: #{custom-call.16} parent=5 // pred_fallthru
        _
      %p77 = scmp.lt.s32.totalorder %s5, 16
      // Predicated region
      $region13: #{custom-call.16} parent=5 // pred_check
        %p78 = pneg %p77
      $region14: #{custom-call.16} parent=5 // pred_check_branch
        %80 = sbr.rel (%p78) target = $region16
      $region15: #{custom-call.16} parent=5 // pred_region
        %s81 = sand.u32 %s5, 1
        %s82 = sand.u32 %s5, 1
        %s83 = smul.addr %s82, 4
        %s84 = scalar_lea.vmem [#allocation1], %s83
        %s85 = sadd.s32 %s14, %s13
        %s86 = sadd.s32 %s85, %s12
        %s87 = smul.addr %s86, 4
        %s88 = scalar_lea.vmem %s0, %s87
        // Predicated region
        $region17: #{custom-call.16} parent=15 // pred_check
          _
        $region18: #{custom-call.16} parent=15 // pred_check_branch
          %90 = sbr.rel (0) target = $region20
        $region19: #{custom-call.16} parent=15 // pred_region
          // Predicated region
          $region21: #{custom-call.16} parent=19 // pred_check
            _
          $region22: #{custom-call.16} parent=19 // pred_check_branch
            %92 = sbr.rel target = $region24
          $region23: #{custom-call.16} parent=19 // pred_region
            // Predicated region
            $region36: #{custom-call.16} parent=23 // pred_check
              _
            $region37: #{custom-call.16} parent=23 // pred_check_branch
              %108 = sbr.rel (0) target = $region39
            $region38: #{custom-call.16} parent=23 // pred_region
              %s110 = ssub.s32 16, 1
              loop: start=0, step=1, limit=1
              $region40: #{custom-call.16} parent=38 // loop_pre_header
                _
              $region41: #{custom-call.16} parent=38 // loop_header
                %s112 = sphi 0, %s116
                %p113 = scmp.ge.s32.totalorder %s112, 1
                %s117 = sphi %s88, %s88
                %s118 = sphi %s84, %s84
              $region42: #{custom-call.16} parent=38 // loop_header_branch
                %115 = sbr.rel (%p113) target = $region46
              $region43: #{custom-call.16} parent=38 // loop_body
                %v119 = vld [vmem:[%s117] sm:%s110]
                %120 = vst [vmem:[%s118] sm:%s110] %v119
              $region44: #{custom-call.16} parent=38 // loop_footer
                %s116 = sadd.s32 1, %s112
              $region45: #{custom-call.16} parent=38 // loop_footer_branch
                %111 = sbr.rel target = $region41
              $region46: #{custom-call.16} parent=38 // loop_exit
                _
            $region39: #{custom-call.16} parent=23 // pred_fallthru
              _
          $region24: #{custom-call.16} parent=19 // pred_fallthru
            _
          // Predicated region
          $region25: #{custom-call.16} parent=19 // pred_check
            _
          $region26: #{custom-call.16} parent=19 // pred_check_branch
            %94 = sbr.rel (0) target = $region28
          $region27: #{custom-call.16} parent=19 // pred_region
            %s96 = ssub.s32 16, 1
            loop: start=0, step=1, limit=1
            $region29: #{custom-call.16} parent=27 // loop_pre_header
              _
            $region30: #{custom-call.16} parent=27 // loop_header
              %s98 = sphi 0, %s102
              %p99 = scmp.ge.s32.totalorder %s98, 1
              %s103 = sphi %s88, %s88
              %s104 = sphi %s84, %s84
            $region31: #{custom-call.16} parent=27 // loop_header_branch
              %101 = sbr.rel (%p99) target = $region35
            $region32: #{custom-call.16} parent=27 // loop_body
              %v105 = vld [vmem:[%s103] sm:%s96]
              %106 = vst [vmem:[%s104] sm:%s96] %v105
            $region33: #{custom-call.16} parent=27 // loop_footer
              %s102 = sadd.s32 1, %s98
            $region34: #{custom-call.16} parent=27 // loop_footer_branch
              %97 = sbr.rel target = $region30
            $region35: #{custom-call.16} parent=27 // loop_exit
              _
          $region28: #{custom-call.16} parent=19 // pred_fallthru
            _
        $region20: #{custom-call.16} parent=15 // pred_fallthru
          _
        %121 = vnop
      $region16: #{custom-call.16} parent=5 // pred_fallthru
        _
      %p122 = scmp.le.s32.totalorder 1, %s5
      %p123 = scmp.lt.s32.totalorder %s5, 17
      %p124 = pnand %p122, %p123
      %p125 = pneg %p124
      // Predicated region
      $region47: #{custom-call.16} parent=5 // pred_check
        _
      $region48: #{custom-call.16} parent=5 // pred_check_branch
        %127 = sbr.rel (%p124) target = $region50
      $region49: #{custom-call.16} parent=5 // pred_region
        #allocation5 [shape = 'f32[3,128]{1,0}', space=vmem, size = 0x1000, scoped, tag = 'scratch for Householder reflectors']
        %s128 = ssub.s32 %s5, 1
        %s129 = sand.u32 %s10, 1
        %s130 = sand.u32 %s10, 1
        %s131 = smul.addr %s130, 4
        %s132 = scalar_lea.vmem [#allocation1], %s131
        %s133 = sand.u32 %s10, 1
        %s134 = sand.u32 %s10, 1
        %s135 = smul.addr %s134, 4
        %s136 = scalar_lea.vmem [#allocation1], %s135
        %s137 = sand.u32 %s10, 1
        %s138 = sand.u32 %s10, 1
        %s139 = smul.addr %s138, 4
        %s140 = scalar_lea.vmem [#allocation3], %s139
        %p141 = pneg %p62
        %p142 = pneg %p59
        %s143 = sand.u32 %s49, 1
        %s144 = sand.u32 %s49, 1
        %s145 = smul.addr %s144, 8
        %s146 = scalar_lea.vmem [#allocation4], %s145
        %s148 = sshll.u32 1, 4
        %s149 = ssub.s32 %s148, 1
        %v150 = vld [vmem:[%s136] sm:%s149]
        %151 = vst [vmem:[#allocation0] sm:%s149] %v150
        %p152 = scmp.lt.s32.totalorder %s15, 0
        %s153 = ssub.s32 0, %s15
        %s154 = scalar_select %p152, %s153, %s15
        %s155 = sshrl.u32 %s154, 3
        %s156 = ssub.s32 0, %s155
        %s157 = scalar_select %p152, %s156, %s155
        %s158 = sand.u32 %s15, 7
        %s159 = scalar_lea.vmem %s146, %s158 [#allocation4]
        %v160 = vld [vmem:[#allocation0] sm:$0xff]
        %161 = vst [vmem:[#allocation2] sm:$0xff] %v160
        %162 = vst [vmem:[%s159] sm:$0x1] 0.0
        loop: start=0, step=1, limit=3
        $region51: #{custom-call.16} parent=49 // loop_pre_header
          _
        $region52: #{custom-call.16} parent=49 // loop_header
          %s164 = sphi 0, %s168
          %p165 = scmp.ge.s32.totalorder %s164, 3
        $region53: #{custom-call.16} parent=49 // loop_header_branch
          %167 = sbr.rel (%p165) target = $region57
        $region54: #{custom-call.16} parent=49 // loop_body
          %v169 = vld [vmem:[#allocation2] sm:$0xff]
          %v170 = vlaneseq
          %v171 = vshrl.u32 %v170, 7
          %v173 = vstv %s164
          %vm174 = vcmp.gt.s32.totalorder %v171, %v173
          %vm175 = vcmp.lt.s32.totalorder %v171, 3
          %vm176 = vmand %vm174, %vm175
          %v177 = vsel %vm176, %v169, 0.0
          %v178 = vmul.f32 %v177, %v177
          %v179 = vrot.slane %v178, 4
          %v180 = vadd.f32 %v178, %v179
          %v181 = vrot.slane %v180, 2
          %v182 = vadd.f32 %v180, %v181
          %v183 = vrot.slane %v182, 1
          %v184 = vadd.f32 %v182, %v183
          %v185 = vrsqrt.pop %v184
          %v186 = vmul.f32 %v184, %v185
          %vm187 = vcmp.eq.f32.partialorder %v184, inf
          %v188 = vsel %vm187, %v184, %v186
          %vm189 = vcmp.eq.f32.partialorder %v184, 0.0
          %v190 = vand.u32 %v184, 2147483648
          %v191 = vsel %vm189, %v190, %v188
          %vm192 = vcmp.eq.f32.partialorder %v184, 0.0
          %s193 = sshrl.u32 %s164, 3
          %s194 = sand.u32 %s164, 7
          %s195 = smul.addr %s193, 8
          %s196 = sadd.s32 %s194, %s195
          %s197 = scalar_lea.vmem [#allocation2], %s196
          %v198 = vld [vmem:[%s197] ss:$0 sm:$0xff]
          %v199 = vand.u32 2147483647, %v198
          %v200 = vmax.f32 %v199, 0.0
          %v201 = vand.u32 2147483647, %v191
          %v202 = vmax.f32 %v200, %v201
          %v203 = vrcp.pop %v202
          %v204 = vmul.f32 %v199, %v203
          %v205 = vmul.f32 %v204, %v204
          %v206 = vrcp.pop %v202
          %v207 = vmul.f32 0.0, %v206
          %v208 = vmul.f32 %v207, %v207
          %v209 = vadd.f32 %v205, %v208
          %v210 = vrcp.pop %v202
          %v211 = vmul.f32 %v201, %v210
          %v212 = vmul.f32 %v211, %v211
          %v213 = vadd.f32 %v209, %v212
          %vm214 = vcmp.eq.f32.partialorder %v202, 0.0
          %v215 = vrsqrt.pop %v213
          %v216 = vmul.f32 %v213, %v215
          %vm217 = vcmp.eq.f32.partialorder %v213, inf
          %v218 = vsel %vm217, %v213, %v216
          %vm219 = vcmp.eq.f32.partialorder %v213, 0.0
          %v220 = vand.u32 %v213, 2147483648
          %v221 = vsel %vm219, %v220, %v218
          %v222 = vmul.f32 %v202, %v221
          %v223 = vsel %vm214, 0.0, %v222
          %vm224 = vcmp.lt.f32.partialorder %v198, 0.0
          %v225 = vxor.u32 %v223, 2147483648
          %v226 = vsel %vm224, %v223, %v225
          %v227 = vsub.f32 %v226, %v198
          %v228 = vrcp.pop %v226
          %v229 = vmul.f32 %v227, %v228
          %v230 = vsel %vm192, %v198, %v226
          %v231 = vsel %vm192, 0.0, %v229
          %v232 = vsub.f32 %v198, %v230
          %s233 = smov [#allocation2]
          %v234 = vlaneseq
          %v235 = vshrl.u32 %v234, 7
          %v236 = vmov %v235
          %v237 = vld [vmem:[%s233] sm:$0xff]
          %v239 = vstv %s164
          %vm240 = vcmp.gt.s32.totalorder %v236, %v239
          %vm241 = vcmp.lt.s32.totalorder %v236, 3
          %vm242 = vmand %vm240, %vm241
          %v243 = vsel %vm242, %v237, 0.0
          %v244 = vrcp.pop %v232
          %v245 = vmul.f32 %v243, %v244
          %v246 = vsel %vm192, 0.0, %v245
          %v247 = vstv %s164
          %v248 = vlaneseq
          %v249 = vand.u32 %v248, 127
          %vm250 = vcmp.eq.s32.totalorder %v249, %v247
          %v251 = vsel %vm250, %v246, 0.0
          %252 = vadd.xlane.f32.xlu0 %v251
          %v253 = vpop.xlane.xlu0 %252
          %254 = vst [vmem:[#allocation5] sm:$0xff] %v253
          %s255 = scalar_lea.vmem [#allocation5], %s164
          %256 = vst [vmem:[%s255] sm:$0x1] 1.0
          %v257 = vstv %s164
          %v258 = vlaneseq
          %v259 = vand.u32 %v258, 127
          %vm260 = vcmp.eq.s32.totalorder %v259, %v257
          %v261 = vsel %vm260, %v231, 0.0
          %262 = vadd.xlane.f32.xlu0 %v261
          %v263 = vpop.xlane.xlu0 %262
          %v264 = vstv %s164
          %v265 = vlaneseq
          %v266 = vand.u32 %v265, 127
          %vm267 = vcmp.eq.s32.totalorder %v266, %v264
          %v268 = vld [vmem:[%s159] ss:$0 sm:$0xff]
          %v269 = vsel %vm267, %v263, %v268
          %270 = vst [vmem:[%s159] sm:$0x1] %v269
          %s271 = smov [#allocation2]
          %s272 = smov [#allocation5]
          %v273 = vlaneseq
          %v274 = vshrl.u32 %v273, 7
          %v275 = vmov %v274
          %v277 = vld [vmem:[%s272] sm:$0xff]
          %v278 = vld [vmem:[%s271] sm:$0xff]
          %v279 = vmul.f32 %v277, %v278
          %vm280 = vcmp.lt.s32.totalorder %v275, 3
          %v281 = vsel %vm280, %v279, 0.0
          %v282 = vrot.slane %v281, 4
          %v283 = vadd.f32 %v281, %v282
          %v284 = vrot.slane %v283, 2
          %v285 = vadd.f32 %v283, %v284
          %v286 = vrot.slane %v285, 1
          %v287 = vadd.f32 %v285, %v286
          %s288 = smov %s271
          %s289 = smov %s272
          %v290 = vlaneseq
          %v291 = vshrl.u32 %v290, 7
          %v292 = vmov %v291
          %v293 = vmul.f32 %v287, %v263
          %v295 = vlaneseq
          %v296 = vand.u32 %v295, 127
          %v297 = vld [vmem:[%s289] sm:$0xff]
          %v298 = vmul.f32 %v297, %v293
          %v299 = vld [vmem:[%s288] sm:$0xff]
          %v300 = vstv %s164
          %vm301 = vcmp.gt.s32.totalorder %v296, %v300
          %v302 = vsub.f32 %v299, %v298
          %v303 = vsel %vm301, %v302, %v299
          %v304 = vstv %s164
          %v305 = vlaneseq
          %v306 = vand.u32 %v305, 127
          %vm307 = vcmp.eq.s32.totalorder %v306, %v304
          %v308 = vstv %s164
          %vm309 = vcmp.ge.s32.totalorder %v292, %v308
          %vm310 = vmand %vm307, %vm309
          %v311 = vsel %vm310, %v297, %v303
          %312 = vst [vmem:[%s288] sm:$0xff] %v311
          %s313 = scalar_lea.vmem %s288, %s164
          %v314 = vld [vmem:[%s313] ss:$0 sm:$0xff]
          %v315 = vstv %s164
          %v316 = vlaneseq
          %v317 = vand.u32 %v316, 127
          %vm318 = vcmp.eq.s32.totalorder %v317, %v315
          %v319 = vsel %vm318, %v230, %v314
          %320 = vst [vmem:[%s313] sm:$0x1] %v319
        $region55: #{custom-call.16} parent=49 // loop_footer
          %s168 = sadd.s32 1, %s164
        $region56: #{custom-call.16} parent=49 // loop_footer_branch
          %163 = sbr.rel target = $region52
        $region57: #{custom-call.16} parent=49 // loop_exit
          _
        %s322 = sshll.u32 1, 4
        %s323 = ssub.s32 %s322, 1
        %v325 = vld [vmem:[#allocation2] sm:%s323]
        %s326 = sshll.u32 1, 4
        %s327 = ssub.s32 %s326, 1
        %328 = vst [vmem:[%s140] sm:%s327] %v325
        %s329 = sand.u32 %s10, 1
        %s330 = sand.u32 %s10, 1
        %s331 = smul.addr %s330, 4
        %s332 = scalar_lea.vmem [#allocation3], %s331
        %s333 = sand.u32 %s49, 1
        %s334 = sand.u32 %s49, 1
        %s335 = smul.addr %s334, 8
        %s336 = scalar_lea.vmem [#allocation4], %s335
        %s337 = sadd.s32 %s17, %s16
        %s338 = sadd.s32 %s337, %s15
        %s339 = smul.addr %s338, 4
        %s340 = scalar_lea.vmem %s1, %s339
        // Predicated region
        $region58: #{custom-call.16} parent=49 // pred_check
          _
        $region59: #{custom-call.16} parent=49 // pred_check_branch
          %342 = sbr.rel (0) target = $region61
        $region60: #{custom-call.16} parent=49 // pred_region
          // Predicated region
          $region62: #{custom-call.16} parent=60 // pred_check
            _
          $region63: #{custom-call.16} parent=60 // pred_check_branch
            %344 = sbr.rel target = $region65
          $region64: #{custom-call.16} parent=60 // pred_region
            // Predicated region
            $region77: #{custom-call.16} parent=64 // pred_check
              _
            $region78: #{custom-call.16} parent=64 // pred_check_branch
              %360 = sbr.rel (0) target = $region80
            $region79: #{custom-call.16} parent=64 // pred_region
              %s362 = ssub.s32 16, 1
              loop: start=0, step=1, limit=1
              $region81: #{custom-call.16} parent=79 // loop_pre_header
                _
              $region82: #{custom-call.16} parent=79 // loop_header
                %s364 = sphi 0, %s368
                %p365 = scmp.ge.s32.totalorder %s364, 1
                %s369 = sphi %s332, %s332
                %s370 = sphi %s340, %s340
              $region83: #{custom-call.16} parent=79 // loop_header_branch
                %367 = sbr.rel (%p365) target = $region87
              $region84: #{custom-call.16} parent=79 // loop_body
                %v371 = vld [vmem:[%s369] sm:%s362]
                %372 = vst [vmem:[%s370] sm:%s362] %v371
              $region85: #{custom-call.16} parent=79 // loop_footer
                %s368 = sadd.s32 1, %s364
              $region86: #{custom-call.16} parent=79 // loop_footer_branch
                %363 = sbr.rel target = $region82
              $region87: #{custom-call.16} parent=79 // loop_exit
                _
            $region80: #{custom-call.16} parent=64 // pred_fallthru
              _
          $region65: #{custom-call.16} parent=60 // pred_fallthru
            _
          // Predicated region
          $region66: #{custom-call.16} parent=60 // pred_check
            _
          $region67: #{custom-call.16} parent=60 // pred_check_branch
            %346 = sbr.rel (0) target = $region69
          $region68: #{custom-call.16} parent=60 // pred_region
            %s348 = ssub.s32 16, 1
            loop: start=0, step=1, limit=1
            $region70: #{custom-call.16} parent=68 // loop_pre_header
              _
            $region71: #{custom-call.16} parent=68 // loop_header
              %s350 = sphi 0, %s354
              %p351 = scmp.ge.s32.totalorder %s350, 1
              %s355 = sphi %s332, %s332
              %s356 = sphi %s340, %s340
            $region72: #{custom-call.16} parent=68 // loop_header_branch
              %353 = sbr.rel (%p351) target = $region76
            $region73: #{custom-call.16} parent=68 // loop_body
              %v357 = vld [vmem:[%s355] sm:%s348]
              %358 = vst [vmem:[%s356] sm:%s348] %v357
            $region74: #{custom-call.16} parent=68 // loop_footer
              %s354 = sadd.s32 1, %s350
            $region75: #{custom-call.16} parent=68 // loop_footer_branch
              %349 = sbr.rel target = $region71
            $region76: #{custom-call.16} parent=68 // loop_exit
              _
          $region69: #{custom-call.16} parent=60 // pred_fallthru
            _
        $region61: #{custom-call.16} parent=49 // pred_fallthru
          _
        %373 = vnop
        // Predicated region
        $region88: #{custom-call.16} parent=49 // pred_check
          %p374 = pneg %p59
        $region89: #{custom-call.16} parent=49 // pred_check_branch
          %376 = sbr.rel (%p374) target = $region91
        $region90: #{custom-call.16} parent=49 // pred_region
          %p377 = scmp.lt.s32.totalorder %s15, 0
          %s378 = ssub.s32 0, %s15
          %s379 = scalar_select %p377, %s378, %s15
          %s380 = sshrl.u32 %s379, 3
          %s381 = ssub.s32 0, %s380
          %s382 = scalar_select %p377, %s381, %s380
          %s383 = smul.addr %s382, 8
          %s384 = scalar_lea.vmem %s2, %s383
          // Predicated region
          $region92: #{custom-call.16} parent=90 // pred_check
            _
          $region93: #{custom-call.16} parent=90 // pred_check_branch
            %386 = sbr.rel (0) target = $region95
          $region94: #{custom-call.16} parent=90 // pred_region
            // Predicated region
            $region96: #{custom-call.16} parent=94 // pred_check
              _
            $region97: #{custom-call.16} parent=94 // pred_check_branch
              %388 = sbr.rel (0) target = $region99
            $region98: #{custom-call.16} parent=94 // pred_region
              // Predicated region
              $region111: #{custom-call.16} parent=98 // pred_check
                _
              $region112: #{custom-call.16} parent=98 // pred_check_branch
                %404 = sbr.rel (0) target = $region114
              $region113: #{custom-call.16} parent=98 // pred_region
                loop: start=0, step=1, limit=1
                $region115: #{custom-call.16} parent=113 // loop_pre_header
                  _
                $region116: #{custom-call.16} parent=113 // loop_header
                  %s406 = sphi 0, %s410
                  %p407 = scmp.ge.s32.totalorder %s406, 1
                  %s411 = sphi %s336, %s336
                  %s412 = sphi %s384, %s384
                $region117: #{custom-call.16} parent=113 // loop_header_branch
                  %409 = sbr.rel (%p407) target = $region121
                $region118: #{custom-call.16} parent=113 // loop_body
                  %v413 = vld [vmem:[%s411] sm:$0xff]
                  %414 = vst [vmem:[%s412] sm:$0xff] %v413
                $region119: #{custom-call.16} parent=113 // loop_footer
                  %s410 = sadd.s32 1, %s406
                $region120: #{custom-call.16} parent=113 // loop_footer_branch
                  %405 = sbr.rel target = $region116
                $region121: #{custom-call.16} parent=113 // loop_exit
                  _
              $region114: #{custom-call.16} parent=98 // pred_fallthru
                _
              // Predicated region
              $region122: #{custom-call.16} parent=98 // pred_check
                _
              $region123: #{custom-call.16} parent=98 // pred_check_branch
                %416 = sbr.rel target = $region125
              $region124: #{custom-call.16} parent=98 // pred_region
                _
              $region125: #{custom-call.16} parent=98 // pred_fallthru
                _
            $region99: #{custom-call.16} parent=94 // pred_fallthru
              _
            // Predicated region
            $region100: #{custom-call.16} parent=94 // pred_check
              _
            $region101: #{custom-call.16} parent=94 // pred_check_branch
              %390 = sbr.rel target = $region103
            $region102: #{custom-call.16} parent=94 // pred_region
              %s392 = ssub.s32 256, 1
              loop: start=0, step=1, limit=1
              $region104: #{custom-call.16} parent=102 // loop_pre_header
                _
              $region105: #{custom-call.16} parent=102 // loop_header
                %s394 = sphi 0, %s398
                %p395 = scmp.ge.s32.totalorder %s394, 1
                %s399 = sphi %s336, %s336
                %s400 = sphi %s384, %s384
              $region106: #{custom-call.16} parent=102 // loop_header_branch
                %397 = sbr.rel (%p395) target = $region110
              $region107: #{custom-call.16} parent=102 // loop_body
                %v401 = vld [vmem:[%s399] sm:%s392]
                %402 = vst [vmem:[%s400] sm:%s392] %v401
              $region108: #{custom-call.16} parent=102 // loop_footer
                %s398 = sadd.s32 1, %s394
              $region109: #{custom-call.16} parent=102 // loop_footer_branch
                %393 = sbr.rel target = $region105
              $region110: #{custom-call.16} parent=102 // loop_exit
                _
            $region103: #{custom-call.16} parent=94 // pred_fallthru
              _
          $region95: #{custom-call.16} parent=90 // pred_fallthru
            _
          %417 = vnop
        $region91: #{custom-call.16} parent=49 // pred_fallthru
          _
      $region50: #{custom-call.16} parent=5 // pred_fallthru
        _
      %p418 = scmp.le.s32.totalorder 2, %s5
      // Predicated region
      $region126: #{custom-call.16} parent=5 // pred_check
        %p419 = pneg %p418
      $region127: #{custom-call.16} parent=5 // pred_check_branch
        %421 = sbr.rel (%p419) target = $region129
      $region128: #{custom-call.16} parent=5 // pred_region
        %s422 = ssub.s32 %s5, 2
        %s423 = sand.u32 %s11, 1
        %s424 = sand.u32 %s11, 1
        %s425 = smul.addr %s424, 4
        %s426 = scalar_lea.vmem [#allocation3], %s425
        // Predicated region
        $region130: #{custom-call.16} parent=128 // pred_check
          %p427 = pneg %p65
        $region131: #{custom-call.16} parent=128 // pred_check_branch
          %429 = sbr.rel (%p427) target = $region133
        $region132: #{custom-call.16} parent=128 // pred_region
          %s430 = sand.u32 %s50, 1
          %s431 = sand.u32 %s50, 1
          %s432 = smul.addr %s431, 8
          %s433 = scalar_lea.vmem [#allocation4], %s432
        $region133: #{custom-call.16} parent=128 // pred_fallthru
          _
      $region129: #{custom-call.16} parent=5 // pred_fallthru
        _
    $region6: #{custom-call.16} parent=1 // loop_footer
      %s9 = sadd.s32 1, %s5
    $region7: #{custom-call.16} parent=1 // loop_footer_branch
      %4 = sbr.rel target = $region3
    $region8: #{custom-call.16} parent=1 // loop_exit
      _

// kernel: residue_projection.3
$region0: #{residue_projection.3}
  #allocation0 [shape = 'u32[]', space=smem, size = 0x4, offset = 0x4, fixed_abs, tag = 'smem constant byte address 0x4 - core index']
  #allocation1 [shape = 'u32[144,128]{1,0:T(1,128)}', space=vmem, size = 0x12000, scoped, tag = 'internal scratch']
  %s0 = inlined_call_operand.vmem [shape: f32[16,12], index: 0, kind: input, shape index: {}]
  %s1 = inlined_call_operand.vmem [shape: f32[12,12], index: 1, kind: input, shape index: {}]
  %s2 = inlined_call_operand.vmem [shape: f32[16,12], index: 2, kind: output, shape index: {}]
  %s3 = sld [smem:[#allocation0]]
  $region41: #{residue_projection.3} parent=0
    _
  %s5 = ssub.s32 1, %s3
  %s6 = scalar_select 0, %s5, %s3
  loop: start=0, step=1, limit=4
  $region2: #{residue_projection.3} parent=0 // loop_pre_header
    _
  $region3: #{residue_projection.3} parent=0 // loop_header
    %s8 = sphi 0, %s12
    %p9 = scmp.ge.s32.totalorder %s8, 4
    %s18 = sphi 0, %s20
    %s21 = sphi 0, %s18
    %s22 = sphi 0, %s21
    %s38 = sphi 0, %s22
    %s42 = sphi 0, %s42
    %s44 = sphi 0, %s42
    %s45 = sphi 0, %s44
    %s59 = sphi 0, %s45
    %s65 = sphi 0, %s67
    %s68 = sphi 0, %s65
    %s69 = sphi 0, %s68
    %s85 = sphi 0, %s69
  $region4: #{residue_projection.3} parent=0 // loop_header_branch
    %11 = sbr.rel (%p9) target = $region8
  $region5: #{residue_projection.3} parent=0 // loop_body
    %s13 = ssub.s32 %s8, 1
    %s14 = ssub.s32 %s8, 2
    %s15 = sadd.s32 %s8, 1
    %s16 = ssub.s32 %s8, %s15
    %p17 = scmp.eq.s32.totalorder %s16, 0
    %s19 = sadd.s32 %s18, 1
    %s20 = scalar_select %p17, %s18, %s19
    %p23 = pneg %p17
    %p24 = scmp.eq.s32.totalorder %s8, 1
    %p25 = por %p23, %p24
    %p26 = scmp.ne.s32.totalorder %s18, %s21
    %p27 = scmp.eq.s32.totalorder %s8, 0
    %p28 = por %p26, %p27
    %p29 = scmp.ne.s32.totalorder %s18, %s21
    %p30 = scmp.eq.s32.totalorder %s13, 1
    %p31 = por %p29, %p30
    %p32 = scmp.ne.s32.totalorder %s21, %s22
    %p33 = scmp.eq.s32.totalorder %s13, 0
    %p34 = por %p32, %p33
    %p35 = scmp.ne.s32.totalorder %s21, %s22
    %p36 = scmp.eq.s32.totalorder %s14, 1
    %p37 = por %p35, %p36
    %p39 = scmp.ne.s32.totalorder %s22, %s38
    %p40 = scmp.eq.s32.totalorder %s14, 0
    %p41 = por %p39, %p40
    %s43 = sadd.s32 %s42, 1
    %p46 = scmp.eq.s32.totalorder %s8, 1
    %p47 = scmp.ne.s32.totalorder %s42, %s44
    %p48 = scmp.eq.s32.totalorder %s8, 0
    %p49 = por %p47, %p48
    %p50 = scmp.ne.s32.totalorder %s42, %s44
    %p51 = scmp.eq.s32.totalorder %s13, 1
    %p52 = por %p50, %p51
    %p53 = scmp.ne.s32.totalorder %s44, %s45
    %p54 = scmp.eq.s32.totalorder %s13, 0
    %p55 = por %p53, %p54
    %p56 = scmp.ne.s32.totalorder %s44, %s45
    %p57 = scmp.eq.s32.totalorder %s14, 1
    %p58 = por %p56, %p57
    %p60 = scmp.ne.s32.totalorder %s45, %s59
    %p61 = scmp.eq.s32.totalorder %s14, 0
    %p62 = por %p60, %p61
    %s63 = ssub.s32 %s8, %s15
    %p64 = scmp.eq.s32.totalorder %s63, 0
    %s66 = sadd.s32 %s65, 1
    %s67 = scalar_select %p64, %s65, %s66
    %p70 = pneg %p64
    %p71 = scmp.eq.s32.totalorder %s8, 1
    %p72 = por %p70, %p71
    %p73 = scmp.ne.s32.totalorder %s65, %s68
    %p74 = scmp.eq.s32.totalorder %s8, 0
    %p75 = por %p73, %p74
    %p76 = scmp.ne.s32.totalorder %s65, %s68
    %p77 = scmp.eq.s32.totalorder %s13, 1
    %p78 = por %p76, %p77
    %p79 = scmp.ne.s32.totalorder %s68, %s69
    %p80 = scmp.eq.s32.totalorder %s13, 0
    %p81 = por %p79, %p80
    %p82 = scmp.ne.s32.totalorder %s68, %s69
    %p83 = scmp.eq.s32.totalorder %s14, 1
    %p84 = por %p82, %p83
    %p86 = scmp.ne.s32.totalorder %s69, %s85
    %p87 = scmp.eq.s32.totalorder %s14, 0
    %p88 = por %p86, %p87
    %p89 = scmp.le.s32.totalorder 1, %s8
    %p90 = scmp.lt.s32.totalorder %s8, 3
    %p91 = pnand %p89, %p90
    %p92 = pneg %p91
    // Predicated region
    $region9: #{residue_projection.3} parent=5 // pred_check
      _
    $region10: #{residue_projection.3} parent=5 // pred_check_branch
      %94 = sbr.rel (%p91) target = $region12
    $region11: #{residue_projection.3} parent=5 // pred_region
      %s95 = ssub.s32 %s8, 1
      // Predicated region
      $region13: #{residue_projection.3} parent=11 // pred_check
        %p96 = pneg %p55
      $region14: #{residue_projection.3} parent=11 // pred_check_branch
        %98 = sbr.rel (%p96) target = $region16
      $region15: #{residue_projection.3} parent=11 // pred_region
        _
      $region16: #{residue_projection.3} parent=11 // pred_fallthru
        _
    $region12: #{residue_projection.3} parent=5 // pred_fallthru
      _
    %p99 = scmp.lt.s32.totalorder %s8, 2
    // Predicated region
    $region17: #{residue_projection.3} parent=5 // pred_check
      %p100 = pneg %p99
    $region18: #{residue_projection.3} parent=5 // pred_check_branch
      %102 = sbr.rel (%p100) target = $region20
    $region19: #{residue_projection.3} parent=5 // pred_region
      // Predicated region
      $region21: #{residue_projection.3} parent=19 // pred_check
        %p103 = pneg %p28
      $region22: #{residue_projection.3} parent=19 // pred_check_branch
        %105 = sbr.rel (%p103) target = $region24
      $region23: #{residue_projection.3} parent=19 // pred_region
        %p106 = scmp.lt.s32.totalorder %s8, 1
        %s107 = scalar_select %p106, %s8, 1
        %s108 = smul.addr %s107, 8
        %s109 = scalar_lea.vmem %s0, %s108
      $region24: #{residue_projection.3} parent=19 // pred_fallthru
        _
    $region20: #{residue_projection.3} parent=5 // pred_fallthru
      _
    %p110 = scmp.le.s32.totalorder 1, %s8
    %p111 = scmp.lt.s32.totalorder %s8, 3
    %p112 = pnand %p110, %p111
    %p113 = pneg %p112
    // Predicated region
    $region25: #{residue_projection.3} parent=5 // pred_check
      _
    $region26: #{residue_projection.3} parent=5 // pred_check_branch
      %115 = sbr.rel (%p112) target = $region28
    $region27: #{residue_projection.3} parent=5 // pred_region
      %s116 = ssub.s32 %s8, 1
      %p117 = scmp.lt.s32.totalorder %s13, 1
      %s118 = scalar_select %p117, %s13, 1
      %s119 = smul.addr %s118, 8
      %s120 = scalar_lea.vmem %s0, %s119
      %p121 = pneg %p34
      %p122 = pneg %p31
      %p123 = pneg %p55
      %p124 = pneg %p52
      %p125 = pneg %p81
      %p126 = pneg %p78
      %p127 = scmp.lt.s32.totalorder %s13, 1
      %s128 = scalar_select %p127, %s13, 1
      %s129 = smul.addr %s128, 8
      %s130 = scalar_lea.vmem %s2, %s129
      %p131 = scmp.lt.s32.totalorder %s13, 1
      %s132 = scalar_select %p131, %s13, 1
      %s133 = smul.addr %s132, 8
      %s134 = scalar_lea.vmem %s0, %s133
      %p135 = scmp.lt.s32.totalorder %s13, 1
      %s136 = scalar_select %p135, %s13, 1
      %s137 = smul.addr %s136, 8
      %s138 = scalar_lea.vmem %s2, %s137
      %v139 = vld [vmem:[%s134] sm:$0xff]
      %v140 = vld [vmem:[%s1] sm:$0xff]
      %v141 = vld [vmem:[%s1 + $0x8] sm:$0xf]
      %vm142 = vcmask 97280
      %v144 = vsel %vm142, %v139, 0
      %vm146 = vcmask 1043456
      %v148 = vsel %vm146, %v141, 0
      %150 = vmatprep.subr.mxu0 0.0
      %151 = vmatpush1.msra.mxu0 0.0
      %152 = vmatprep.subr.mxu0 0.0
      %153 = vmatpush1.msra.mxu0 0.0
      %154 = vmatprep.subr.mxu0 0.0
      %155 = vmatpush1.msra.mxu0 0.0
      %156 = vmatprep.subr.mxu0 0.0
      %157 = vmatpush1.msra.mxu0 0.0
      %158 = vmatprep.subr.mxu0 0.0
      %159 = vmatpush1.msra.mxu0 0.0
      %160 = vmatprep.subr.mxu0 0.0
      %161 = vmatpush1.msra.mxu0 0.0
      %162 = vmatprep.subr.mxu0 0.0
      %163 = vmatpush1.msra.mxu0 0.0
      %164 = vmatprep.subr.mxu0 0.0
      %165 = vmatpush1.msra.mxu0 0.0
      %166 = vmatprep.subr.mxu0 0.0
      %167 = vmatpush1.msra.mxu0 0.0
      %168 = vmatprep.subr.mxu0 0.0
      %169 = vmatpush1.msra.mxu0 0.0
      %170 = vmatprep.subr.mxu0 0.0
      %171 = vmatpush1.msra.mxu0 0.0
      %172 = vmatprep.subr.mxu0 0.0
      %173 = vmatpush1.msra.mxu0 0.0
      %174 = vmatprep.subr.mxu0 0.0
      %175 = vmatpush1.msra.mxu0 0.0
      %176 = vmatprep.subr.mxu0 0.0
      %177 = vmatpush1.msra.mxu0 0.0
      %178 = vmatprep.subr.mxu0 0.0
      %179 = vmatpush1.msra.mxu0 %v148
      %180 = vmatprep.subr.mxu0 0.0
      %181 = vmatpush1.msra.mxu0 %v140
      %182 = vmatprep.subr.mxu0 0.0
      %183 = vmatpush2.msra.mxu0 0.0
      %184 = vmatprep.subr.mxu0 0.0
      %185 = vmatpush2.msra.mxu0 0.0
      %186 = vmatprep.subr.mxu0 0.0
      %187 = vmatpush2.msra.mxu0 0.0
      %188 = vmatprep.subr.mxu0 0.0
      %189 = vmatpush2.msra.mxu0 0.0
      %190 = vmatprep.subr.mxu0 0.0
      %191 = vmatpush2.msra.mxu0 0.0
      %192 = vmatprep.subr.mxu0 0.0
      %193 = vmatpush2.msra.mxu0 0.0
      %194 = vmatprep.subr.mxu0 0.0
      %195 = vmatpush2.msra.mxu0 0.0
      %196 = vmatprep.subr.mxu0 0.0
      %197 = vmatpush2.msra.mxu0 0.0
      %198 = vmatprep.subr.mxu0 0.0
      %199 = vmatpush2.msra.mxu0 0.0
      %200 = vmatprep.subr.mxu0 0.0
      %201 = vmatpush2.msra.mxu0 0.0
      %202 = vmatprep.subr.mxu0 0.0
      %203 = vmatpush2.msra.mxu0 0.0
      %204 = vmatprep.subr.mxu0 0.0
      %205 = vmatpush2.msra.mxu0 0.0
      %206 = vmatprep.subr.mxu0 0.0
      %207 = vmatpush2.msra.mxu0 0.0
      %208 = vmatprep.subr.mxu0 0.0
      %209 = vmatpush2.msra.mxu0 0.0
      %210 = vmatprep.subr.mxu0 0.0
      %211 = vmatpush2.msra.mxu0 0.0
      %212 = vmatprep.subr.mxu0 0.0
      %213 = vmatpush2.msra.mxu0 0.0
      %214 = vmatprep.mubr.f32.mxu0 0.0
      %215 = vmatmul.mubr.f32.gmra.mxu0 %v144
      %v216 = vpop.f32.mrf.mxu0
      %v217 = vadd.f32 0.0, %v216
      %v218 = vpop.f32.mrf.mxu0
      %219 = vdwg.mxu0
      %220 = vst.msk [vmem:[%s138] sm:$0xff] %vm142, %v217
      %p221 = scmp.lt.s32.totalorder %s13, 1
      %s222 = scalar_select %p221, %s13, 1
      %s223 = smul.addr %s222, 8
      %s224 = scalar_lea.vmem %s2, %s223
      // Predicated region
      $region29: #{residue_projection.3} parent=27 // pred_check
        %p225 = pneg %p78
      $region30: #{residue_projection.3} parent=27 // pred_check_branch
        %227 = sbr.rel (%p225) target = $region32
      $region31: #{residue_projection.3} parent=27 // pred_region
        _
      $region32: #{residue_projection.3} parent=27 // pred_fallthru
        _
    $region28: #{residue_projection.3} parent=5 // pred_fallthru
      _
    %p228 = scmp.le.s32.totalorder 2, %s8
    // Predicated region
    $region33: #{residue_projection.3} parent=5 // pred_check
      %p229 = pneg %p228
    $region34: #{residue_projection.3} parent=5 // pred_check_branch
      %231 = sbr.rel (%p229) target = $region36
    $region35: #{residue_projection.3} parent=5 // pred_region
      %s232 = ssub.s32 %s8, 2
      // Predicated region
      $region37: #{residue_projection.3} parent=35 // pred_check
        %p233 = pneg %p84
      $region38: #{residue_projection.3} parent=35 // pred_check_branch
        %235 = sbr.rel (%p233) target = $region40
      $region39: #{residue_projection.3} parent=35 // pred_region
        %p236 = scmp.lt.s32.totalorder %s14, 1
        %s237 = scalar_select %p236, %s14, 1
        %s238 = smul.addr %s237, 8
        %s239 = scalar_lea.vmem %s2, %s238
      $region40: #{residue_projection.3} parent=35 // pred_fallthru
        _
    $region36: #{residue_projection.3} parent=5 // pred_fallthru
      _
  $region6: #{residue_projection.3} parent=0 // loop_footer
    %s12 = sadd.s32 1, %s8
  $region7: #{residue_projection.3} parent=0 // loop_footer_branch
    %7 = sbr.rel target = $region3
  $region8: #{residue_projection.3} parent=0 // loop_exit
    _

</llo_original>
